<compile_context>
chip_gen: v6e
topology: v6e:2x2x1
jax: 0.10.0
libtpu: 0.0.40
codegen_flags: <defaults>
</compile_context>

<pallas_src>
import functools
import math

import jax
import jax.numpy as jnp
import numpy as np
from jax.experimental import pallas as pl
from jax.experimental.pallas import tpu as pltpu


# ---------------------------------------------------------------------------
# Bilinear resize operators (PyTorch F.interpolate, mode='bilinear',
# align_corners=False).  Kernels use the separable 1-D operators; the dense
# Kronecker product is only used by the pure-JAX reference.
# ---------------------------------------------------------------------------
def _resize_matrix_1d(src: int, dst: int) -> np.ndarray:
    R = np.zeros((dst, src), dtype=np.float32)
    scale = src / dst
    for i in range(dst):
        s = (i + 0.5) * scale - 0.5
        s = max(s, 0.0)
        i0 = min(int(np.floor(s)), src - 1)
        i1 = min(i0 + 1, src - 1)
        w = s - i0
        R[i, i0] += 1.0 - w
        R[i, i1] += w
    return R


@functools.lru_cache(maxsize=None)
def _resize_matrix_jnp(src: int, dst: int):
    return jnp.asarray(_resize_matrix_1d(src, dst))


def bilinear_matrix(src_hw, dst_hw) -> np.ndarray:
    Rh = _resize_matrix_1d(src_hw[0], dst_hw[0])
    Rw = _resize_matrix_1d(src_hw[1], dst_hw[1])
    return np.kron(Rh, Rw).astype(np.float32)


def _round_up(x: int, m: int) -> int:
    return ((x + m - 1) // m) * m


def _pick_row_tile(R, dpad, kpad, h_bytes=4, max_bytes=8 << 20, min_tiles=2):
    """Row tile for pass 2: largest candidate that divides R, keeps the
    double-buffered (h + logits) blocks under `max_bytes` (v7x-safe) and
    leaves >= `min_tiles` grid steps so both v7x TensorCores get work."""
    per_row = 2 * (dpad * h_bytes + kpad * 4)  # x2 for double buffering
    cap = max(8, max_bytes // per_row)
    fallback = None
    for cand in (2048, 1024, 512, 256, 128, 64, 32, 16, 8):
        if cand > cap or R % cand != 0:
            continue
        if R // cand >= min_tiles:
            return cand
        if fallback is None:
            fallback = cand
    return fallback if fallback is not None else R


# ---------------------------------------------------------------------------
# Pass 1: per batch b
#   for each stage i: project (folded mlp o lerp o fuse) at native resolution,
#   separable bilinear resize as two big 2-D matmuls, accumulate.
#   h = sum_i resize(x_i @ Wc_i) + bias   (rows are NHWC / H-major order)
#   plus per-batch BatchNorm partials: mean and M2 (sum of squared deviations).
# ---------------------------------------------------------------------------
def _make_pass1_kernel(metas, H0, W0, Dpad):
    n = len(metas)
    n_resize = sum(1 for m in metas if m[3])
    P0 = H0 * W0

    def kernel(*refs):
        xr_refs = refs[:n]
        wcs_refs = refs[n:2 * n]
        rmat_refs = refs[2 * n:2 * n + 2 * n_resize]
        bias_ref = refs[2 * n + 2 * n_resize]
        h_ref, mean_ref, m2_ref = refs[2 * n + 2 * n_resize + 1:]

        acc = None
        ri = 0
        for i, (Hi, Wi, Ci, needs) in enumerate(metas):
            x = xr_refs[i][...]                 # resize stages: W-major rows
            w = wcs_refs[i][...]                # (Ci, Dpad) folded weight
            p = jnp.dot(x, w, preferred_element_type=jnp.float32)  # (Pi, Dpad)
            if needs:
                rw = rmat_refs[2 * ri][...]     # (W0, Wi)
                rh = rmat_refs[2 * ri + 1][...]  # (H0, Hi)
                ri += 1
                pd = p.astype(rw.dtype)
                # W-resize: one big 2-D MXU matmul, lane dim Hi*Dpad
                q = jnp.dot(rw, pd.reshape(Wi, Hi * Dpad),
                            preferred_element_type=jnp.float32)     # (W0, Hi*Dpad)
                # single VMEM-local axis swap at the intermediate resolution
                qt = jnp.transpose(q.astype(rw.dtype).reshape(W0, Hi, Dpad),
                                   (1, 0, 2)).reshape(Hi, W0 * Dpad)
                # H-resize: one big 2-D MXU matmul, lane dim W0*Dpad
                r = jnp.dot(rh, qt,
                            preferred_element_type=jnp.float32)     # (H0, W0*Dpad)
                contrib = r.reshape(P0, Dpad)
            else:
                contrib = p                      # already at (H0, W0)
            acc = contrib if acc is None else acc + contrib

        h = acc + bias_ref[...].astype(jnp.float32)
        h_ref[...] = h.astype(h_ref.dtype)
        # numerically stable BN partials (per-batch mean + M2), merged
        # across batches in the wrapper with Chan's formula.
        mu = jnp.sum(h, axis=0, keepdims=True) * (1.0 / P0)
        d = h - mu
        mean_ref[...] = mu
        m2_ref[...] = jnp.sum(d * d, axis=0, keepdims=True)

    return kernel


def fuse_resize_stats(xrs, wcs, rmats, bias, metas, H0, W0, Dpad, h_dtype):
    n = len(xrs)
    B = xrs[0].shape[0]
    P0 = H0 * W0
    R = B * P0

    in_specs = []
    for xr in xrs:
        pi, ci = xr.shape[1], xr.shape[2]
        in_specs.append(pl.BlockSpec((None, pi, ci), lambda b: (b, 0, 0)))
    for w in wcs:
        in_specs.append(pl.BlockSpec(w.shape, lambda b: (0, 0)))
    for m in rmats:
        in_specs.append(pl.BlockSpec(m.shape, lambda b: (0, 0)))
    in_specs.append(pl.BlockSpec((1, Dpad), lambda b: (0, 0)))

    out_shapes = (
        jax.ShapeDtypeStruct((R, Dpad), h_dtype),
        jax.ShapeDtypeStruct((B, 1, Dpad), jnp.float32),
        jax.ShapeDtypeStruct((B, 1, Dpad), jnp.float32),
    )
    out_specs = (
        pl.BlockSpec((P0, Dpad), lambda b: (b, 0)),
        pl.BlockSpec((None, 1, Dpad), lambda b: (b, 0, 0)),
        pl.BlockSpec((None, 1, Dpad), lambda b: (b, 0, 0)),
    )

    flops = 0
    bytes_acc = int(bias.size * bias.dtype.itemsize)
    for (Hi, Wi, Ci, needs), xr, w in zip(metas, xrs, wcs):
        flops += 2 * Hi * Wi * Ci * Dpad
        if needs:
            flops += 2 * W0 * Wi * Hi * Dpad + 2 * H0 * Hi * W0 * Dpad
        bytes_acc += int(xr.size * xr.dtype.itemsize + w.size * w.dtype.itemsize)
    flops *= B
    bytes_acc += R * Dpad * int(jnp.dtype(h_dtype).itemsize) + 2 * B * Dpad * 4
    for m in rmats:
        bytes_acc += int(m.size * m.dtype.itemsize)

    return pl.pallas_call(
        _make_pass1_kernel(tuple(metas), H0, W0, Dpad),
        out_shape=out_shapes,
        grid=(B,),
        in_specs=in_specs,
        out_specs=out_specs,
        compiler_params=pltpu.CompilerParams(dimension_semantics=("parallel",)),
        cost_estimate=pl.CostEstimate(flops=int(flops), transcendentals=0,
                                      bytes_accessed=int(bytes_acc)),
    )(*xrs, *wcs, *rmats, bias)


# ---------------------------------------------------------------------------
# Pass 2: BatchNorm affine + ReLU + 1x1 classifier (lane-dense, 128-column
# padded output; sliced back to num_classes in the wrapper).
# ---------------------------------------------------------------------------
def _bn_relu_cls_kernel(h_ref, a_ref, c_ref, w_ref, b_ref, o_ref):
    h = h_ref[...].astype(jnp.float32)
    y = jnp.maximum(h * a_ref[...] + c_ref[...], 0.0)
    o_ref[...] = (jnp.dot(y.astype(w_ref.dtype), w_ref[...],
                          preferred_element_type=jnp.float32)
                  + b_ref[...]).astype(o_ref.dtype)


def bn_relu_classifier(h, a, c, w_pad, b_pad):
    R, Dpad = h.shape
    Kpad = w_pad.shape[1]
    tile = _pick_row_tile(R, Dpad, Kpad, h_bytes=int(h.dtype.itemsize))
    nt = R // tile
    flops = 2 * R * Dpad * Kpad + 4 * R * Dpad
    bytes_acc = (R * Dpad * int(h.dtype.itemsize) + R * Kpad * 4
                 + Dpad * Kpad * int(w_pad.dtype.itemsize) + 3 * Dpad * 4)
    return pl.pallas_call(
        _bn_relu_cls_kernel,
        out_shape=jax.ShapeDtypeStruct((R, Kpad), jnp.float32),
        grid=(nt,),
        in_specs=[
            pl.BlockSpec((tile, Dpad), lambda r: (r, 0)),
            pl.BlockSpec((1, Dpad), lambda r: (0, 0)),
            pl.BlockSpec((1, Dpad), lambda r: (0, 0)),
            pl.BlockSpec((Dpad, Kpad), lambda r: (0, 0)),
            pl.BlockSpec((1, Kpad), lambda r: (0, 0)),
        ],
        out_specs=pl.BlockSpec((tile, Kpad), lambda r: (r, 0)),
        compiler_params=pltpu.CompilerParams(dimension_semantics=("parallel",)),
        cost_estimate=pl.CostEstimate(flops=int(flops), transcendentals=0,
                                      bytes_accessed=int(bytes_acc)),
    )(h, a, c, w_pad, b_pad)


# ---------------------------------------------------------------------------
# Module wrapper (parameters + curriculum state), mirrors the PyTorch module
# ---------------------------------------------------------------------------
class CurriculumSegFormerHeadPallas:
    def __init__(self, hidden_sizes, decoder_hidden_size, classifier_dropout_prob,
                 num_classes, reshape_last_stage, insertion_time, key,
                 compute_dtype=jnp.float32, h_dtype=jnp.float32):
        self.hidden_sizes = list(hidden_sizes)
        self.D = decoder_hidden_size
        self.Dpad = max(128, _round_up(decoder_hidden_size, 128))
        self.K = num_classes
        self.Kpad = max(128, _round_up(num_classes, 128))
        self.reshape_last_stage = reshape_last_stage
        self.insertion_time = insertion_time
        self._current_time = insertion_time
        n = len(hidden_sizes)
        self.n_blocks = n
        self.active_blocks = np.zeros(n, dtype=bool)
        self.active_blocks[0] = True
        self.dropout_prob = classifier_dropout_prob  # identity (eval / p = 0)
        # set compute_dtype / h_dtype to jnp.bfloat16 on v6e/v7x for MXU + HBM
        # savings; kept f32 by default so the f32 reference check stays tight.
        self.compute_dtype = compute_dtype
        self.h_dtype = h_dtype

        keys = jax.random.split(key, 3 * n + 4)
        ki = iter(keys)
        # SegformerMLP: Linear(Ci -> D) stored as W^T (Ci, D), bias (1, D)
        self.mlp_w = [jax.random.normal(next(ki), (c, self.D), jnp.float32) * 0.05
                      for c in hidden_sizes]
        self.mlp_b = [jax.random.normal(next(ki), (1, self.D), jnp.float32) * 0.05
                      for _ in hidden_sizes]
        # linear_fuse[j]: Conv2d 1x1, in = D*(j+1) -> D, no bias; stored as (Cin, D)
        self.fuse_w = [jax.random.normal(next(ki), (self.D * (j + 1), self.D),
                                         jnp.float32) * 0.05
                       for j in range(n)]
        # BatchNorm2d(D): affine params (batch statistics computed per call)
        self.bn_gamma = 1.0 + 0.05 * jax.random.normal(next(ki), (1, self.D), jnp.float32)
        self.bn_beta = 0.05 * jax.random.normal(next(ki), (1, self.D), jnp.float32)
        self.bn_eps = 1e-5
        # classifier: Conv2d 1x1 D -> K with bias; stored as (D, K), (1, K)
        self.cls_w = jax.random.normal(next(ki), (self.D, self.K), jnp.float32) * 0.05
        self.cls_b = jax.random.normal(next(ki), (1, self.K), jnp.float32) * 0.05

        # lane-dense padded params (Dpad / Kpad) for the kernels
        D, Dp, K, Kp = self.D, self.Dpad, self.K, self.Kpad
        self.bn_gamma_pad = jnp.ones((1, Dp), jnp.float32).at[:, :D].set(self.bn_gamma)
        self.bn_beta_pad = jnp.zeros((1, Dp), jnp.float32).at[:, :D].set(self.bn_beta)
        self.cls_w_pad = jnp.zeros((Dp, Kp), jnp.float32).at[:D, :K].set(self.cls_w)
        self.cls_b_pad = jnp.zeros((1, Kp), jnp.float32).at[:, :K].set(self.cls_b)

    def activate_next_block(self):
        if self.active_blocks.all():
            return
        self.active_blocks[np.flatnonzero(~self.active_blocks)[0]] = True
        self._current_time = 0

    # -- fold mlp projection + lerp(stable, full) + linear_fuse into per-stage
    #    (Ci, Dpad) weights plus a (1, Dpad) bias constant ------------------
    def _combined_stage_weights(self, n, t):
        D, Dpad = self.D, self.Dpad
        wf = self.fuse_w[n - 1]                       # (n*D, D)
        if t != 1:
            num_active = int(self.active_blocks.sum())
            if num_active < 2 or num_active != n:
                raise ValueError(
                    "curriculum path (t != 1) requires len(hidden_states) == "
                    "num_active_blocks >= 2; got n=%d num_active=%d" % (n, num_active))
            ws = self.fuse_w[num_active - 2]
            comb = []
            for i in range(n):
                blk = t * wf[(n - 1 - i) * D:(n - i) * D, :]
                if i < n - 1:
                    blk = blk + (1.0 - t) * ws[(n - 2 - i) * D:(n - 1 - i) * D, :]
                comb.append(blk)
        else:
            comb = [wf[(n - 1 - i) * D:(n - i) * D, :] for i in range(n)]
        wcs = [self.mlp_w[i] @ comb[i] for i in range(n)]            # (Ci, D)
        bias = sum(self.mlp_b[i] @ comb[i] for i in range(n))        # (1, D)
        if Dpad != D:
            wcs = [jnp.zeros((w.shape[0], Dpad), jnp.float32).at[:, :D].set(w)
                   for w in wcs]
            bias = jnp.zeros((1, Dpad), jnp.float32).at[:, :D].set(bias)
        return wcs, bias

    def forward(self, hidden_states):
        self._current_time = min(self.insertion_time, self._current_time + 1)
        t = self._current_time / self.insertion_time

        B = hidden_states[-1].shape[0]
        states = []
        for x in hidden_states:
            if self.reshape_last_stage is False and x.ndim == 3:
                hh = ww = int(math.sqrt(x.shape[-1]))
                x = jnp.transpose(x.reshape(B, hh, ww, -1), (0, 3, 1, 2))
            states.append(x.astype(jnp.float32))
        n = len(states)
        H0, W0 = states[0].shape[2], states[0].shape[3]
        P0 = H0 * W0
        R = B * P0

        # folded + Dpad-padded per-stage weights (mlp o lerp o linear_fuse)
        wcs, bias_const = self._combined_stage_weights(n, t)
        wcs = [w.astype(self.compute_dtype) for w in wcs]

        # channels-last rows at the NATIVE (small) source resolution.
        # Resizing stages are fed in W-major row order so the in-kernel
        # separable resize needs only one VMEM-local axis swap.
        xrs, rmats, metas = [], [], []
        for x in states:
            _, Ci, Hi, Wi = x.shape
            needs = (Hi, Wi) != (H0, W0)
            if needs:
                xr = jnp.transpose(x, (0, 3, 2, 1)).reshape(B, Wi * Hi, Ci)
                rmats.append(_resize_matrix_jnp(Wi, W0).astype(self.compute_dtype))
                rmats.append(_resize_matrix_jnp(Hi, H0).astype(self.compute_dtype))
            else:
                xr = jnp.transpose(x, (0, 2, 3, 1)).reshape(B, Hi * Wi, Ci)
            xrs.append(xr.astype(self.compute_dtype))
            metas.append((Hi, Wi, Ci, needs))

        # pass 1: project + resize + accumulate + bias, BN partials
        h, mean_b, m2_b = fuse_resize_stats(
            xrs, wcs, rmats, bias_const, metas, H0, W0, self.Dpad, self.h_dtype)

        # training-mode BatchNorm statistics: Chan merge of per-batch partials
        mean = jnp.mean(mean_b, axis=0)                               # (1, Dpad)
        m2 = jnp.sum(m2_b, axis=0) + P0 * jnp.sum((mean_b - mean[None, :, :]) ** 2,
                                                  axis=0)
        var = m2 / R
        a = self.bn_gamma_pad * jax.lax.rsqrt(var + self.bn_eps)
        c = self.bn_beta_pad - mean * a

        # pass 2: BN affine + ReLU + classifier (dropout = identity)
        logits_pad = bn_relu_classifier(
            h, a, c, self.cls_w_pad.astype(self.compute_dtype), self.cls_b_pad)
        logits = logits_pad[:, :self.K]

        # back to NCHW like the PyTorch module
        return jnp.transpose(logits.reshape(B, H0, W0, self.K), (0, 3, 1, 2))


# ---------------------------------------------------------------------------
# Pure-JAX reference (PyTorch op ordering: proj -> dense-Kron resize -> concat
# -> fuse -> lerp -> BN -> ReLU -> classifier) for the correctness check.
# ---------------------------------------------------------------------------
def reference_forward(head, hidden_states, t):
    B = hidden_states[-1].shape[0]
    H0, W0 = hidden_states[0].shape[2], hidden_states[0].shape[3]
    ups = []
    for idx, x in enumerate(hidden_states):
        _, Ci, Hi, Wi = x.shape
        x_rows = jnp.transpose(x, (0, 2, 3, 1)).reshape(B, Hi * Wi, Ci)
        proj = x_rows @ head.mlp_w[idx] + head.mlp_b[idx]
        R = jnp.asarray(bilinear_matrix((Hi, Wi), (H0, W0)))
        ups.append(jnp.einsum('ps,bsd->bpd', R, proj))
    n = len(ups)
    F_all = jnp.concatenate(ups[::-1], axis=-1).reshape(B * H0 * W0, n * head.D)
    h = F_all @ head.fuse_w[n - 1]
    if t != 1:
        num_active = int(head.active_blocks.sum())
        F_s = jnp.concatenate(ups[:-1][::-1], axis=-1).reshape(B * H0 * W0, (n - 1) * head.D)
        hs = F_s @ head.fuse_w[num_active - 2]
        h = hs + t * (h - hs)
    mean = jnp.mean(h, axis=0, keepdims=True)
    var = jnp.mean((h - mean) ** 2, axis=0, keepdims=True)
    hn = (h - mean) * jax.lax.rsqrt(var + head.bn_eps)
    hn = hn * head.bn_gamma + head.bn_beta
    hn = jnp.maximum(hn, 0.0)
    logits = hn @ head.cls_w + head.cls_b
    return jnp.transpose(logits.reshape(B, H0, W0, head.K), (0, 3, 1, 2))


if __name__ == "__main__":
    root = jax.random.PRNGKey(0)
    wkey, dkey = jax.random.split(root, 2)

    hidden_sizes = [4, 8, 16, 32]
    decoder_hidden_size = 32
    num_classes = 5
    B, H0 = 4, 16
    insertion_time = 4

    head = CurriculumSegFormerHeadPallas(
        hidden_sizes, decoder_hidden_size, classifier_dropout_prob=0.0,
        num_classes=num_classes, reshape_last_stage=True,
        insertion_time=insertion_time, key=wkey)

    # curriculum state: activate blocks 1 and 2 -> 3 active blocks, t != 1
    head.activate_next_block()
    head.activate_next_block()

    # one NCHW feature map per active block (spatial halves each stage)
    spatials = [16, 8, 4]
    kx = jax.random.split(dkey, len(spatials))
    hidden_states = [
        jax.random.normal(kx[i], (B, hidden_sizes[i], s, s), jnp.float32)
        for i, s in enumerate(spatials)
    ]

    out = jax.block_until_ready(head.forward(hidden_states))

    t = head._current_time / head.insertion_time
    ref = jax.block_until_ready(reference_forward(head, hidden_states, t))

    assert out.shape == (B, num_classes, H0, H0), out.shape
    np.testing.assert_allclose(np.asarray(out), np.asarray(ref), rtol=2e-3, atol=2e-3)
    print("KERNEL_OK")
</pallas_src>

<mosaic_0001>
module attributes {stable_mosaic.version = 11 : i64} {
  func.func @kernel(%arg0: i32, %arg1: memref<1x256x4xf32, #tpu.memory_space<vmem>>, %arg2: memref<1x64x8xf32, #tpu.memory_space<vmem>>, %arg3: memref<1x16x16xf32, #tpu.memory_space<vmem>>, %arg4: memref<4x128xf32, #tpu.memory_space<vmem>>, %arg5: memref<8x128xf32, #tpu.memory_space<vmem>>, %arg6: memref<16x128xf32, #tpu.memory_space<vmem>>, %arg7: memref<16x8xf32, #tpu.memory_space<vmem>>, %arg8: memref<16x8xf32, #tpu.memory_space<vmem>>, %arg9: memref<16x4xf32, #tpu.memory_space<vmem>>, %arg10: memref<16x4xf32, #tpu.memory_space<vmem>>, %arg11: memref<1x128xf32, #tpu.memory_space<vmem>>, %arg12: memref<256x128xf32, #tpu.memory_space<vmem>>, %arg13: memref<1x1x128xf32, #tpu.memory_space<vmem>>, %arg14: memref<1x1x128xf32, #tpu.memory_space<vmem>>) attributes {dimension_semantics = [#tpu.dimension_semantics<parallel>], iteration_bounds = array<i64: 4>, scalar_prefetch = 0 : i64, scratch_operands = 0 : i64, tpu.core_type = #tpu.core_type<tc>, window_params = [{transform_indices = @transform_0, window_bounds = array<i64: 1, 256, 4>}, {transform_indices = @transform_1, window_bounds = array<i64: 1, 64, 8>}, {transform_indices = @transform_2, window_bounds = array<i64: 1, 16, 16>}, {pipeline_mode = #tpu.pipeline_mode<synchronous>, transform_indices = @transform_3, window_bounds = array<i64: 4, 128>}, {pipeline_mode = #tpu.pipeline_mode<synchronous>, transform_indices = @transform_4, window_bounds = array<i64: 8, 128>}, {pipeline_mode = #tpu.pipeline_mode<synchronous>, transform_indices = @transform_5, window_bounds = array<i64: 16, 128>}, {pipeline_mode = #tpu.pipeline_mode<synchronous>, transform_indices = @transform_6, window_bounds = array<i64: 16, 8>}, {pipeline_mode = #tpu.pipeline_mode<synchronous>, transform_indices = @transform_7, window_bounds = array<i64: 16, 8>}, {pipeline_mode = #tpu.pipeline_mode<synchronous>, transform_indices = @transform_8, window_bounds = array<i64: 16, 4>}, {pipeline_mode = #tpu.pipeline_mode<synchronous>, transform_indices = @transform_9, window_bounds = array<i64: 16, 4>}, {pipeline_mode = #tpu.pipeline_mode<synchronous>, transform_indices = @transform_10, window_bounds = array<i64: 1, 128>}, {transform_indices = @transform_11, window_bounds = array<i64: 256, 128>}, {transform_indices = @transform_12, window_bounds = array<i64: 1, 1, 128>}, {transform_indices = @transform_13, window_bounds = array<i64: 1, 1, 128>}]} {
    %c0 = arith.constant 0 : index
    %c0_0 = arith.constant 0 : index
    %c0_1 = arith.constant 0 : index
    %0 = vector.load %arg1[%c0, %c0_0, %c0_1] : memref<1x256x4xf32, #tpu.memory_space<vmem>>, vector<1x256x4xf32>
    %1 = vector.shape_cast %0 : vector<1x256x4xf32> to vector<256x4xf32>
    %c0_2 = arith.constant 0 : index
    %c0_3 = arith.constant 0 : index
    %2 = vector.load %arg4[%c0_2, %c0_3] : memref<4x128xf32, #tpu.memory_space<vmem>>, vector<4x128xf32>
    %cst = arith.constant dense<0.000000e+00> : vector<256x128xf32>
    %3 = tpu.matmul %1, %2, %cst {dimension_numbers = #tpu.dot_dimension_numbers<[1], [0], [0], [1], [0, 0, 1, 1], [], []>} : vector<256x4xf32>, vector<4x128xf32>, vector<256x128xf32> -> vector<256x128xf32>
    %c0_4 = arith.constant 0 : index
    %c0_5 = arith.constant 0 : index
    %c0_6 = arith.constant 0 : index
    %4 = vector.load %arg2[%c0_4, %c0_5, %c0_6] : memref<1x64x8xf32, #tpu.memory_space<vmem>>, vector<1x64x8xf32>
    %5 = vector.shape_cast %4 : vector<1x64x8xf32> to vector<64x8xf32>
    %c0_7 = arith.constant 0 : index
    %c0_8 = arith.constant 0 : index
    %6 = vector.load %arg5[%c0_7, %c0_8] : memref<8x128xf32, #tpu.memory_space<vmem>>, vector<8x128xf32>
    %cst_9 = arith.constant dense<0.000000e+00> : vector<64x128xf32>
    %7 = tpu.matmul %5, %6, %cst_9 {dimension_numbers = #tpu.dot_dimension_numbers<[1], [0], [0], [1], [0, 0, 1, 1], [], []>} : vector<64x8xf32>, vector<8x128xf32>, vector<64x128xf32> -> vector<64x128xf32>
    %c0_10 = arith.constant 0 : index
    %c0_11 = arith.constant 0 : index
    %8 = vector.load %arg7[%c0_10, %c0_11] : memref<16x8xf32, #tpu.memory_space<vmem>>, vector<16x8xf32>
    %c0_12 = arith.constant 0 : index
    %c0_13 = arith.constant 0 : index
    %9 = vector.load %arg8[%c0_12, %c0_13] : memref<16x8xf32, #tpu.memory_space<vmem>>, vector<16x8xf32>
    %10 = vector.shape_cast %7 : vector<64x128xf32> to vector<8x1024xf32>
    %cst_14 = arith.constant dense<0.000000e+00> : vector<16x1024xf32>
    %11 = tpu.matmul %8, %10, %cst_14 {dimension_numbers = #tpu.dot_dimension_numbers<[1], [0], [0], [1], [0, 0, 1, 1], [], []>} : vector<16x8xf32>, vector<8x1024xf32>, vector<16x1024xf32> -> vector<16x1024xf32>
    %12 = vector.shape_cast %11 : vector<16x1024xf32> to vector<16x8x128xf32>
    %13 = tpu.transpose %12, [1, 0, 2] : vector<16x8x128xf32> -> vector<8x16x128xf32>
    %14 = vector.shape_cast %13 : vector<8x16x128xf32> to vector<8x2048xf32>
    %cst_15 = arith.constant dense<0.000000e+00> : vector<16x2048xf32>
    %15 = tpu.matmul %9, %14, %cst_15 {dimension_numbers = #tpu.dot_dimension_numbers<[1], [0], [0], [1], [0, 0, 1, 1], [], []>} : vector<16x8xf32>, vector<8x2048xf32>, vector<16x2048xf32> -> vector<16x2048xf32>
    %16 = vector.shape_cast %15 : vector<16x2048xf32> to vector<256x128xf32>
    %17 = arith.addf %3, %16 : vector<256x128xf32>
    %c0_16 = arith.constant 0 : index
    %c0_17 = arith.constant 0 : index
    %c0_18 = arith.constant 0 : index
    %18 = vector.load %arg3[%c0_16, %c0_17, %c0_18] : memref<1x16x16xf32, #tpu.memory_space<vmem>>, vector<1x16x16xf32>
    %19 = vector.shape_cast %18 : vector<1x16x16xf32> to vector<16x16xf32>
    %c0_19 = arith.constant 0 : index
    %c0_20 = arith.constant 0 : index
    %20 = vector.load %arg6[%c0_19, %c0_20] : memref<16x128xf32, #tpu.memory_space<vmem>>, vector<16x128xf32>
    %cst_21 = arith.constant dense<0.000000e+00> : vector<16x128xf32>
    %21 = tpu.matmul %19, %20, %cst_21 {dimension_numbers = #tpu.dot_dimension_numbers<[1], [0], [0], [1], [0, 0, 1, 1], [], []>} : vector<16x16xf32>, vector<16x128xf32>, vector<16x128xf32> -> vector<16x128xf32>
    %c0_22 = arith.constant 0 : index
    %c0_23 = arith.constant 0 : index
    %22 = vector.load %arg9[%c0_22, %c0_23] : memref<16x4xf32, #tpu.memory_space<vmem>>, vector<16x4xf32>
    %c0_24 = arith.constant 0 : index
    %c0_25 = arith.constant 0 : index
    %23 = vector.load %arg10[%c0_24, %c0_25] : memref<16x4xf32, #tpu.memory_space<vmem>>, vector<16x4xf32>
    %24 = vector.shape_cast %21 : vector<16x128xf32> to vector<4x512xf32>
    %cst_26 = arith.constant dense<0.000000e+00> : vector<16x512xf32>
    %25 = tpu.matmul %22, %24, %cst_26 {dimension_numbers = #tpu.dot_dimension_numbers<[1], [0], [0], [1], [0, 0, 1, 1], [], []>} : vector<16x4xf32>, vector<4x512xf32>, vector<16x512xf32> -> vector<16x512xf32>
    %26 = vector.shape_cast %25 : vector<16x512xf32> to vector<16x4x128xf32>
    %27 = tpu.transpose %26, [1, 0, 2] : vector<16x4x128xf32> -> vector<4x16x128xf32>
    %28 = vector.shape_cast %27 : vector<4x16x128xf32> to vector<4x2048xf32>
    %cst_27 = arith.constant dense<0.000000e+00> : vector<16x2048xf32>
    %29 = tpu.matmul %23, %28, %cst_27 {dimension_numbers = #tpu.dot_dimension_numbers<[1], [0], [0], [1], [0, 0, 1, 1], [], []>} : vector<16x4xf32>, vector<4x2048xf32>, vector<16x2048xf32> -> vector<16x2048xf32>
    %30 = vector.shape_cast %29 : vector<16x2048xf32> to vector<256x128xf32>
    %31 = arith.addf %17, %30 : vector<256x128xf32>
    %c0_28 = arith.constant 0 : index
    %c0_29 = arith.constant 0 : index
    %32 = vector.load %arg11[%c0_28, %c0_29] : memref<1x128xf32, #tpu.memory_space<vmem>>, vector<1x128xf32>
    %33 = vector.broadcast %32 : vector<1x128xf32> to vector<256x128xf32>
    %34 = arith.addf %31, %33 : vector<256x128xf32>
    %c0_30 = arith.constant 0 : index
    %c0_31 = arith.constant 0 : index
    %35 = vector.load %arg12[%c0_30, %c0_31] : memref<256x128xf32, #tpu.memory_space<vmem>>, vector<256x128xf32>
    tpu.vector_store %arg12[%c0_30, %c0_31], %34 {strides = array<i32>} : memref<256x128xf32, #tpu.memory_space<vmem>>, vector<256x128xf32>,
    %cst_32 = arith.constant dense<0.000000e+00> : vector<128xf32>
    %36 = vector.multi_reduction <add>, %34, %cst_32 [0] : vector<256x128xf32> to vector<128xf32>
    %37 = vector.shape_cast %36 : vector<128xf32> to vector<1x128xf32>
    %cst_33 = arith.constant 3.906250e-03 : f32
    %38 = vector.broadcast %cst_33 : f32 to vector<1x128xf32>
    %39 = arith.mulf %37, %38 : vector<1x128xf32>
    %40 = vector.broadcast %39 : vector<1x128xf32> to vector<256x128xf32>
    %41 = arith.subf %34, %40 : vector<256x128xf32>
    %c0_34 = arith.constant 0 : index
    %c0_35 = arith.constant 0 : index
    %c0_36 = arith.constant 0 : index
    %42 = vector.load %arg13[%c0_34, %c0_35, %c0_36] : memref<1x1x128xf32, #tpu.memory_space<vmem>>, vector<1x1x128xf32>
    %43 = vector.shape_cast %42 : vector<1x1x128xf32> to vector<1x128xf32>
    %44 = vector.shape_cast %39 : vector<1x128xf32> to vector<1x1x128xf32>
    tpu.vector_store %arg13[%c0_34, %c0_35, %c0_36], %44 {strides = array<i32>} : memref<1x1x128xf32, #tpu.memory_space<vmem>>, vector<1x1x128xf32>,
    %45 = arith.mulf %41, %41 : vector<256x128xf32>
    %cst_37 = arith.constant dense<0.000000e+00> : vector<128xf32>
    %46 = vector.multi_reduction <add>, %45, %cst_37 [0] : vector<256x128xf32> to vector<128xf32>
    %47 = vector.shape_cast %46 : vector<128xf32> to vector<1x128xf32>
    %c0_38 = arith.constant 0 : index
    %c0_39 = arith.constant 0 : index
    %c0_40 = arith.constant 0 : index
    %48 = vector.load %arg14[%c0_38, %c0_39, %c0_40] : memref<1x1x128xf32, #tpu.memory_space<vmem>>, vector<1x1x128xf32>
    %49 = vector.shape_cast %48 : vector<1x1x128xf32> to vector<1x128xf32>
    %50 = vector.shape_cast %47 : vector<1x128xf32> to vector<1x1x128xf32>
    tpu.vector_store %arg14[%c0_38, %c0_39, %c0_40], %50 {strides = array<i32>} : memref<1x1x128xf32, #tpu.memory_space<vmem>>, vector<1x1x128xf32>,
    return
  }
  func.func @transform_0(%arg0: i32) -> (i32, i32, i32) {
    %c0_i32 = arith.constant 0 : i32
    %c0_i32_0 = arith.constant 0 : i32
    %c0_i32_1 = arith.constant 0 : i32
    return %arg0, %c0_i32, %c0_i32_0 : i32, i32, i32
  }
  func.func @transform_1(%arg0: i32) -> (i32, i32, i32) {
    %c0_i32 = arith.constant 0 : i32
    %c0_i32_0 = arith.constant 0 : i32
    %c0_i32_1 = arith.constant 0 : i32
    return %arg0, %c0_i32, %c0_i32_0 : i32, i32, i32
  }
  func.func @transform_2(%arg0: i32) -> (i32, i32, i32) {
    %c0_i32 = arith.constant 0 : i32
    %c0_i32_0 = arith.constant 0 : i32
    %c0_i32_1 = arith.constant 0 : i32
    return %arg0, %c0_i32, %c0_i32_0 : i32, i32, i32
  }
  func.func @transform_3(%arg0: i32) -> (i32, i32) {
    %c0_i32 = arith.constant 0 : i32
    %c0_i32_0 = arith.constant 0 : i32
    %c0_i32_1 = arith.constant 0 : i32
    return %c0_i32, %c0_i32_0 : i32, i32
  }
  func.func @transform_4(%arg0: i32) -> (i32, i32) {
    %c0_i32 = arith.constant 0 : i32
    %c0_i32_0 = arith.constant 0 : i32
    %c0_i32_1 = arith.constant 0 : i32
    return %c0_i32, %c0_i32_0 : i32, i32
  }
  func.func @transform_5(%arg0: i32) -> (i32, i32) {
    %c0_i32 = arith.constant 0 : i32
    %c0_i32_0 = arith.constant 0 : i32
    %c0_i32_1 = arith.constant 0 : i32
    return %c0_i32, %c0_i32_0 : i32, i32
  }
  func.func @transform_6(%arg0: i32) -> (i32, i32) {
    %c0_i32 = arith.constant 0 : i32
    %c0_i32_0 = arith.constant 0 : i32
    %c0_i32_1 = arith.constant 0 : i32
    return %c0_i32, %c0_i32_0 : i32, i32
  }
  func.func @transform_7(%arg0: i32) -> (i32, i32) {
    %c0_i32 = arith.constant 0 : i32
    %c0_i32_0 = arith.constant 0 : i32
    %c0_i32_1 = arith.constant 0 : i32
    return %c0_i32, %c0_i32_0 : i32, i32
  }
  func.func @transform_8(%arg0: i32) -> (i32, i32) {
    %c0_i32 = arith.constant 0 : i32
    %c0_i32_0 = arith.constant 0 : i32
    %c0_i32_1 = arith.constant 0 : i32
    return %c0_i32, %c0_i32_0 : i32, i32
  }
  func.func @transform_9(%arg0: i32) -> (i32, i32) {
    %c0_i32 = arith.constant 0 : i32
    %c0_i32_0 = arith.constant 0 : i32
    %c0_i32_1 = arith.constant 0 : i32
    return %c0_i32, %c0_i32_0 : i32, i32
  }
  func.func @transform_10(%arg0: i32) -> (i32, i32) {
    %c0_i32 = arith.constant 0 : i32
    %c0_i32_0 = arith.constant 0 : i32
    %c0_i32_1 = arith.constant 0 : i32
    return %c0_i32, %c0_i32_0 : i32, i32
  }
  func.func @transform_11(%arg0: i32) -> (i32, i32) {
    %c0_i32 = arith.constant 0 : i32
    %c0_i32_0 = arith.constant 0 : i32
    return %arg0, %c0_i32 : i32, i32
  }
  func.func @transform_12(%arg0: i32) -> (i32, i32, i32) {
    %c0_i32 = arith.constant 0 : i32
    %c0_i32_0 = arith.constant 0 : i32
    %c0_i32_1 = arith.constant 0 : i32
    return %arg0, %c0_i32, %c0_i32_0 : i32, i32, i32
  }
  func.func @transform_13(%arg0: i32) -> (i32, i32, i32) {
    %c0_i32 = arith.constant 0 : i32
    %c0_i32_0 = arith.constant 0 : i32
    %c0_i32_1 = arith.constant 0 : i32
    return %arg0, %c0_i32, %c0_i32_0 : i32, i32, i32
  }
}

</mosaic_0001>

<llo_original>
// kernel: tpu_custom_call.1
$region0: #{tpu_custom_call.1}
  #allocation0 [shape = 'u32[]', space=smem, size = 0x4, offset = 0x4, fixed_abs, tag = 'smem constant byte address 0x4 - core index']
  #allocation1 [shape = 'u32[144,128]{1,0:T(1,128)}', space=vmem, size = 0x12000, scoped, tag = 'internal scratch']
  %s0 = inlined_call_operand.vmem [shape: f32[4,256,4], index: 0, kind: input, shape index: {}]
  %s1 = inlined_call_operand.vmem [shape: f32[4,64,8], index: 1, kind: input, shape index: {}]
  %s2 = inlined_call_operand.vmem [shape: f32[4,16,16], index: 2, kind: input, shape index: {}]
  %s3 = inlined_call_operand.vmem [shape: f32[4,128], index: 3, kind: input, shape index: {}]
  %s4 = inlined_call_operand.vmem [shape: f32[8,128], index: 4, kind: input, shape index: {}]
  %s5 = inlined_call_operand.vmem [shape: f32[16,128], index: 5, kind: input, shape index: {}]
  %s6 = inlined_call_operand.vmem [shape: f32[16,8], index: 6, kind: input, shape index: {}]
  %s7 = inlined_call_operand.vmem [shape: f32[16,8], index: 7, kind: input, shape index: {}]
  %s8 = inlined_call_operand.vmem [shape: f32[16,4], index: 8, kind: input, shape index: {}]
  %s9 = inlined_call_operand.vmem [shape: f32[16,4], index: 9, kind: input, shape index: {}]
  %s10 = inlined_call_operand.vmem [shape: f32[1,128], index: 10, kind: input, shape index: {}]
  %s11 = inlined_call_operand.hbm [shape: f32[1024,128], index: 11, kind: output, shape index: {0}]
  %s12 = inlined_call_operand.hbm [shape: f32[4,1,128], index: 12, kind: output, shape index: {1}]
  %s13 = inlined_call_operand.hbm [shape: f32[4,1,128], index: 13, kind: output, shape index: {2}]
  %14 = xla_tuple %s11, %s12, %s13
  %s15 = sld [smem:[#allocation0]]
  $region93: #{tpu_custom_call.1} parent=0
    _
  %s17 = ssub.s32 1, %s15
  %s18 = scalar_select 0, %s17, %s15
  $region1: #{tpu_custom_call.1} parent=0
    #allocation2 [shape = 'u8[262144]{0}', space=vmem, size = 0x40000, scoped, tag = 'output window, operand 0']
    #allocation3 [shape = 's32[2]{0}', space=sflag, size = 0x8, scoped, tag = 'scoped memory for tpu_custom_call.1']
    #allocation4 [shape = 'u8[1024]{0}', space=vmem, size = 0x400, scoped, tag = 'output window, operand 1']
    #allocation5 [shape = 's32[2]{0}', space=sflag, size = 0x8, scoped, tag = 'scoped memory for tpu_custom_call.1']
    #allocation6 [shape = 'u8[1024]{0}', space=vmem, size = 0x400, scoped, tag = 'output window, operand 2']
    %19 = vsyncpa [#allocation3], 0
    %s20 = scalar_lea.sflag [#allocation3], 1
    %21 = vsyncpa %s20, 0
    %22 = vsyncpa [#allocation5], 0
    %s23 = scalar_lea.sflag [#allocation5], 1
    %24 = vsyncpa %s23, 0
    loop: start=0, step=1, limit=6
    $region2: #{tpu_custom_call.1} parent=1 // loop_pre_header
      _
    $region3: #{tpu_custom_call.1} parent=1 // loop_header
      %s26 = sphi 0, %s30
      %p27 = scmp.ge.s32.totalorder %s26, 6
      %s36 = sphi 0, %s38
      %s39 = sphi 0, %s36
      %s40 = sphi 0, %s39
      %s56 = sphi 0, %s40
      %s62 = sphi 0, %s64
      %s65 = sphi 0, %s62
      %s66 = sphi 0, %s65
      %s82 = sphi 0, %s66
      %s88 = sphi 0, %s90
      %s91 = sphi 0, %s88
      %s92 = sphi 0, %s91
      %s108 = sphi 0, %s92
      %s112 = sphi 0, %s112
      %s114 = sphi 0, %s112
      %s115 = sphi 0, %s114
      %s129 = sphi 0, %s115
      %s133 = sphi 0, %s133
      %s135 = sphi 0, %s133
      %s136 = sphi 0, %s135
      %s150 = sphi 0, %s136
      %s154 = sphi 0, %s154
      %s156 = sphi 0, %s154
      %s157 = sphi 0, %s156
      %s171 = sphi 0, %s157
      %s175 = sphi 0, %s175
      %s177 = sphi 0, %s175
      %s178 = sphi 0, %s177
      %s192 = sphi 0, %s178
      %s196 = sphi 0, %s196
      %s198 = sphi 0, %s196
      %s199 = sphi 0, %s198
      %s213 = sphi 0, %s199
      %s217 = sphi 0, %s217
      %s219 = sphi 0, %s217
      %s220 = sphi 0, %s219
      %s234 = sphi 0, %s220
      %s238 = sphi 0, %s238
      %s240 = sphi 0, %s238
      %s241 = sphi 0, %s240
      %s255 = sphi 0, %s241
      %s259 = sphi 0, %s259
      %s261 = sphi 0, %s259
      %s262 = sphi 0, %s261
      %s276 = sphi 0, %s262
      %s282 = sphi 0, %s284
      %s285 = sphi 0, %s282
      %s286 = sphi 0, %s285
      %s302 = sphi 0, %s286
      %s308 = sphi 0, %s310
      %s311 = sphi 0, %s308
      %s312 = sphi 0, %s311
      %s328 = sphi 0, %s312
      %s334 = sphi 0, %s336
      %s337 = sphi 0, %s334
      %s338 = sphi 0, %s337
      %s354 = sphi 0, %s338
    $region4: #{tpu_custom_call.1} parent=1 // loop_header_branch
      %29 = sbr.rel (%p27) target = $region8
    $region5: #{tpu_custom_call.1} parent=1 // loop_body
      %s31 = ssub.s32 %s26, 1
      %s32 = ssub.s32 %s26, 2
      %s33 = sadd.s32 %s26, 1
      %s34 = ssub.s32 %s26, %s33
      %p35 = scmp.eq.s32.totalorder %s34, 0
      %s37 = sadd.s32 %s36, 1
      %s38 = scalar_select %p35, %s36, %s37
      %p41 = pneg %p35
      %p42 = scmp.eq.s32.totalorder %s26, 3
      %p43 = por %p41, %p42
      %p44 = scmp.ne.s32.totalorder %s36, %s39
      %p45 = scmp.eq.s32.totalorder %s26, 0
      %p46 = por %p44, %p45
      %p47 = scmp.ne.s32.totalorder %s36, %s39
      %p48 = scmp.eq.s32.totalorder %s31, 3
      %p49 = por %p47, %p48
      %p50 = scmp.ne.s32.totalorder %s39, %s40
      %p51 = scmp.eq.s32.totalorder %s31, 0
      %p52 = por %p50, %p51
      %p53 = scmp.ne.s32.totalorder %s39, %s40
      %p54 = scmp.eq.s32.totalorder %s32, 3
      %p55 = por %p53, %p54
      %p57 = scmp.ne.s32.totalorder %s40, %s56
      %p58 = scmp.eq.s32.totalorder %s32, 0
      %p59 = por %p57, %p58
      %s60 = ssub.s32 %s26, %s33
      %p61 = scmp.eq.s32.totalorder %s60, 0
      %s63 = sadd.s32 %s62, 1
      %s64 = scalar_select %p61, %s62, %s63
      %p67 = pneg %p61
      %p68 = scmp.eq.s32.totalorder %s26, 3
      %p69 = por %p67, %p68
      %p70 = scmp.ne.s32.totalorder %s62, %s65
      %p71 = scmp.eq.s32.totalorder %s26, 0
      %p72 = por %p70, %p71
      %p73 = scmp.ne.s32.totalorder %s62, %s65
      %p74 = scmp.eq.s32.totalorder %s31, 3
      %p75 = por %p73, %p74
      %p76 = scmp.ne.s32.totalorder %s65, %s66
      %p77 = scmp.eq.s32.totalorder %s31, 0
      %p78 = por %p76, %p77
      %p79 = scmp.ne.s32.totalorder %s65, %s66
      %p80 = scmp.eq.s32.totalorder %s32, 3
      %p81 = por %p79, %p80
      %p83 = scmp.ne.s32.totalorder %s66, %s82
      %p84 = scmp.eq.s32.totalorder %s32, 0
      %p85 = por %p83, %p84
      %s86 = ssub.s32 %s26, %s33
      %p87 = scmp.eq.s32.totalorder %s86, 0
      %s89 = sadd.s32 %s88, 1
      %s90 = scalar_select %p87, %s88, %s89
      %p93 = pneg %p87
      %p94 = scmp.eq.s32.totalorder %s26, 3
      %p95 = por %p93, %p94
      %p96 = scmp.ne.s32.totalorder %s88, %s91
      %p97 = scmp.eq.s32.totalorder %s26, 0
      %p98 = por %p96, %p97
      %p99 = scmp.ne.s32.totalorder %s88, %s91
      %p100 = scmp.eq.s32.totalorder %s31, 3
      %p101 = por %p99, %p100
      %p102 = scmp.ne.s32.totalorder %s91, %s92
      %p103 = scmp.eq.s32.totalorder %s31, 0
      %p104 = por %p102, %p103
      %p105 = scmp.ne.s32.totalorder %s91, %s92
      %p106 = scmp.eq.s32.totalorder %s32, 3
      %p107 = por %p105, %p106
      %p109 = scmp.ne.s32.totalorder %s92, %s108
      %p110 = scmp.eq.s32.totalorder %s32, 0
      %p111 = por %p109, %p110
      %s113 = sadd.s32 %s112, 1
      %p116 = scmp.eq.s32.totalorder %s26, 3
      %p117 = scmp.ne.s32.totalorder %s112, %s114
      %p118 = scmp.eq.s32.totalorder %s26, 0
      %p119 = por %p117, %p118
      %p120 = scmp.ne.s32.totalorder %s112, %s114
      %p121 = scmp.eq.s32.totalorder %s31, 3
      %p122 = por %p120, %p121
      %p123 = scmp.ne.s32.totalorder %s114, %s115
      %p124 = scmp.eq.s32.totalorder %s31, 0
      %p125 = por %p123, %p124
      %p126 = scmp.ne.s32.totalorder %s114, %s115
      %p127 = scmp.eq.s32.totalorder %s32, 3
      %p128 = por %p126, %p127
      %p130 = scmp.ne.s32.totalorder %s115, %s129
      %p131 = scmp.eq.s32.totalorder %s32, 0
      %p132 = por %p130, %p131
      %s134 = sadd.s32 %s133, 1
      %p137 = scmp.eq.s32.totalorder %s26, 3
      %p138 = scmp.ne.s32.totalorder %s133, %s135
      %p139 = scmp.eq.s32.totalorder %s26, 0
      %p140 = por %p138, %p139
      %p141 = scmp.ne.s32.totalorder %s133, %s135
      %p142 = scmp.eq.s32.totalorder %s31, 3
      %p143 = por %p141, %p142
      %p144 = scmp.ne.s32.totalorder %s135, %s136
      %p145 = scmp.eq.s32.totalorder %s31, 0
      %p146 = por %p144, %p145
      %p147 = scmp.ne.s32.totalorder %s135, %s136
      %p148 = scmp.eq.s32.totalorder %s32, 3
      %p149 = por %p147, %p148
      %p151 = scmp.ne.s32.totalorder %s136, %s150
      %p152 = scmp.eq.s32.totalorder %s32, 0
      %p153 = por %p151, %p152
      %s155 = sadd.s32 %s154, 1
      %p158 = scmp.eq.s32.totalorder %s26, 3
      %p159 = scmp.ne.s32.totalorder %s154, %s156
      %p160 = scmp.eq.s32.totalorder %s26, 0
      %p161 = por %p159, %p160
      %p162 = scmp.ne.s32.totalorder %s154, %s156
      %p163 = scmp.eq.s32.totalorder %s31, 3
      %p164 = por %p162, %p163
      %p165 = scmp.ne.s32.totalorder %s156, %s157
      %p166 = scmp.eq.s32.totalorder %s31, 0
      %p167 = por %p165, %p166
      %p168 = scmp.ne.s32.totalorder %s156, %s157
      %p169 = scmp.eq.s32.totalorder %s32, 3
      %p170 = por %p168, %p169
      %p172 = scmp.ne.s32.totalorder %s157, %s171
      %p173 = scmp.eq.s32.totalorder %s32, 0
      %p174 = por %p172, %p173
      %s176 = sadd.s32 %s175, 1
      %p179 = scmp.eq.s32.totalorder %s26, 3
      %p180 = scmp.ne.s32.totalorder %s175, %s177
      %p181 = scmp.eq.s32.totalorder %s26, 0
      %p182 = por %p180, %p181
      %p183 = scmp.ne.s32.totalorder %s175, %s177
      %p184 = scmp.eq.s32.totalorder %s31, 3
      %p185 = por %p183, %p184
      %p186 = scmp.ne.s32.totalorder %s177, %s178
      %p187 = scmp.eq.s32.totalorder %s31, 0
      %p188 = por %p186, %p187
      %p189 = scmp.ne.s32.totalorder %s177, %s178
      %p190 = scmp.eq.s32.totalorder %s32, 3
      %p191 = por %p189, %p190
      %p193 = scmp.ne.s32.totalorder %s178, %s192
      %p194 = scmp.eq.s32.totalorder %s32, 0
      %p195 = por %p193, %p194
      %s197 = sadd.s32 %s196, 1
      %p200 = scmp.eq.s32.totalorder %s26, 3
      %p201 = scmp.ne.s32.totalorder %s196, %s198
      %p202 = scmp.eq.s32.totalorder %s26, 0
      %p203 = por %p201, %p202
      %p204 = scmp.ne.s32.totalorder %s196, %s198
      %p205 = scmp.eq.s32.totalorder %s31, 3
      %p206 = por %p204, %p205
      %p207 = scmp.ne.s32.totalorder %s198, %s199
      %p208 = scmp.eq.s32.totalorder %s31, 0
      %p209 = por %p207, %p208
      %p210 = scmp.ne.s32.totalorder %s198, %s199
      %p211 = scmp.eq.s32.totalorder %s32, 3
      %p212 = por %p210, %p211
      %p214 = scmp.ne.s32.totalorder %s199, %s213
      %p215 = scmp.eq.s32.totalorder %s32, 0
      %p216 = por %p214, %p215
      %s218 = sadd.s32 %s217, 1
      %p221 = scmp.eq.s32.totalorder %s26, 3
      %p222 = scmp.ne.s32.totalorder %s217, %s219
      %p223 = scmp.eq.s32.totalorder %s26, 0
      %p224 = por %p222, %p223
      %p225 = scmp.ne.s32.totalorder %s217, %s219
      %p226 = scmp.eq.s32.totalorder %s31, 3
      %p227 = por %p225, %p226
      %p228 = scmp.ne.s32.totalorder %s219, %s220
      %p229 = scmp.eq.s32.totalorder %s31, 0
      %p230 = por %p228, %p229
      %p231 = scmp.ne.s32.totalorder %s219, %s220
      %p232 = scmp.eq.s32.totalorder %s32, 3
      %p233 = por %p231, %p232
      %p235 = scmp.ne.s32.totalorder %s220, %s234
      %p236 = scmp.eq.s32.totalorder %s32, 0
      %p237 = por %p235, %p236
      %s239 = sadd.s32 %s238, 1
      %p242 = scmp.eq.s32.totalorder %s26, 3
      %p243 = scmp.ne.s32.totalorder %s238, %s240
      %p244 = scmp.eq.s32.totalorder %s26, 0
      %p245 = por %p243, %p244
      %p246 = scmp.ne.s32.totalorder %s238, %s240
      %p247 = scmp.eq.s32.totalorder %s31, 3
      %p248 = por %p246, %p247
      %p249 = scmp.ne.s32.totalorder %s240, %s241
      %p250 = scmp.eq.s32.totalorder %s31, 0
      %p251 = por %p249, %p250
      %p252 = scmp.ne.s32.totalorder %s240, %s241
      %p253 = scmp.eq.s32.totalorder %s32, 3
      %p254 = por %p252, %p253
      %p256 = scmp.ne.s32.totalorder %s241, %s255
      %p257 = scmp.eq.s32.totalorder %s32, 0
      %p258 = por %p256, %p257
      %s260 = sadd.s32 %s259, 1
      %p263 = scmp.eq.s32.totalorder %s26, 3
      %p264 = scmp.ne.s32.totalorder %s259, %s261
      %p265 = scmp.eq.s32.totalorder %s26, 0
      %p266 = por %p264, %p265
      %p267 = scmp.ne.s32.totalorder %s259, %s261
      %p268 = scmp.eq.s32.totalorder %s31, 3
      %p269 = por %p267, %p268
      %p270 = scmp.ne.s32.totalorder %s261, %s262
      %p271 = scmp.eq.s32.totalorder %s31, 0
      %p272 = por %p270, %p271
      %p273 = scmp.ne.s32.totalorder %s261, %s262
      %p274 = scmp.eq.s32.totalorder %s32, 3
      %p275 = por %p273, %p274
      %p277 = scmp.ne.s32.totalorder %s262, %s276
      %p278 = scmp.eq.s32.totalorder %s32, 0
      %p279 = por %p277, %p278
      %s280 = ssub.s32 %s26, %s33
      %p281 = scmp.eq.s32.totalorder %s280, 0
      %s283 = sadd.s32 %s282, 1
      %s284 = scalar_select %p281, %s282, %s283
      %p287 = pneg %p281
      %p288 = scmp.eq.s32.totalorder %s26, 3
      %p289 = por %p287, %p288
      %p290 = scmp.ne.s32.totalorder %s282, %s285
      %p291 = scmp.eq.s32.totalorder %s26, 0
      %p292 = por %p290, %p291
      %p293 = scmp.ne.s32.totalorder %s282, %s285
      %p294 = scmp.eq.s32.totalorder %s31, 3
      %p295 = por %p293, %p294
      %p296 = scmp.ne.s32.totalorder %s285, %s286
      %p297 = scmp.eq.s32.totalorder %s31, 0
      %p298 = por %p296, %p297
      %p299 = scmp.ne.s32.totalorder %s285, %s286
      %p300 = scmp.eq.s32.totalorder %s32, 3
      %p301 = por %p299, %p300
      %p303 = scmp.ne.s32.totalorder %s286, %s302
      %p304 = scmp.eq.s32.totalorder %s32, 0
      %p305 = por %p303, %p304
      %s306 = ssub.s32 %s26, %s33
      %p307 = scmp.eq.s32.totalorder %s306, 0
      %s309 = sadd.s32 %s308, 1
      %s310 = scalar_select %p307, %s308, %s309
      %p313 = pneg %p307
      %p314 = scmp.eq.s32.totalorder %s26, 3
      %p315 = por %p313, %p314
      %p316 = scmp.ne.s32.totalorder %s308, %s311
      %p317 = scmp.eq.s32.totalorder %s26, 0
      %p318 = por %p316, %p317
      %p319 = scmp.ne.s32.totalorder %s308, %s311
      %p320 = scmp.eq.s32.totalorder %s31, 3
      %p321 = por %p319, %p320
      %p322 = scmp.ne.s32.totalorder %s311, %s312
      %p323 = scmp.eq.s32.totalorder %s31, 0
      %p324 = por %p322, %p323
      %p325 = scmp.ne.s32.totalorder %s311, %s312
      %p326 = scmp.eq.s32.totalorder %s32, 3
      %p327 = por %p325, %p326
      %p329 = scmp.ne.s32.totalorder %s312, %s328
      %p330 = scmp.eq.s32.totalorder %s32, 0
      %p331 = por %p329, %p330
      %s332 = ssub.s32 %s26, %s33
      %p333 = scmp.eq.s32.totalorder %s332, 0
      %s335 = sadd.s32 %s334, 1
      %s336 = scalar_select %p333, %s334, %s335
      %p339 = pneg %p333
      %p340 = scmp.eq.s32.totalorder %s26, 3
      %p341 = por %p339, %p340
      %p342 = scmp.ne.s32.totalorder %s334, %s337
      %p343 = scmp.eq.s32.totalorder %s26, 0
      %p344 = por %p342, %p343
      %p345 = scmp.ne.s32.totalorder %s334, %s337
      %p346 = scmp.eq.s32.totalorder %s31, 3
      %p347 = por %p345, %p346
      %p348 = scmp.ne.s32.totalorder %s337, %s338
      %p349 = scmp.eq.s32.totalorder %s31, 0
      %p350 = por %p348, %p349
      %p351 = scmp.ne.s32.totalorder %s337, %s338
      %p352 = scmp.eq.s32.totalorder %s32, 3
      %p353 = por %p351, %p352
      %p355 = scmp.ne.s32.totalorder %s338, %s354
      %p356 = scmp.eq.s32.totalorder %s32, 0
      %p357 = por %p355, %p356
      %p358 = scmp.le.s32.totalorder 1, %s26
      %p359 = scmp.lt.s32.totalorder %s26, 5
      %p360 = pnand %p358, %p359
      %p361 = pneg %p360
      // Predicated region
      $region9: #{tpu_custom_call.1} parent=5 // pred_check
        _
      $region10: #{tpu_custom_call.1} parent=5 // pred_check_branch
        %363 = sbr.rel (%p360) target = $region12
      $region11: #{tpu_custom_call.1} parent=5 // pred_region
        %s364 = ssub.s32 %s26, 1
        // Predicated region
        $region13: #{tpu_custom_call.1} parent=11 // pred_check
          %p365 = pneg %p125
        $region14: #{tpu_custom_call.1} parent=11 // pred_check_branch
          %367 = sbr.rel (%p365) target = $region16
        $region15: #{tpu_custom_call.1} parent=11 // pred_region
          _
        $region16: #{tpu_custom_call.1} parent=11 // pred_fallthru
          _
        // Predicated region
        $region17: #{tpu_custom_call.1} parent=11 // pred_check
          %p368 = pneg %p146
        $region18: #{tpu_custom_call.1} parent=11 // pred_check_branch
          %370 = sbr.rel (%p368) target = $region20
        $region19: #{tpu_custom_call.1} parent=11 // pred_region
          _
        $region20: #{tpu_custom_call.1} parent=11 // pred_fallthru
          _
        // Predicated region
        $region21: #{tpu_custom_call.1} parent=11 // pred_check
          %p371 = pneg %p167
        $region22: #{tpu_custom_call.1} parent=11 // pred_check_branch
          %373 = sbr.rel (%p371) target = $region24
        $region23: #{tpu_custom_call.1} parent=11 // pred_region
          _
        $region24: #{tpu_custom_call.1} parent=11 // pred_fallthru
          _
        // Predicated region
        $region25: #{tpu_custom_call.1} parent=11 // pred_check
          %p374 = pneg %p188
        $region26: #{tpu_custom_call.1} parent=11 // pred_check_branch
          %376 = sbr.rel (%p374) target = $region28
        $region27: #{tpu_custom_call.1} parent=11 // pred_region
          _
        $region28: #{tpu_custom_call.1} parent=11 // pred_fallthru
          _
        // Predicated region
        $region29: #{tpu_custom_call.1} parent=11 // pred_check
          %p377 = pneg %p209
        $region30: #{tpu_custom_call.1} parent=11 // pred_check_branch
          %379 = sbr.rel (%p377) target = $region32
        $region31: #{tpu_custom_call.1} parent=11 // pred_region
          _
        $region32: #{tpu_custom_call.1} parent=11 // pred_fallthru
          _
        // Predicated region
        $region33: #{tpu_custom_call.1} parent=11 // pred_check
          %p380 = pneg %p230
        $region34: #{tpu_custom_call.1} parent=11 // pred_check_branch
          %382 = sbr.rel (%p380) target = $region36
        $region35: #{tpu_custom_call.1} parent=11 // pred_region
          _
        $region36: #{tpu_custom_call.1} parent=11 // pred_fallthru
          _
        // Predicated region
        $region37: #{tpu_custom_call.1} parent=11 // pred_check
          %p383 = pneg %p251
        $region38: #{tpu_custom_call.1} parent=11 // pred_check_branch
          %385 = sbr.rel (%p383) target = $region40
        $region39: #{tpu_custom_call.1} parent=11 // pred_region
          _
        $region40: #{tpu_custom_call.1} parent=11 // pred_fallthru
          _
        // Predicated region
        $region41: #{tpu_custom_call.1} parent=11 // pred_check
          %p386 = pneg %p272
        $region42: #{tpu_custom_call.1} parent=11 // pred_check_branch
          %388 = sbr.rel (%p386) target = $region44
        $region43: #{tpu_custom_call.1} parent=11 // pred_region
          _
        $region44: #{tpu_custom_call.1} parent=11 // pred_fallthru
          _
      $region12: #{tpu_custom_call.1} parent=5 // pred_fallthru
        _
      %p389 = scmp.lt.s32.totalorder %s26, 4
      // Predicated region
      $region45: #{tpu_custom_call.1} parent=5 // pred_check
        %p390 = pneg %p389
      $region46: #{tpu_custom_call.1} parent=5 // pred_check_branch
        %392 = sbr.rel (%p390) target = $region48
      $region47: #{tpu_custom_call.1} parent=5 // pred_region
        // Predicated region
        $region49: #{tpu_custom_call.1} parent=47 // pred_check
          %p393 = pneg %p46
        $region50: #{tpu_custom_call.1} parent=47 // pred_check_branch
          %395 = sbr.rel (%p393) target = $region52
        $region51: #{tpu_custom_call.1} parent=47 // pred_region
          %p396 = scmp.lt.s32.totalorder %s26, 3
          %s397 = scalar_select %p396, %s26, 3
          %s398 = smul.addr %s397, 32
          %s399 = smul.addr %s398, 8
          %s400 = scalar_lea.vmem %s0, %s399
        $region52: #{tpu_custom_call.1} parent=47 // pred_fallthru
          _
        // Predicated region
        $region53: #{tpu_custom_call.1} parent=47 // pred_check
          %p401 = pneg %p72
        $region54: #{tpu_custom_call.1} parent=47 // pred_check_branch
          %403 = sbr.rel (%p401) target = $region56
        $region55: #{tpu_custom_call.1} parent=47 // pred_region
          %p404 = scmp.lt.s32.totalorder %s26, 3
          %s405 = scalar_select %p404, %s26, 3
          %s406 = smul.addr %s405, 8
          %s407 = smul.addr %s406, 8
          %s408 = scalar_lea.vmem %s1, %s407
        $region56: #{tpu_custom_call.1} parent=47 // pred_fallthru
          _
        // Predicated region
        $region57: #{tpu_custom_call.1} parent=47 // pred_check
          %p409 = pneg %p98
        $region58: #{tpu_custom_call.1} parent=47 // pred_check_branch
          %411 = sbr.rel (%p409) target = $region60
        $region59: #{tpu_custom_call.1} parent=47 // pred_region
          %p412 = scmp.lt.s32.totalorder %s26, 3
          %s413 = scalar_select %p412, %s26, 3
          %s414 = smul.addr %s413, 2
          %s415 = smul.addr %s414, 8
          %s416 = scalar_lea.vmem %s2, %s415
        $region60: #{tpu_custom_call.1} parent=47 // pred_fallthru
          _
      $region48: #{tpu_custom_call.1} parent=5 // pred_fallthru
        _
      %p417 = scmp.le.s32.totalorder 1, %s26
      %p418 = scmp.lt.s32.totalorder %s26, 5
      %p419 = pnand %p417, %p418
      %p420 = pneg %p419
      // Predicated region
      $region61: #{tpu_custom_call.1} parent=5 // pred_check
        _
      $region62: #{tpu_custom_call.1} parent=5 // pred_check_branch
        %422 = sbr.rel (%p419) target = $region64
      $region63: #{tpu_custom_call.1} parent=5 // pred_region
        %s423 = ssub.s32 %s26, 1
        %p424 = scmp.lt.s32.totalorder %s31, 3
        %s425 = scalar_select %p424, %s31, 3
        %s426 = smul.addr %s425, 32
        %s427 = smul.addr %s426, 8
        %s428 = scalar_lea.vmem %s0, %s427
        %p429 = pneg %p52
        %p430 = pneg %p49
        %p431 = scmp.lt.s32.totalorder %s31, 3
        %s432 = scalar_select %p431, %s31, 3
        %s433 = smul.addr %s432, 8
        %s434 = smul.addr %s433, 8
        %s435 = scalar_lea.vmem %s1, %s434
        %p436 = pneg %p78
        %p437 = pneg %p75
        %p438 = scmp.lt.s32.totalorder %s31, 3
        %s439 = scalar_select %p438, %s31, 3
        %s440 = smul.addr %s439, 2
        %s441 = smul.addr %s440, 8
        %s442 = scalar_lea.vmem %s2, %s441
        %p443 = pneg %p104
        %p444 = pneg %p101
        %p445 = pneg %p125
        %p446 = pneg %p122
        %p447 = pneg %p146
        %p448 = pneg %p143
        %p449 = pneg %p167
        %p450 = pneg %p164
        %p451 = pneg %p188
        %p452 = pneg %p185
        %p453 = pneg %p209
        %p454 = pneg %p206
        %p455 = pneg %p230
        %p456 = pneg %p227
        %p457 = pneg %p251
        %p458 = pneg %p248
        %p459 = pneg %p272
        %p460 = pneg %p269
        %p461 = pneg %p298
        %p462 = pneg %p295
        %s463 = sand.u32 %s285, 1
        %s464 = scalar_lea.sflag [#allocation3], %s463
        %s465 = sand.u32 %s285, 1
        %s466 = smul.addr %s465, 256
        %s467 = scalar_lea.vmem [#allocation2], %s466
        %p468 = pneg %p324
        %p469 = pneg %p321
        %s470 = sand.u32 %s31, 1
        %s471 = scalar_lea.sflag [#allocation5], %s470
        %s472 = sand.u32 %s311, 1
        %s473 = scalar_lea.vmem [#allocation4], %s472
        %p474 = pneg %p350
        %p475 = pneg %p347
        %s476 = sand.u32 %s31, 1
        %s477 = scalar_lea.sflag [#allocation5], %s476
        %s478 = sand.u32 %s337, 1
        %s479 = scalar_lea.vmem [#allocation6], %s478
        %p480 = scmp.lt.s32.totalorder %s31, 3
        %s481 = scalar_select %p480, %s31, 3
        %s482 = smul.addr %s481, 32
        %s483 = smul.addr %s482, 8
        %s484 = scalar_lea.vmem %s0, %s483
        %p485 = scmp.lt.s32.totalorder %s31, 3
        %s486 = scalar_select %p485, %s31, 3
        %s487 = smul.addr %s486, 8
        %s488 = smul.addr %s487, 8
        %s489 = scalar_lea.vmem %s1, %s488
        %p490 = scmp.lt.s32.totalorder %s31, 3
        %s491 = scalar_select %p490, %s31, 3
        %s492 = smul.addr %s491, 2
        %s493 = smul.addr %s492, 8
        %s494 = scalar_lea.vmem %s2, %s493
        %s495 = smul.u32 32, %s31
        %v496 = vld [vmem:[%s484] sm:$0xff]
        %v497 = vld [vmem:[%s484 + $0x8] sm:$0xff]
        %v498 = vld [vmem:[%s484 + $0x10] sm:$0xff]
        %v499 = vld [vmem:[%s484 + $0x18] sm:$0xff]
        %v500 = vld [vmem:[%s484 + $0x20] sm:$0xff]
        %v501 = vld [vmem:[%s484 + $0x28] sm:$0xff]
        %v502 = vld [vmem:[%s484 + $0x30] sm:$0xff]
        %v503 = vld [vmem:[%s484 + $0x38] sm:$0xff]
        %v504 = vld [vmem:[%s484 + $0x40] sm:$0xff]
        %v505 = vld [vmem:[%s484 + $0x48] sm:$0xff]
        %v506 = vld [vmem:[%s484 + $0x50] sm:$0xff]
        %v507 = vld [vmem:[%s484 + $0x58] sm:$0xff]
        %v508 = vld [vmem:[%s484 + $0x60] sm:$0xff]
        %v509 = vld [vmem:[%s484 + $0x68] sm:$0xff]
        %v510 = vld [vmem:[%s484 + $0x70] sm:$0xff]
        %v511 = vld [vmem:[%s484 + $0x78] sm:$0xff]
        %v512 = vld [vmem:[%s484 + $0x80] sm:$0xff]
        %v513 = vld [vmem:[%s484 + $0x88] sm:$0xff]
        %v514 = vld [vmem:[%s484 + $0x90] sm:$0xff]
        %v515 = vld [vmem:[%s484 + $0x98] sm:$0xff]
        %v516 = vld [vmem:[%s484 + $0xa0] sm:$0xff]
        %v517 = vld [vmem:[%s484 + $0xa8] sm:$0xff]
        %v518 = vld [vmem:[%s484 + $0xb0] sm:$0xff]
        %v519 = vld [vmem:[%s484 + $0xb8] sm:$0xff]
        %v520 = vld [vmem:[%s484 + $0xc0] sm:$0xff]
        %v521 = vld [vmem:[%s484 + $0xc8] sm:$0xff]
        %v522 = vld [vmem:[%s484 + $0xd0] sm:$0xff]
        %v523 = vld [vmem:[%s484 + $0xd8] sm:$0xff]
        %v524 = vld [vmem:[%s484 + $0xe0] sm:$0xff]
        %v525 = vld [vmem:[%s484 + $0xe8] sm:$0xff]
        %v526 = vld [vmem:[%s484 + $0xf0] sm:$0xff]
        %v527 = vld [vmem:[%s484 + $0xf8] sm:$0xff]
        %v528 = vld [vmem:[%s3] sm:$0xf]
        %v529 = vld [vmem:[%s489] sm:$0xff]
        %v530 = vld [vmem:[%s489 + $0x8] sm:$0xff]
        %v531 = vld [vmem:[%s489 + $0x10] sm:$0xff]
        %v532 = vld [vmem:[%s489 + $0x18] sm:$0xff]
        %v533 = vld [vmem:[%s489 + $0x20] sm:$0xff]
        %v534 = vld [vmem:[%s489 + $0x28] sm:$0xff]
        %v535 = vld [vmem:[%s489 + $0x30] sm:$0xff]
        %v536 = vld [vmem:[%s489 + $0x38] sm:$0xff]
        %v537 = vld [vmem:[%s4] sm:$0xff]
        %vm538 = vcmask 64512
        %v540 = vsel %vm538, %v529, 0
        %v543 = vsel %vm538, %v530, 0
        %v546 = vsel %vm538, %v531, 0
        %v549 = vsel %vm538, %v532, 0
        %v552 = vsel %vm538, %v533, 0
        %v555 = vsel %vm538, %v534, 0
        %v558 = vsel %vm538, %v535, 0
        %v561 = vsel %vm538, %v536, 0
        %563 = vmatprep.subr.mxu0 0.0
        %564 = vmatpush1.msra.mxu0 0.0
        %565 = vmatprep.subr.mxu0 0.0
        %566 = vmatpush1.msra.mxu0 0.0
        %567 = vmatprep.subr.mxu0 0.0
        %568 = vmatpush1.msra.mxu0 0.0
        %569 = vmatprep.subr.mxu0 0.0
        %570 = vmatpush1.msra.mxu0 0.0
        %571 = vmatprep.subr.mxu0 0.0
        %572 = vmatpush1.msra.mxu0 0.0
        %573 = vmatprep.subr.mxu0 0.0
        %574 = vmatpush1.msra.mxu0 0.0
        %575 = vmatprep.subr.mxu0 0.0
        %576 = vmatpush1.msra.mxu0 0.0
        %577 = vmatprep.subr.mxu0 0.0
        %578 = vmatpush1.msra.mxu0 0.0
        %579 = vmatprep.subr.mxu0 0.0
        %580 = vmatpush1.msra.mxu0 0.0
        %581 = vmatprep.subr.mxu0 0.0
        %582 = vmatpush1.msra.mxu0 0.0
        %583 = vmatprep.subr.mxu0 0.0
        %584 = vmatpush1.msra.mxu0 0.0
        %585 = vmatprep.subr.mxu0 0.0
        %586 = vmatpush1.msra.mxu0 0.0
        %587 = vmatprep.subr.mxu0 0.0
        %588 = vmatpush1.msra.mxu0 0.0
        %589 = vmatprep.subr.mxu0 0.0
        %590 = vmatpush1.msra.mxu0 0.0
        %591 = vmatprep.subr.mxu0 0.0
        %592 = vmatpush1.msra.mxu0 0.0
        %593 = vmatprep.subr.mxu0 0.0
        %594 = vmatpush1.msra.mxu0 %v537
        %595 = vmatprep.subr.mxu0 0.0
        %596 = vmatpush2.msra.mxu0 0.0
        %597 = vmatprep.subr.mxu0 0.0
        %598 = vmatpush2.msra.mxu0 0.0
        %599 = vmatprep.subr.mxu0 0.0
        %600 = vmatpush2.msra.mxu0 0.0
        %601 = vmatprep.subr.mxu0 0.0
        %602 = vmatpush2.msra.mxu0 0.0
        %603 = vmatprep.subr.mxu0 0.0
        %604 = vmatpush2.msra.mxu0 0.0
        %605 = vmatprep.subr.mxu0 0.0
        %606 = vmatpush2.msra.mxu0 0.0
        %607 = vmatprep.subr.mxu0 0.0
        %608 = vmatpush2.msra.mxu0 0.0
        %609 = vmatprep.subr.mxu0 0.0
        %610 = vmatpush2.msra.mxu0 0.0
        %611 = vmatprep.subr.mxu0 0.0
        %612 = vmatpush2.msra.mxu0 0.0
        %613 = vmatprep.subr.mxu0 0.0
        %614 = vmatpush2.msra.mxu0 0.0
        %615 = vmatprep.subr.mxu0 0.0
        %616 = vmatpush2.msra.mxu0 0.0
        %617 = vmatprep.subr.mxu0 0.0
        %618 = vmatpush2.msra.mxu0 0.0
        %619 = vmatprep.subr.mxu0 0.0
        %620 = vmatpush2.msra.mxu0 0.0
        %621 = vmatprep.subr.mxu0 0.0
        %622 = vmatpush2.msra.mxu0 0.0
        %623 = vmatprep.subr.mxu0 0.0
        %624 = vmatpush2.msra.mxu0 0.0
        %625 = vmatprep.subr.mxu0 0.0
        %626 = vmatpush2.msra.mxu0 0.0
        %627 = vmatprep.mubr.f32.mxu0 0.0
        %628 = vmatmul.mubr.f32.gmra.mxu0 %v540
        %v629 = vpop.f32.mrf.mxu0
        %v630 = vadd.f32 0.0, %v629
        %v631 = vpop.f32.mrf.mxu0
        %632 = vmatprep.mubr.f32.mxu0 0.0
        %633 = vmatmul.mubr.f32.gmra.mxu0 %v543
        %v634 = vpop.f32.mrf.mxu0
        %v635 = vadd.f32 0.0, %v634
        %v636 = vpop.f32.mrf.mxu0
        %637 = vmatprep.mubr.f32.mxu0 0.0
        %638 = vmatmul.mubr.f32.gmra.mxu0 %v546
        %v639 = vpop.f32.mrf.mxu0
        %v640 = vadd.f32 0.0, %v639
        %v641 = vpop.f32.mrf.mxu0
        %642 = vmatprep.mubr.f32.mxu0 0.0
        %643 = vmatmul.mubr.f32.gmra.mxu0 %v549
        %v644 = vpop.f32.mrf.mxu0
        %v645 = vadd.f32 0.0, %v644
        %v646 = vpop.f32.mrf.mxu0
        %647 = vmatprep.mubr.f32.mxu0 0.0
        %648 = vmatmul.mubr.f32.gmra.mxu0 %v552
        %v649 = vpop.f32.mrf.mxu0
        %v650 = vadd.f32 0.0, %v649
        %v651 = vpop.f32.mrf.mxu0
        %652 = vmatprep.mubr.f32.mxu0 0.0
        %653 = vmatmul.mubr.f32.gmra.mxu0 %v555
        %v654 = vpop.f32.mrf.mxu0
        %v655 = vadd.f32 0.0, %v654
        %v656 = vpop.f32.mrf.mxu0
        %657 = vmatprep.mubr.f32.mxu0 0.0
        %658 = vmatmul.mubr.f32.gmra.mxu0 %v558
        %v659 = vpop.f32.mrf.mxu0
        %v660 = vadd.f32 0.0, %v659
        %v661 = vpop.f32.mrf.mxu0
        %662 = vmatprep.mubr.f32.mxu0 0.0
        %663 = vmatmul.mubr.f32.gmra.mxu0 %v561
        %v664 = vpop.f32.mrf.mxu0
        %v665 = vadd.f32 0.0, %v664
        %v666 = vpop.f32.mrf.mxu0
        %667 = vdwg.mxu0
        %v668 = vld [vmem:[%s6] sm:$0xff]
        %v669 = vld [vmem:[%s6 + $0x8] sm:$0xff]
        %v670 = vld [vmem:[%s7] sm:$0xff]
        %v671 = vld [vmem:[%s7 + $0x8] sm:$0xff]
        %v680 = vcombine.low %v630, %v635
        %v681 = vcombine.high %v630, %v635
        %v682 = vcombine.low %v640, %v645
        %v683 = vcombine.high %v640, %v645
        %v684 = vcombine.low %v650, %v655
        %v685 = vcombine.high %v650, %v655
        %v686 = vcombine.low %v660, %v665
        %v687 = vcombine.high %v660, %v665
        %v689 = vunpack.c.l.s4 1966171168
        %v690 = vunpack.c.0.s8 %v689
        %v691 = vlaneseq
        %v692 = vshrl.u32 %v691, 7
        %v693 = vsub.s32 %v690, %v692
        %v694 = vrot.slane %v680, %v693
        %v696 = vunpack.c.l.s4 1966171168
        %v697 = vunpack.c.0.s8 %v696
        %v698 = vlaneseq
        %v699 = vshrl.u32 %v698, 7
        %v700 = vsub.s32 %v697, %v699
        %v701 = vrot.slane %v681, %v700
        %v703 = vunpack.c.l.s4 1966171168
        %v704 = vunpack.c.0.s8 %v703
        %v705 = vlaneseq
        %v706 = vshrl.u32 %v705, 7
        %v707 = vsub.s32 %v704, %v706
        %v708 = vrot.slane %v682, %v707
        %v710 = vunpack.c.l.s4 1966171168
        %v711 = vunpack.c.0.s8 %v710
        %v712 = vlaneseq
        %v713 = vshrl.u32 %v712, 7
        %v714 = vsub.s32 %v711, %v713
        %v715 = vrot.slane %v683, %v714
        %v717 = vunpack.c.l.s4 1966171168
        %v718 = vunpack.c.0.s8 %v717
        %v719 = vlaneseq
        %v720 = vshrl.u32 %v719, 7
        %v721 = vsub.s32 %v718, %v720
        %v722 = vrot.slane %v684, %v721
        %v724 = vunpack.c.l.s4 1966171168
        %v725 = vunpack.c.0.s8 %v724
        %v726 = vlaneseq
        %v727 = vshrl.u32 %v726, 7
        %v728 = vsub.s32 %v725, %v727
        %v729 = vrot.slane %v685, %v728
        %v731 = vunpack.c.l.s4 1966171168
        %v732 = vunpack.c.0.s8 %v731
        %v733 = vlaneseq
        %v734 = vshrl.u32 %v733, 7
        %v735 = vsub.s32 %v732, %v734
        %v736 = vrot.slane %v686, %v735
        %v738 = vunpack.c.l.s4 1966171168
        %v739 = vunpack.c.0.s8 %v738
        %v740 = vlaneseq
        %v741 = vshrl.u32 %v740, 7
        %v742 = vsub.s32 %v739, %v741
        %v743 = vrot.slane %v687, %v742
        %v744 = vcombine.low %v694, %v708
        %v745 = vcombine.high %v694, %v708
        %v746 = vcombine.low %v701, %v715
        %v747 = vcombine.high %v701, %v715
        %v748 = vcombine.low %v722, %v736
        %v749 = vcombine.high %v722, %v736
        %v750 = vcombine.low %v729, %v743
        %v751 = vcombine.high %v729, %v743
        %v753 = vunpack.c.l.s4 1966171168
        %v754 = vunpack.c.0.s8 %v753
        %v755 = vlaneseq
        %v756 = vshrl.u32 %v755, 7
        %v757 = vsub.s32 %v754, %v756
        %v758 = vrot.slane %v744, %v757
        %v760 = vunpack.c.l.s4 1966171168
        %v761 = vunpack.c.0.s8 %v760
        %v762 = vlaneseq
        %v763 = vshrl.u32 %v762, 7
        %v764 = vsub.s32 %v761, %v763
        %v765 = vrot.slane %v746, %v764
        %v767 = vunpack.c.l.s4 1966171168
        %v768 = vunpack.c.0.s8 %v767
        %v769 = vlaneseq
        %v770 = vshrl.u32 %v769, 7
        %v771 = vsub.s32 %v768, %v770
        %v772 = vrot.slane %v745, %v771
        %v774 = vunpack.c.l.s4 1966171168
        %v775 = vunpack.c.0.s8 %v774
        %v776 = vlaneseq
        %v777 = vshrl.u32 %v776, 7
        %v778 = vsub.s32 %v775, %v777
        %v779 = vrot.slane %v747, %v778
        %v781 = vunpack.c.l.s4 1966171168
        %v782 = vunpack.c.0.s8 %v781
        %v783 = vlaneseq
        %v784 = vshrl.u32 %v783, 7
        %v785 = vsub.s32 %v782, %v784
        %v786 = vrot.slane %v748, %v785
        %v788 = vunpack.c.l.s4 1966171168
        %v789 = vunpack.c.0.s8 %v788
        %v790 = vlaneseq
        %v791 = vshrl.u32 %v790, 7
        %v792 = vsub.s32 %v789, %v791
        %v793 = vrot.slane %v750, %v792
        %v795 = vunpack.c.l.s4 1966171168
        %v796 = vunpack.c.0.s8 %v795
        %v797 = vlaneseq
        %v798 = vshrl.u32 %v797, 7
        %v799 = vsub.s32 %v796, %v798
        %v800 = vrot.slane %v749, %v799
        %v802 = vunpack.c.l.s4 1966171168
        %v803 = vunpack.c.0.s8 %v802
        %v804 = vlaneseq
        %v805 = vshrl.u32 %v804, 7
        %v806 = vsub.s32 %v803, %v805
        %v807 = vrot.slane %v751, %v806
        %v808 = vcombine.low %v758, %v786
        %v809 = vcombine.high %v758, %v786
        %v810 = vcombine.low %v765, %v793
        %v811 = vcombine.high %v765, %v793
        %v812 = vcombine.low %v772, %v800
        %v813 = vcombine.high %v772, %v800
        %v814 = vcombine.low %v779, %v807
        %v815 = vcombine.high %v779, %v807
        %v825 = vsel %vm538, %v668, 0
        %v828 = vsel %vm538, %v669, 0
        %830 = vmatprep.subr.mxu0 0.0
        %831 = vmatpush1.msra.mxu0 0.0
        %832 = vmatprep.subr.mxu0 0.0
        %833 = vmatpush1.msra.mxu0 0.0
        %834 = vmatprep.subr.mxu0 0.0
        %835 = vmatpush1.msra.mxu0 0.0
        %836 = vmatprep.subr.mxu0 0.0
        %837 = vmatpush1.msra.mxu0 0.0
        %838 = vmatprep.subr.mxu0 0.0
        %839 = vmatpush1.msra.mxu0 0.0
        %840 = vmatprep.subr.mxu0 0.0
        %841 = vmatpush1.msra.mxu0 0.0
        %842 = vmatprep.subr.mxu0 0.0
        %843 = vmatpush1.msra.mxu0 0.0
        %844 = vmatprep.subr.mxu0 0.0
        %845 = vmatpush1.msra.mxu0 0.0
        %846 = vmatprep.subr.mxu0 0.0
        %847 = vmatpush1.msra.mxu0 0.0
        %848 = vmatprep.subr.mxu0 0.0
        %849 = vmatpush1.msra.mxu0 0.0
        %850 = vmatprep.subr.mxu0 0.0
        %851 = vmatpush1.msra.mxu0 0.0
        %852 = vmatprep.subr.mxu0 0.0
        %853 = vmatpush1.msra.mxu0 0.0
        %854 = vmatprep.subr.mxu0 0.0
        %855 = vmatpush1.msra.mxu0 0.0
        %856 = vmatprep.subr.mxu0 0.0
        %857 = vmatpush1.msra.mxu0 0.0
        %858 = vmatprep.subr.mxu0 0.0
        %859 = vmatpush1.msra.mxu0 0.0
        %860 = vmatprep.subr.mxu0 %v812
        %861 = vmatpush1.msra.mxu0 %v808
        %862 = vmatprep.subr.mxu0 0.0
        %863 = vmatpush2.msra.mxu0 0.0
        %864 = vmatprep.subr.mxu0 0.0
        %865 = vmatpush2.msra.mxu0 0.0
        %866 = vmatprep.subr.mxu0 0.0
        %867 = vmatpush2.msra.mxu0 0.0
        %868 = vmatprep.subr.mxu0 0.0
        %869 = vmatpush2.msra.mxu0 0.0
        %870 = vmatprep.subr.mxu0 0.0
        %871 = vmatpush2.msra.mxu0 0.0
        %872 = vmatprep.subr.mxu0 0.0
        %873 = vmatpush2.msra.mxu0 0.0
        %874 = vmatprep.subr.mxu0 0.0
        %875 = vmatpush2.msra.mxu0 0.0
        %876 = vmatprep.subr.mxu0 0.0
        %877 = vmatpush2.msra.mxu0 0.0
        %878 = vmatprep.subr.mxu0 0.0
        %879 = vmatpush2.msra.mxu0 0.0
        %880 = vmatprep.subr.mxu0 0.0
        %881 = vmatpush2.msra.mxu0 0.0
        %882 = vmatprep.subr.mxu0 0.0
        %883 = vmatpush2.msra.mxu0 0.0
        %884 = vmatprep.subr.mxu0 0.0
        %885 = vmatpush2.msra.mxu0 0.0
        %886 = vmatprep.subr.mxu0 0.0
        %887 = vmatpush2.msra.mxu0 0.0
        %888 = vmatprep.subr.mxu0 0.0
        %889 = vmatpush2.msra.mxu0 0.0
        %890 = vmatprep.subr.mxu0 0.0
        %891 = vmatpush2.msra.mxu0 0.0
        %892 = vmatprep.subr.mxu0 0.0
        %893 = vmatpush2.msra.mxu0 0.0
        %894 = vmatprep.mubr.f32.mxu0 0.0
        %895 = vmatmul.mubr.f32.gmra.mxu0 %v825
        %v896 = vpop.f32.mrf.mxu0
        %v897 = vadd.f32 0.0, %v896
        %v898 = vpop.f32.mrf.mxu0
        %v899 = vadd.f32 0.0, %v898
        %900 = vmatprep.mubr.f32.mxu0 0.0
        %901 = vmatmul.mubr.f32.gmra.mxu0 %v828
        %v902 = vpop.f32.mrf.mxu0
        %v903 = vadd.f32 0.0, %v902
        %v904 = vpop.f32.mrf.mxu0
        %v905 = vadd.f32 0.0, %v904
        %906 = vdwg.mxu0
        %907 = vmatprep.subr.mxu0 0.0
        %908 = vmatpush1.msra.mxu0 0.0
        %909 = vmatprep.subr.mxu0 0.0
        %910 = vmatpush1.msra.mxu0 0.0
        %911 = vmatprep.subr.mxu0 0.0
        %912 = vmatpush1.msra.mxu0 0.0
        %913 = vmatprep.subr.mxu0 0.0
        %914 = vmatpush1.msra.mxu0 0.0
        %915 = vmatprep.subr.mxu0 0.0
        %916 = vmatpush1.msra.mxu0 0.0
        %917 = vmatprep.subr.mxu0 0.0
        %918 = vmatpush1.msra.mxu0 0.0
        %919 = vmatprep.subr.mxu0 0.0
        %920 = vmatpush1.msra.mxu0 0.0
        %921 = vmatprep.subr.mxu0 0.0
        %922 = vmatpush1.msra.mxu0 0.0
        %923 = vmatprep.subr.mxu0 0.0
        %924 = vmatpush1.msra.mxu0 0.0
        %925 = vmatprep.subr.mxu0 0.0
        %926 = vmatpush1.msra.mxu0 0.0
        %927 = vmatprep.subr.mxu0 0.0
        %928 = vmatpush1.msra.mxu0 0.0
        %929 = vmatprep.subr.mxu0 0.0
        %930 = vmatpush1.msra.mxu0 0.0
        %931 = vmatprep.subr.mxu0 0.0
        %932 = vmatpush1.msra.mxu0 0.0
        %933 = vmatprep.subr.mxu0 0.0
        %934 = vmatpush1.msra.mxu0 0.0
        %935 = vmatprep.subr.mxu0 0.0
        %936 = vmatpush1.msra.mxu0 0.0
        %937 = vmatprep.subr.mxu0 %v813
        %938 = vmatpush1.msra.mxu0 %v809
        %939 = vmatprep.subr.mxu0 0.0
        %940 = vmatpush2.msra.mxu0 0.0
        %941 = vmatprep.subr.mxu0 0.0
        %942 = vmatpush2.msra.mxu0 0.0
        %943 = vmatprep.subr.mxu0 0.0
        %944 = vmatpush2.msra.mxu0 0.0
        %945 = vmatprep.subr.mxu0 0.0
        %946 = vmatpush2.msra.mxu0 0.0
        %947 = vmatprep.subr.mxu0 0.0
        %948 = vmatpush2.msra.mxu0 0.0
        %949 = vmatprep.subr.mxu0 0.0
        %950 = vmatpush2.msra.mxu0 0.0
        %951 = vmatprep.subr.mxu0 0.0
        %952 = vmatpush2.msra.mxu0 0.0
        %953 = vmatprep.subr.mxu0 0.0
        %954 = vmatpush2.msra.mxu0 0.0
        %955 = vmatprep.subr.mxu0 0.0
        %956 = vmatpush2.msra.mxu0 0.0
        %957 = vmatprep.subr.mxu0 0.0
        %958 = vmatpush2.msra.mxu0 0.0
        %959 = vmatprep.subr.mxu0 0.0
        %960 = vmatpush2.msra.mxu0 0.0
        %961 = vmatprep.subr.mxu0 0.0
        %962 = vmatpush2.msra.mxu0 0.0
        %963 = vmatprep.subr.mxu0 0.0
        %964 = vmatpush2.msra.mxu0 0.0
        %965 = vmatprep.subr.mxu0 0.0
        %966 = vmatpush2.msra.mxu0 0.0
        %967 = vmatprep.subr.mxu0 0.0
        %968 = vmatpush2.msra.mxu0 0.0
        %969 = vmatprep.subr.mxu0 0.0
        %970 = vmatpush2.msra.mxu0 0.0
        %971 = vmatprep.mubr.f32.mxu0 0.0
        %972 = vmatmul.mubr.f32.gmra.mxu0 %v825
        %v973 = vpop.f32.mrf.mxu0
        %v974 = vadd.f32 0.0, %v973
        %v975 = vpop.f32.mrf.mxu0
        %v976 = vadd.f32 0.0, %v975
        %977 = vmatprep.mubr.f32.mxu0 0.0
        %978 = vmatmul.mubr.f32.gmra.mxu0 %v828
        %v979 = vpop.f32.mrf.mxu0
        %v980 = vadd.f32 0.0, %v979
        %v981 = vpop.f32.mrf.mxu0
        %v982 = vadd.f32 0.0, %v981
        %983 = vdwg.mxu0
        %984 = vmatprep.subr.mxu0 0.0
        %985 = vmatpush1.msra.mxu0 0.0
        %986 = vmatprep.subr.mxu0 0.0
        %987 = vmatpush1.msra.mxu0 0.0
        %988 = vmatprep.subr.mxu0 0.0
        %989 = vmatpush1.msra.mxu0 0.0
        %990 = vmatprep.subr.mxu0 0.0
        %991 = vmatpush1.msra.mxu0 0.0
        %992 = vmatprep.subr.mxu0 0.0
        %993 = vmatpush1.msra.mxu0 0.0
        %994 = vmatprep.subr.mxu0 0.0
        %995 = vmatpush1.msra.mxu0 0.0
        %996 = vmatprep.subr.mxu0 0.0
        %997 = vmatpush1.msra.mxu0 0.0
        %998 = vmatprep.subr.mxu0 0.0
        %999 = vmatpush1.msra.mxu0 0.0
        %1000 = vmatprep.subr.mxu0 0.0
        %1001 = vmatpush1.msra.mxu0 0.0
        %1002 = vmatprep.subr.mxu0 0.0
        %1003 = vmatpush1.msra.mxu0 0.0
        %1004 = vmatprep.subr.mxu0 0.0
        %1005 = vmatpush1.msra.mxu0 0.0
        %1006 = vmatprep.subr.mxu0 0.0
        %1007 = vmatpush1.msra.mxu0 0.0
        %1008 = vmatprep.subr.mxu0 0.0
        %1009 = vmatpush1.msra.mxu0 0.0
        %1010 = vmatprep.subr.mxu0 0.0
        %1011 = vmatpush1.msra.mxu0 0.0
        %1012 = vmatprep.subr.mxu0 0.0
        %1013 = vmatpush1.msra.mxu0 0.0
        %1014 = vmatprep.subr.mxu0 %v814
        %1015 = vmatpush1.msra.mxu0 %v810
        %1016 = vmatprep.subr.mxu0 0.0
        %1017 = vmatpush2.msra.mxu0 0.0
        %1018 = vmatprep.subr.mxu0 0.0
        %1019 = vmatpush2.msra.mxu0 0.0
        %1020 = vmatprep.subr.mxu0 0.0
        %1021 = vmatpush2.msra.mxu0 0.0
        %1022 = vmatprep.subr.mxu0 0.0
        %1023 = vmatpush2.msra.mxu0 0.0
        %1024 = vmatprep.subr.mxu0 0.0
        %1025 = vmatpush2.msra.mxu0 0.0
        %1026 = vmatprep.subr.mxu0 0.0
        %1027 = vmatpush2.msra.mxu0 0.0
        %1028 = vmatprep.subr.mxu0 0.0
        %1029 = vmatpush2.msra.mxu0 0.0
        %1030 = vmatprep.subr.mxu0 0.0
        %1031 = vmatpush2.msra.mxu0 0.0
        %1032 = vmatprep.subr.mxu0 0.0
        %1033 = vmatpush2.msra.mxu0 0.0
        %1034 = vmatprep.subr.mxu0 0.0
        %1035 = vmatpush2.msra.mxu0 0.0
        %1036 = vmatprep.subr.mxu0 0.0
        %1037 = vmatpush2.msra.mxu0 0.0
        %1038 = vmatprep.subr.mxu0 0.0
        %1039 = vmatpush2.msra.mxu0 0.0
        %1040 = vmatprep.subr.mxu0 0.0
        %1041 = vmatpush2.msra.mxu0 0.0
        %1042 = vmatprep.subr.mxu0 0.0
        %1043 = vmatpush2.msra.mxu0 0.0
        %1044 = vmatprep.subr.mxu0 0.0
        %1045 = vmatpush2.msra.mxu0 0.0
        %1046 = vmatprep.subr.mxu0 0.0
        %1047 = vmatpush2.msra.mxu0 0.0
        %1048 = vmatprep.mubr.f32.mxu0 0.0
        %1049 = vmatmul.mubr.f32.gmra.mxu0 %v825
        %v1050 = vpop.f32.mrf.mxu0
        %v1051 = vadd.f32 0.0, %v1050
        %v1052 = vpop.f32.mrf.mxu0
        %v1053 = vadd.f32 0.0, %v1052
        %1054 = vmatprep.mubr.f32.mxu0 0.0
        %1055 = vmatmul.mubr.f32.gmra.mxu0 %v828
        %v1056 = vpop.f32.mrf.mxu0
        %v1057 = vadd.f32 0.0, %v1056
        %v1058 = vpop.f32.mrf.mxu0
        %v1059 = vadd.f32 0.0, %v1058
        %1060 = vdwg.mxu0
        %1061 = vmatprep.subr.mxu0 0.0
        %1062 = vmatpush1.msra.mxu0 0.0
        %1063 = vmatprep.subr.mxu0 0.0
        %1064 = vmatpush1.msra.mxu0 0.0
        %1065 = vmatprep.subr.mxu0 0.0
        %1066 = vmatpush1.msra.mxu0 0.0
        %1067 = vmatprep.subr.mxu0 0.0
        %1068 = vmatpush1.msra.mxu0 0.0
        %1069 = vmatprep.subr.mxu0 0.0
        %1070 = vmatpush1.msra.mxu0 0.0
        %1071 = vmatprep.subr.mxu0 0.0
        %1072 = vmatpush1.msra.mxu0 0.0
        %1073 = vmatprep.subr.mxu0 0.0
        %1074 = vmatpush1.msra.mxu0 0.0
        %1075 = vmatprep.subr.mxu0 0.0
        %1076 = vmatpush1.msra.mxu0 0.0
        %1077 = vmatprep.subr.mxu0 0.0
        %1078 = vmatpush1.msra.mxu0 0.0
        %1079 = vmatprep.subr.mxu0 0.0
        %1080 = vmatpush1.msra.mxu0 0.0
        %1081 = vmatprep.subr.mxu0 0.0
        %1082 = vmatpush1.msra.mxu0 0.0
        %1083 = vmatprep.subr.mxu0 0.0
        %1084 = vmatpush1.msra.mxu0 0.0
        %1085 = vmatprep.subr.mxu0 0.0
        %1086 = vmatpush1.msra.mxu0 0.0
        %1087 = vmatprep.subr.mxu0 0.0
        %1088 = vmatpush1.msra.mxu0 0.0
        %1089 = vmatprep.subr.mxu0 0.0
        %1090 = vmatpush1.msra.mxu0 0.0
        %1091 = vmatprep.subr.mxu0 %v815
        %1092 = vmatpush1.msra.mxu0 %v811
        %1093 = vmatprep.subr.mxu0 0.0
        %1094 = vmatpush2.msra.mxu0 0.0
        %1095 = vmatprep.subr.mxu0 0.0
        %1096 = vmatpush2.msra.mxu0 0.0
        %1097 = vmatprep.subr.mxu0 0.0
        %1098 = vmatpush2.msra.mxu0 0.0
        %1099 = vmatprep.subr.mxu0 0.0
        %1100 = vmatpush2.msra.mxu0 0.0
        %1101 = vmatprep.subr.mxu0 0.0
        %1102 = vmatpush2.msra.mxu0 0.0
        %1103 = vmatprep.subr.mxu0 0.0
        %1104 = vmatpush2.msra.mxu0 0.0
        %1105 = vmatprep.subr.mxu0 0.0
        %1106 = vmatpush2.msra.mxu0 0.0
        %1107 = vmatprep.subr.mxu0 0.0
        %1108 = vmatpush2.msra.mxu0 0.0
        %1109 = vmatprep.subr.mxu0 0.0
        %1110 = vmatpush2.msra.mxu0 0.0
        %1111 = vmatprep.subr.mxu0 0.0
        %1112 = vmatpush2.msra.mxu0 0.0
        %1113 = vmatprep.subr.mxu0 0.0
        %1114 = vmatpush2.msra.mxu0 0.0
        %1115 = vmatprep.subr.mxu0 0.0
        %1116 = vmatpush2.msra.mxu0 0.0
        %1117 = vmatprep.subr.mxu0 0.0
        %1118 = vmatpush2.msra.mxu0 0.0
        %1119 = vmatprep.subr.mxu0 0.0
        %1120 = vmatpush2.msra.mxu0 0.0
        %1121 = vmatprep.subr.mxu0 0.0
        %1122 = vmatpush2.msra.mxu0 0.0
        %1123 = vmatprep.subr.mxu0 0.0
        %1124 = vmatpush2.msra.mxu0 0.0
        %1125 = vmatprep.mubr.f32.mxu0 0.0
        %1126 = vmatmul.mubr.f32.gmra.mxu0 %v825
        %v1127 = vpop.f32.mrf.mxu0
        %v1128 = vadd.f32 0.0, %v1127
        %v1129 = vpop.f32.mrf.mxu0
        %v1130 = vadd.f32 0.0, %v1129
        %1131 = vmatprep.mubr.f32.mxu0 0.0
        %1132 = vmatmul.mubr.f32.gmra.mxu0 %v828
        %v1133 = vpop.f32.mrf.mxu0
        %v1134 = vadd.f32 0.0, %v1133
        %v1135 = vpop.f32.mrf.mxu0
        %v1136 = vadd.f32 0.0, %v1135
        %1137 = vdwg.mxu0
        %v1138 = vcombine.low %v897, %v974
        %v1139 = vcombine.high %v897, %v974
        %v1141 = vunpack.c.l.s4 1983009808
        %v1142 = vunpack.c.0.s8 %v1141
        %v1143 = vlaneseq
        %v1144 = vshrl.u32 %v1143, 7
        %v1145 = vsub.s32 %v1142, %v1144
        %v1146 = vrot.slane %v1138, %v1145
        %v1148 = vunpack.c.l.s4 1983009808
        %v1149 = vunpack.c.0.s8 %v1148
        %v1150 = vlaneseq
        %v1151 = vshrl.u32 %v1150, 7
        %v1152 = vsub.s32 %v1149, %v1151
        %v1153 = vrot.slane %v1139, %v1152
        %v1154 = vcombine.low %v899, %v976
        %v1155 = vcombine.high %v899, %v976
        %v1157 = vunpack.c.l.s4 1983009808
        %v1158 = vunpack.c.0.s8 %v1157
        %v1159 = vlaneseq
        %v1160 = vshrl.u32 %v1159, 7
        %v1161 = vsub.s32 %v1158, %v1160
        %v1162 = vrot.slane %v1154, %v1161
        %v1164 = vunpack.c.l.s4 1983009808
        %v1165 = vunpack.c.0.s8 %v1164
        %v1166 = vlaneseq
        %v1167 = vshrl.u32 %v1166, 7
        %v1168 = vsub.s32 %v1165, %v1167
        %v1169 = vrot.slane %v1155, %v1168
        %v1170 = vcombine.low %v1051, %v1128
        %v1171 = vcombine.high %v1051, %v1128
        %v1173 = vunpack.c.l.s4 1983009808
        %v1174 = vunpack.c.0.s8 %v1173
        %v1175 = vlaneseq
        %v1176 = vshrl.u32 %v1175, 7
        %v1177 = vsub.s32 %v1174, %v1176
        %v1178 = vrot.slane %v1170, %v1177
        %v1180 = vunpack.c.l.s4 1983009808
        %v1181 = vunpack.c.0.s8 %v1180
        %v1182 = vlaneseq
        %v1183 = vshrl.u32 %v1182, 7
        %v1184 = vsub.s32 %v1181, %v1183
        %v1185 = vrot.slane %v1171, %v1184
        %v1186 = vcombine.low %v1053, %v1130
        %v1187 = vcombine.high %v1053, %v1130
        %v1189 = vunpack.c.l.s4 1983009808
        %v1190 = vunpack.c.0.s8 %v1189
        %v1191 = vlaneseq
        %v1192 = vshrl.u32 %v1191, 7
        %v1193 = vsub.s32 %v1190, %v1192
        %v1194 = vrot.slane %v1186, %v1193
        %v1196 = vunpack.c.l.s4 1983009808
        %v1197 = vunpack.c.0.s8 %v1196
        %v1198 = vlaneseq
        %v1199 = vshrl.u32 %v1198, 7
        %v1200 = vsub.s32 %v1197, %v1199
        %v1201 = vrot.slane %v1187, %v1200
        %v1202 = vcombine.low %v1146, %v1162
        %v1203 = vcombine.high %v1146, %v1162
        %v1205 = vunpack.c.l.s4 1934713408
        %v1206 = vunpack.c.0.s8 %v1205
        %v1207 = vlaneseq
        %v1208 = vshrl.u32 %v1207, 7
        %v1209 = vsub.s32 %v1206, %v1208
        %v1210 = vrot.slane %v1202, %v1209
        %v1212 = vunpack.c.l.s4 1934713408
        %v1213 = vunpack.c.0.s8 %v1212
        %v1214 = vlaneseq
        %v1215 = vshrl.u32 %v1214, 7
        %v1216 = vsub.s32 %v1213, %v1215
        %v1217 = vrot.slane %v1203, %v1216
        %v1218 = vcombine.low %v1153, %v1169
        %v1219 = vcombine.high %v1153, %v1169
        %v1221 = vunpack.c.l.s4 1934713408
        %v1222 = vunpack.c.0.s8 %v1221
        %v1223 = vlaneseq
        %v1224 = vshrl.u32 %v1223, 7
        %v1225 = vsub.s32 %v1222, %v1224
        %v1226 = vrot.slane %v1218, %v1225
        %v1228 = vunpack.c.l.s4 1934713408
        %v1229 = vunpack.c.0.s8 %v1228
        %v1230 = vlaneseq
        %v1231 = vshrl.u32 %v1230, 7
        %v1232 = vsub.s32 %v1229, %v1231
        %v1233 = vrot.slane %v1219, %v1232
        %v1234 = vcombine.low %v1178, %v1194
        %v1235 = vcombine.high %v1178, %v1194
        %v1237 = vunpack.c.l.s4 1934713408
        %v1238 = vunpack.c.0.s8 %v1237
        %v1239 = vlaneseq
        %v1240 = vshrl.u32 %v1239, 7
        %v1241 = vsub.s32 %v1238, %v1240
        %v1242 = vrot.slane %v1234, %v1241
        %v1244 = vunpack.c.l.s4 1934713408
        %v1245 = vunpack.c.0.s8 %v1244
        %v1246 = vlaneseq
        %v1247 = vshrl.u32 %v1246, 7
        %v1248 = vsub.s32 %v1245, %v1247
        %v1249 = vrot.slane %v1235, %v1248
        %v1250 = vcombine.low %v1185, %v1201
        %v1251 = vcombine.high %v1185, %v1201
        %v1253 = vunpack.c.l.s4 1934713408
        %v1254 = vunpack.c.0.s8 %v1253
        %v1255 = vlaneseq
        %v1256 = vshrl.u32 %v1255, 7
        %v1257 = vsub.s32 %v1254, %v1256
        %v1258 = vrot.slane %v1250, %v1257
        %v1260 = vunpack.c.l.s4 1934713408
        %v1261 = vunpack.c.0.s8 %v1260
        %v1262 = vlaneseq
        %v1263 = vshrl.u32 %v1262, 7
        %v1264 = vsub.s32 %v1261, %v1263
        %v1265 = vrot.slane %v1251, %v1264
        %v1266 = vcombine.low %v1210, %v1242
        %v1267 = vcombine.high %v1210, %v1242
        %v1268 = vcombine.low %v1217, %v1249
        %v1269 = vcombine.high %v1217, %v1249
        %v1270 = vcombine.low %v1226, %v1258
        %v1271 = vcombine.high %v1226, %v1258
        %v1272 = vcombine.low %v1233, %v1265
        %v1273 = vcombine.high %v1233, %v1265
        %v1274 = vcombine.low %v903, %v980
        %v1275 = vcombine.high %v903, %v980
        %v1277 = vunpack.c.l.s4 1983009808
        %v1278 = vunpack.c.0.s8 %v1277
        %v1279 = vlaneseq
        %v1280 = vshrl.u32 %v1279, 7
        %v1281 = vsub.s32 %v1278, %v1280
        %v1282 = vrot.slane %v1274, %v1281
        %v1284 = vunpack.c.l.s4 1983009808
        %v1285 = vunpack.c.0.s8 %v1284
        %v1286 = vlaneseq
        %v1287 = vshrl.u32 %v1286, 7
        %v1288 = vsub.s32 %v1285, %v1287
        %v1289 = vrot.slane %v1275, %v1288
        %v1290 = vcombine.low %v905, %v982
        %v1291 = vcombine.high %v905, %v982
        %v1293 = vunpack.c.l.s4 1983009808
        %v1294 = vunpack.c.0.s8 %v1293
        %v1295 = vlaneseq
        %v1296 = vshrl.u32 %v1295, 7
        %v1297 = vsub.s32 %v1294, %v1296
        %v1298 = vrot.slane %v1290, %v1297
        %v1300 = vunpack.c.l.s4 1983009808
        %v1301 = vunpack.c.0.s8 %v1300
        %v1302 = vlaneseq
        %v1303 = vshrl.u32 %v1302, 7
        %v1304 = vsub.s32 %v1301, %v1303
        %v1305 = vrot.slane %v1291, %v1304
        %v1306 = vcombine.low %v1057, %v1134
        %v1307 = vcombine.high %v1057, %v1134
        %v1309 = vunpack.c.l.s4 1983009808
        %v1310 = vunpack.c.0.s8 %v1309
        %v1311 = vlaneseq
        %v1312 = vshrl.u32 %v1311, 7
        %v1313 = vsub.s32 %v1310, %v1312
        %v1314 = vrot.slane %v1306, %v1313
        %v1316 = vunpack.c.l.s4 1983009808
        %v1317 = vunpack.c.0.s8 %v1316
        %v1318 = vlaneseq
        %v1319 = vshrl.u32 %v1318, 7
        %v1320 = vsub.s32 %v1317, %v1319
        %v1321 = vrot.slane %v1307, %v1320
        %v1322 = vcombine.low %v1059, %v1136
        %v1323 = vcombine.high %v1059, %v1136
        %v1325 = vunpack.c.l.s4 1983009808
        %v1326 = vunpack.c.0.s8 %v1325
        %v1327 = vlaneseq
        %v1328 = vshrl.u32 %v1327, 7
        %v1329 = vsub.s32 %v1326, %v1328
        %v1330 = vrot.slane %v1322, %v1329
        %v1332 = vunpack.c.l.s4 1983009808
        %v1333 = vunpack.c.0.s8 %v1332
        %v1334 = vlaneseq
        %v1335 = vshrl.u32 %v1334, 7
        %v1336 = vsub.s32 %v1333, %v1335
        %v1337 = vrot.slane %v1323, %v1336
        %v1338 = vcombine.low %v1282, %v1298
        %v1339 = vcombine.high %v1282, %v1298
        %v1341 = vunpack.c.l.s4 1934713408
        %v1342 = vunpack.c.0.s8 %v1341
        %v1343 = vlaneseq
        %v1344 = vshrl.u32 %v1343, 7
        %v1345 = vsub.s32 %v1342, %v1344
        %v1346 = vrot.slane %v1338, %v1345
        %v1348 = vunpack.c.l.s4 1934713408
        %v1349 = vunpack.c.0.s8 %v1348
        %v1350 = vlaneseq
        %v1351 = vshrl.u32 %v1350, 7
        %v1352 = vsub.s32 %v1349, %v1351
        %v1353 = vrot.slane %v1339, %v1352
        %v1354 = vcombine.low %v1289, %v1305
        %v1355 = vcombine.high %v1289, %v1305
        %v1357 = vunpack.c.l.s4 1934713408
        %v1358 = vunpack.c.0.s8 %v1357
        %v1359 = vlaneseq
        %v1360 = vshrl.u32 %v1359, 7
        %v1361 = vsub.s32 %v1358, %v1360
        %v1362 = vrot.slane %v1354, %v1361
        %v1364 = vunpack.c.l.s4 1934713408
        %v1365 = vunpack.c.0.s8 %v1364
        %v1366 = vlaneseq
        %v1367 = vshrl.u32 %v1366, 7
        %v1368 = vsub.s32 %v1365, %v1367
        %v1369 = vrot.slane %v1355, %v1368
        %v1370 = vcombine.low %v1314, %v1330
        %v1371 = vcombine.high %v1314, %v1330
        %v1373 = vunpack.c.l.s4 1934713408
        %v1374 = vunpack.c.0.s8 %v1373
        %v1375 = vlaneseq
        %v1376 = vshrl.u32 %v1375, 7
        %v1377 = vsub.s32 %v1374, %v1376
        %v1378 = vrot.slane %v1370, %v1377
        %v1380 = vunpack.c.l.s4 1934713408
        %v1381 = vunpack.c.0.s8 %v1380
        %v1382 = vlaneseq
        %v1383 = vshrl.u32 %v1382, 7
        %v1384 = vsub.s32 %v1381, %v1383
        %v1385 = vrot.slane %v1371, %v1384
        %v1386 = vcombine.low %v1321, %v1337
        %v1387 = vcombine.high %v1321, %v1337
        %v1389 = vunpack.c.l.s4 1934713408
        %v1390 = vunpack.c.0.s8 %v1389
        %v1391 = vlaneseq
        %v1392 = vshrl.u32 %v1391, 7
        %v1393 = vsub.s32 %v1390, %v1392
        %v1394 = vrot.slane %v1386, %v1393
        %v1396 = vunpack.c.l.s4 1934713408
        %v1397 = vunpack.c.0.s8 %v1396
        %v1398 = vlaneseq
        %v1399 = vshrl.u32 %v1398, 7
        %v1400 = vsub.s32 %v1397, %v1399
        %v1401 = vrot.slane %v1387, %v1400
        %v1402 = vcombine.low %v1346, %v1378
        %v1403 = vcombine.high %v1346, %v1378
        %v1404 = vcombine.low %v1353, %v1385
        %v1405 = vcombine.high %v1353, %v1385
        %v1406 = vcombine.low %v1362, %v1394
        %v1407 = vcombine.high %v1362, %v1394
        %v1408 = vcombine.low %v1369, %v1401
        %v1409 = vcombine.high %v1369, %v1401
        %v1410 = vcombine.low %v1266, %v1268
        %v1411 = vcombine.high %v1266, %v1268
        %v1413 = vunpack.c.l.s4 1983009808
        %v1414 = vunpack.c.0.s8 %v1413
        %v1415 = vlaneseq
        %v1416 = vshrl.u32 %v1415, 7
        %v1417 = vsub.s32 %v1414, %v1416
        %v1418 = vrot.slane %v1410, %v1417
        %v1420 = vunpack.c.l.s4 1983009808
        %v1421 = vunpack.c.0.s8 %v1420
        %v1422 = vlaneseq
        %v1423 = vshrl.u32 %v1422, 7
        %v1424 = vsub.s32 %v1421, %v1423
        %v1425 = vrot.slane %v1411, %v1424
        %v1426 = vcombine.low %v1267, %v1269
        %v1427 = vcombine.high %v1267, %v1269
        %v1429 = vunpack.c.l.s4 1983009808
        %v1430 = vunpack.c.0.s8 %v1429
        %v1431 = vlaneseq
        %v1432 = vshrl.u32 %v1431, 7
        %v1433 = vsub.s32 %v1430, %v1432
        %v1434 = vrot.slane %v1426, %v1433
        %v1436 = vunpack.c.l.s4 1983009808
        %v1437 = vunpack.c.0.s8 %v1436
        %v1438 = vlaneseq
        %v1439 = vshrl.u32 %v1438, 7
        %v1440 = vsub.s32 %v1437, %v1439
        %v1441 = vrot.slane %v1427, %v1440
        %v1442 = vcombine.low %v1270, %v1272
        %v1443 = vcombine.high %v1270, %v1272
        %v1445 = vunpack.c.l.s4 1983009808
        %v1446 = vunpack.c.0.s8 %v1445
        %v1447 = vlaneseq
        %v1448 = vshrl.u32 %v1447, 7
        %v1449 = vsub.s32 %v1446, %v1448
        %v1450 = vrot.slane %v1442, %v1449
        %v1452 = vunpack.c.l.s4 1983009808
        %v1453 = vunpack.c.0.s8 %v1452
        %v1454 = vlaneseq
        %v1455 = vshrl.u32 %v1454, 7
        %v1456 = vsub.s32 %v1453, %v1455
        %v1457 = vrot.slane %v1443, %v1456
        %v1458 = vcombine.low %v1271, %v1273
        %v1459 = vcombine.high %v1271, %v1273
        %v1461 = vunpack.c.l.s4 1983009808
        %v1462 = vunpack.c.0.s8 %v1461
        %v1463 = vlaneseq
        %v1464 = vshrl.u32 %v1463, 7
        %v1465 = vsub.s32 %v1462, %v1464
        %v1466 = vrot.slane %v1458, %v1465
        %v1468 = vunpack.c.l.s4 1983009808
        %v1469 = vunpack.c.0.s8 %v1468
        %v1470 = vlaneseq
        %v1471 = vshrl.u32 %v1470, 7
        %v1472 = vsub.s32 %v1469, %v1471
        %v1473 = vrot.slane %v1459, %v1472
        %v1474 = vcombine.low %v1418, %v1434
        %v1475 = vcombine.high %v1418, %v1434
        %v1477 = vunpack.c.l.s4 1934713408
        %v1478 = vunpack.c.0.s8 %v1477
        %v1479 = vlaneseq
        %v1480 = vshrl.u32 %v1479, 7
        %v1481 = vsub.s32 %v1478, %v1480
        %v1482 = vrot.slane %v1474, %v1481
        %v1484 = vunpack.c.l.s4 1934713408
        %v1485 = vunpack.c.0.s8 %v1484
        %v1486 = vlaneseq
        %v1487 = vshrl.u32 %v1486, 7
        %v1488 = vsub.s32 %v1485, %v1487
        %v1489 = vrot.slane %v1475, %v1488
        %v1490 = vcombine.low %v1425, %v1441
        %v1491 = vcombine.high %v1425, %v1441
        %v1493 = vunpack.c.l.s4 1934713408
        %v1494 = vunpack.c.0.s8 %v1493
        %v1495 = vlaneseq
        %v1496 = vshrl.u32 %v1495, 7
        %v1497 = vsub.s32 %v1494, %v1496
        %v1498 = vrot.slane %v1490, %v1497
        %v1500 = vunpack.c.l.s4 1934713408
        %v1501 = vunpack.c.0.s8 %v1500
        %v1502 = vlaneseq
        %v1503 = vshrl.u32 %v1502, 7
        %v1504 = vsub.s32 %v1501, %v1503
        %v1505 = vrot.slane %v1491, %v1504
        %v1506 = vcombine.low %v1450, %v1466
        %v1507 = vcombine.high %v1450, %v1466
        %v1509 = vunpack.c.l.s4 1934713408
        %v1510 = vunpack.c.0.s8 %v1509
        %v1511 = vlaneseq
        %v1512 = vshrl.u32 %v1511, 7
        %v1513 = vsub.s32 %v1510, %v1512
        %v1514 = vrot.slane %v1506, %v1513
        %v1516 = vunpack.c.l.s4 1934713408
        %v1517 = vunpack.c.0.s8 %v1516
        %v1518 = vlaneseq
        %v1519 = vshrl.u32 %v1518, 7
        %v1520 = vsub.s32 %v1517, %v1519
        %v1521 = vrot.slane %v1507, %v1520
        %v1522 = vcombine.low %v1457, %v1473
        %v1523 = vcombine.high %v1457, %v1473
        %v1525 = vunpack.c.l.s4 1934713408
        %v1526 = vunpack.c.0.s8 %v1525
        %v1527 = vlaneseq
        %v1528 = vshrl.u32 %v1527, 7
        %v1529 = vsub.s32 %v1526, %v1528
        %v1530 = vrot.slane %v1522, %v1529
        %v1532 = vunpack.c.l.s4 1934713408
        %v1533 = vunpack.c.0.s8 %v1532
        %v1534 = vlaneseq
        %v1535 = vshrl.u32 %v1534, 7
        %v1536 = vsub.s32 %v1533, %v1535
        %v1537 = vrot.slane %v1523, %v1536
        %v1538 = vcombine.low %v1482, %v1514
        %v1539 = vcombine.high %v1482, %v1514
        %v1540 = vcombine.low %v1489, %v1521
        %v1541 = vcombine.high %v1489, %v1521
        %v1542 = vcombine.low %v1498, %v1530
        %v1543 = vcombine.high %v1498, %v1530
        %v1544 = vcombine.low %v1505, %v1537
        %v1545 = vcombine.high %v1505, %v1537
        %v1546 = vcombine.low %v1402, %v1404
        %v1547 = vcombine.high %v1402, %v1404
        %v1549 = vunpack.c.l.s4 1983009808
        %v1550 = vunpack.c.0.s8 %v1549
        %v1551 = vlaneseq
        %v1552 = vshrl.u32 %v1551, 7
        %v1553 = vsub.s32 %v1550, %v1552
        %v1554 = vrot.slane %v1546, %v1553
        %v1556 = vunpack.c.l.s4 1983009808
        %v1557 = vunpack.c.0.s8 %v1556
        %v1558 = vlaneseq
        %v1559 = vshrl.u32 %v1558, 7
        %v1560 = vsub.s32 %v1557, %v1559
        %v1561 = vrot.slane %v1547, %v1560
        %v1562 = vcombine.low %v1403, %v1405
        %v1563 = vcombine.high %v1403, %v1405
        %v1565 = vunpack.c.l.s4 1983009808
        %v1566 = vunpack.c.0.s8 %v1565
        %v1567 = vlaneseq
        %v1568 = vshrl.u32 %v1567, 7
        %v1569 = vsub.s32 %v1566, %v1568
        %v1570 = vrot.slane %v1562, %v1569
        %v1572 = vunpack.c.l.s4 1983009808
        %v1573 = vunpack.c.0.s8 %v1572
        %v1574 = vlaneseq
        %v1575 = vshrl.u32 %v1574, 7
        %v1576 = vsub.s32 %v1573, %v1575
        %v1577 = vrot.slane %v1563, %v1576
        %v1578 = vcombine.low %v1406, %v1408
        %v1579 = vcombine.high %v1406, %v1408
        %v1581 = vunpack.c.l.s4 1983009808
        %v1582 = vunpack.c.0.s8 %v1581
        %v1583 = vlaneseq
        %v1584 = vshrl.u32 %v1583, 7
        %v1585 = vsub.s32 %v1582, %v1584
        %v1586 = vrot.slane %v1578, %v1585
        %v1588 = vunpack.c.l.s4 1983009808
        %v1589 = vunpack.c.0.s8 %v1588
        %v1590 = vlaneseq
        %v1591 = vshrl.u32 %v1590, 7
        %v1592 = vsub.s32 %v1589, %v1591
        %v1593 = vrot.slane %v1579, %v1592
        %v1594 = vcombine.low %v1407, %v1409
        %v1595 = vcombine.high %v1407, %v1409
        %v1597 = vunpack.c.l.s4 1983009808
        %v1598 = vunpack.c.0.s8 %v1597
        %v1599 = vlaneseq
        %v1600 = vshrl.u32 %v1599, 7
        %v1601 = vsub.s32 %v1598, %v1600
        %v1602 = vrot.slane %v1594, %v1601
        %v1604 = vunpack.c.l.s4 1983009808
        %v1605 = vunpack.c.0.s8 %v1604
        %v1606 = vlaneseq
        %v1607 = vshrl.u32 %v1606, 7
        %v1608 = vsub.s32 %v1605, %v1607
        %v1609 = vrot.slane %v1595, %v1608
        %v1610 = vcombine.low %v1554, %v1570
        %v1611 = vcombine.high %v1554, %v1570
        %v1613 = vunpack.c.l.s4 1934713408
        %v1614 = vunpack.c.0.s8 %v1613
        %v1615 = vlaneseq
        %v1616 = vshrl.u32 %v1615, 7
        %v1617 = vsub.s32 %v1614, %v1616
        %v1618 = vrot.slane %v1610, %v1617
        %v1620 = vunpack.c.l.s4 1934713408
        %v1621 = vunpack.c.0.s8 %v1620
        %v1622 = vlaneseq
        %v1623 = vshrl.u32 %v1622, 7
        %v1624 = vsub.s32 %v1621, %v1623
        %v1625 = vrot.slane %v1611, %v1624
        %v1626 = vcombine.low %v1561, %v1577
        %v1627 = vcombine.high %v1561, %v1577
        %v1629 = vunpack.c.l.s4 1934713408
        %v1630 = vunpack.c.0.s8 %v1629
        %v1631 = vlaneseq
        %v1632 = vshrl.u32 %v1631, 7
        %v1633 = vsub.s32 %v1630, %v1632
        %v1634 = vrot.slane %v1626, %v1633
        %v1636 = vunpack.c.l.s4 1934713408
        %v1637 = vunpack.c.0.s8 %v1636
        %v1638 = vlaneseq
        %v1639 = vshrl.u32 %v1638, 7
        %v1640 = vsub.s32 %v1637, %v1639
        %v1641 = vrot.slane %v1627, %v1640
        %v1642 = vcombine.low %v1586, %v1602
        %v1643 = vcombine.high %v1586, %v1602
        %v1645 = vunpack.c.l.s4 1934713408
        %v1646 = vunpack.c.0.s8 %v1645
        %v1647 = vlaneseq
        %v1648 = vshrl.u32 %v1647, 7
        %v1649 = vsub.s32 %v1646, %v1648
        %v1650 = vrot.slane %v1642, %v1649
        %v1652 = vunpack.c.l.s4 1934713408
        %v1653 = vunpack.c.0.s8 %v1652
        %v1654 = vlaneseq
        %v1655 = vshrl.u32 %v1654, 7
        %v1656 = vsub.s32 %v1653, %v1655
        %v1657 = vrot.slane %v1643, %v1656
        %v1658 = vcombine.low %v1593, %v1609
        %v1659 = vcombine.high %v1593, %v1609
        %v1661 = vunpack.c.l.s4 1934713408
        %v1662 = vunpack.c.0.s8 %v1661
        %v1663 = vlaneseq
        %v1664 = vshrl.u32 %v1663, 7
        %v1665 = vsub.s32 %v1662, %v1664
        %v1666 = vrot.slane %v1658, %v1665
        %v1668 = vunpack.c.l.s4 1934713408
        %v1669 = vunpack.c.0.s8 %v1668
        %v1670 = vlaneseq
        %v1671 = vshrl.u32 %v1670, 7
        %v1672 = vsub.s32 %v1669, %v1671
        %v1673 = vrot.slane %v1659, %v1672
        %v1674 = vcombine.low %v1618, %v1650
        %v1675 = vcombine.high %v1618, %v1650
        %v1676 = vcombine.low %v1625, %v1657
        %v1677 = vcombine.high %v1625, %v1657
        %v1678 = vcombine.low %v1634, %v1666
        %v1679 = vcombine.high %v1634, %v1666
        %v1680 = vcombine.low %v1641, %v1673
        %v1681 = vcombine.high %v1641, %v1673
        %v1682 = vcombine.low %v1538, %v1540
        %v1683 = vcombine.high %v1538, %v1540
        %v1685 = vunpack.c.l.s4 1983009808
        %v1686 = vunpack.c.0.s8 %v1685
        %v1687 = vlaneseq
        %v1688 = vshrl.u32 %v1687, 7
        %v1689 = vsub.s32 %v1686, %v1688
        %v1690 = vrot.slane %v1682, %v1689
        %v1692 = vunpack.c.l.s4 1983009808
        %v1693 = vunpack.c.0.s8 %v1692
        %v1694 = vlaneseq
        %v1695 = vshrl.u32 %v1694, 7
        %v1696 = vsub.s32 %v1693, %v1695
        %v1697 = vrot.slane %v1683, %v1696
        %v1698 = vcombine.low %v1539, %v1541
        %v1699 = vcombine.high %v1539, %v1541
        %v1701 = vunpack.c.l.s4 1983009808
        %v1702 = vunpack.c.0.s8 %v1701
        %v1703 = vlaneseq
        %v1704 = vshrl.u32 %v1703, 7
        %v1705 = vsub.s32 %v1702, %v1704
        %v1706 = vrot.slane %v1698, %v1705
        %v1708 = vunpack.c.l.s4 1983009808
        %v1709 = vunpack.c.0.s8 %v1708
        %v1710 = vlaneseq
        %v1711 = vshrl.u32 %v1710, 7
        %v1712 = vsub.s32 %v1709, %v1711
        %v1713 = vrot.slane %v1699, %v1712
        %v1714 = vcombine.low %v1542, %v1544
        %v1715 = vcombine.high %v1542, %v1544
        %v1717 = vunpack.c.l.s4 1983009808
        %v1718 = vunpack.c.0.s8 %v1717
        %v1719 = vlaneseq
        %v1720 = vshrl.u32 %v1719, 7
        %v1721 = vsub.s32 %v1718, %v1720
        %v1722 = vrot.slane %v1714, %v1721
        %v1724 = vunpack.c.l.s4 1983009808
        %v1725 = vunpack.c.0.s8 %v1724
        %v1726 = vlaneseq
        %v1727 = vshrl.u32 %v1726, 7
        %v1728 = vsub.s32 %v1725, %v1727
        %v1729 = vrot.slane %v1715, %v1728
        %v1730 = vcombine.low %v1543, %v1545
        %v1731 = vcombine.high %v1543, %v1545
        %v1733 = vunpack.c.l.s4 1983009808
        %v1734 = vunpack.c.0.s8 %v1733
        %v1735 = vlaneseq
        %v1736 = vshrl.u32 %v1735, 7
        %v1737 = vsub.s32 %v1734, %v1736
        %v1738 = vrot.slane %v1730, %v1737
        %v1740 = vunpack.c.l.s4 1983009808
        %v1741 = vunpack.c.0.s8 %v1740
        %v1742 = vlaneseq
        %v1743 = vshrl.u32 %v1742, 7
        %v1744 = vsub.s32 %v1741, %v1743
        %v1745 = vrot.slane %v1731, %v1744
        %v1746 = vcombine.low %v1690, %v1706
        %v1747 = vcombine.high %v1690, %v1706
        %v1749 = vunpack.c.l.s4 1934713408
        %v1750 = vunpack.c.0.s8 %v1749
        %v1751 = vlaneseq
        %v1752 = vshrl.u32 %v1751, 7
        %v1753 = vsub.s32 %v1750, %v1752
        %v1754 = vrot.slane %v1746, %v1753
        %v1756 = vunpack.c.l.s4 1934713408
        %v1757 = vunpack.c.0.s8 %v1756
        %v1758 = vlaneseq
        %v1759 = vshrl.u32 %v1758, 7
        %v1760 = vsub.s32 %v1757, %v1759
        %v1761 = vrot.slane %v1747, %v1760
        %v1762 = vcombine.low %v1697, %v1713
        %v1763 = vcombine.high %v1697, %v1713
        %v1765 = vunpack.c.l.s4 1934713408
        %v1766 = vunpack.c.0.s8 %v1765
        %v1767 = vlaneseq
        %v1768 = vshrl.u32 %v1767, 7
        %v1769 = vsub.s32 %v1766, %v1768
        %v1770 = vrot.slane %v1762, %v1769
        %v1772 = vunpack.c.l.s4 1934713408
        %v1773 = vunpack.c.0.s8 %v1772
        %v1774 = vlaneseq
        %v1775 = vshrl.u32 %v1774, 7
        %v1776 = vsub.s32 %v1773, %v1775
        %v1777 = vrot.slane %v1763, %v1776
        %v1778 = vcombine.low %v1722, %v1738
        %v1779 = vcombine.high %v1722, %v1738
        %v1781 = vunpack.c.l.s4 1934713408
        %v1782 = vunpack.c.0.s8 %v1781
        %v1783 = vlaneseq
        %v1784 = vshrl.u32 %v1783, 7
        %v1785 = vsub.s32 %v1782, %v1784
        %v1786 = vrot.slane %v1778, %v1785
        %v1788 = vunpack.c.l.s4 1934713408
        %v1789 = vunpack.c.0.s8 %v1788
        %v1790 = vlaneseq
        %v1791 = vshrl.u32 %v1790, 7
        %v1792 = vsub.s32 %v1789, %v1791
        %v1793 = vrot.slane %v1779, %v1792
        %v1794 = vcombine.low %v1729, %v1745
        %v1795 = vcombine.high %v1729, %v1745
        %v1797 = vunpack.c.l.s4 1934713408
        %v1798 = vunpack.c.0.s8 %v1797
        %v1799 = vlaneseq
        %v1800 = vshrl.u32 %v1799, 7
        %v1801 = vsub.s32 %v1798, %v1800
        %v1802 = vrot.slane %v1794, %v1801
        %v1804 = vunpack.c.l.s4 1934713408
        %v1805 = vunpack.c.0.s8 %v1804
        %v1806 = vlaneseq
        %v1807 = vshrl.u32 %v1806, 7
        %v1808 = vsub.s32 %v1805, %v1807
        %v1809 = vrot.slane %v1795, %v1808
        %v1810 = vcombine.low %v1754, %v1786
        %v1811 = vcombine.high %v1754, %v1786
        %v1812 = vcombine.low %v1761, %v1793
        %v1813 = vcombine.high %v1761, %v1793
        %v1814 = vcombine.low %v1770, %v1802
        %v1815 = vcombine.high %v1770, %v1802
        %v1816 = vcombine.low %v1777, %v1809
        %v1817 = vcombine.high %v1777, %v1809
        %v1818 = vcombine.low %v1674, %v1676
        %v1819 = vcombine.high %v1674, %v1676
        %v1821 = vunpack.c.l.s4 1983009808
        %v1822 = vunpack.c.0.s8 %v1821
        %v1823 = vlaneseq
        %v1824 = vshrl.u32 %v1823, 7
        %v1825 = vsub.s32 %v1822, %v1824
        %v1826 = vrot.slane %v1818, %v1825
        %v1828 = vunpack.c.l.s4 1983009808
        %v1829 = vunpack.c.0.s8 %v1828
        %v1830 = vlaneseq
        %v1831 = vshrl.u32 %v1830, 7
        %v1832 = vsub.s32 %v1829, %v1831
        %v1833 = vrot.slane %v1819, %v1832
        %v1834 = vcombine.low %v1675, %v1677
        %v1835 = vcombine.high %v1675, %v1677
        %v1837 = vunpack.c.l.s4 1983009808
        %v1838 = vunpack.c.0.s8 %v1837
        %v1839 = vlaneseq
        %v1840 = vshrl.u32 %v1839, 7
        %v1841 = vsub.s32 %v1838, %v1840
        %v1842 = vrot.slane %v1834, %v1841
        %v1844 = vunpack.c.l.s4 1983009808
        %v1845 = vunpack.c.0.s8 %v1844
        %v1846 = vlaneseq
        %v1847 = vshrl.u32 %v1846, 7
        %v1848 = vsub.s32 %v1845, %v1847
        %v1849 = vrot.slane %v1835, %v1848
        %v1850 = vcombine.low %v1678, %v1680
        %v1851 = vcombine.high %v1678, %v1680
        %v1853 = vunpack.c.l.s4 1983009808
        %v1854 = vunpack.c.0.s8 %v1853
        %v1855 = vlaneseq
        %v1856 = vshrl.u32 %v1855, 7
        %v1857 = vsub.s32 %v1854, %v1856
        %v1858 = vrot.slane %v1850, %v1857
        %v1860 = vunpack.c.l.s4 1983009808
        %v1861 = vunpack.c.0.s8 %v1860
        %v1862 = vlaneseq
        %v1863 = vshrl.u32 %v1862, 7
        %v1864 = vsub.s32 %v1861, %v1863
        %v1865 = vrot.slane %v1851, %v1864
        %v1866 = vcombine.low %v1679, %v1681
        %v1867 = vcombine.high %v1679, %v1681
        %v1869 = vunpack.c.l.s4 1983009808
        %v1870 = vunpack.c.0.s8 %v1869
        %v1871 = vlaneseq
        %v1872 = vshrl.u32 %v1871, 7
        %v1873 = vsub.s32 %v1870, %v1872
        %v1874 = vrot.slane %v1866, %v1873
        %v1876 = vunpack.c.l.s4 1983009808
        %v1877 = vunpack.c.0.s8 %v1876
        %v1878 = vlaneseq
        %v1879 = vshrl.u32 %v1878, 7
        %v1880 = vsub.s32 %v1877, %v1879
        %v1881 = vrot.slane %v1867, %v1880
        %v1882 = vcombine.low %v1826, %v1842
        %v1883 = vcombine.high %v1826, %v1842
        %v1885 = vunpack.c.l.s4 1934713408
        %v1886 = vunpack.c.0.s8 %v1885
        %v1887 = vlaneseq
        %v1888 = vshrl.u32 %v1887, 7
        %v1889 = vsub.s32 %v1886, %v1888
        %v1890 = vrot.slane %v1882, %v1889
        %v1892 = vunpack.c.l.s4 1934713408
        %v1893 = vunpack.c.0.s8 %v1892
        %v1894 = vlaneseq
        %v1895 = vshrl.u32 %v1894, 7
        %v1896 = vsub.s32 %v1893, %v1895
        %v1897 = vrot.slane %v1883, %v1896
        %v1898 = vcombine.low %v1833, %v1849
        %v1899 = vcombine.high %v1833, %v1849
        %v1901 = vunpack.c.l.s4 1934713408
        %v1902 = vunpack.c.0.s8 %v1901
        %v1903 = vlaneseq
        %v1904 = vshrl.u32 %v1903, 7
        %v1905 = vsub.s32 %v1902, %v1904
        %v1906 = vrot.slane %v1898, %v1905
        %v1908 = vunpack.c.l.s4 1934713408
        %v1909 = vunpack.c.0.s8 %v1908
        %v1910 = vlaneseq
        %v1911 = vshrl.u32 %v1910, 7
        %v1912 = vsub.s32 %v1909, %v1911
        %v1913 = vrot.slane %v1899, %v1912
        %v1914 = vcombine.low %v1858, %v1874
        %v1915 = vcombine.high %v1858, %v1874
        %v1917 = vunpack.c.l.s4 1934713408
        %v1918 = vunpack.c.0.s8 %v1917
        %v1919 = vlaneseq
        %v1920 = vshrl.u32 %v1919, 7
        %v1921 = vsub.s32 %v1918, %v1920
        %v1922 = vrot.slane %v1914, %v1921
        %v1924 = vunpack.c.l.s4 1934713408
        %v1925 = vunpack.c.0.s8 %v1924
        %v1926 = vlaneseq
        %v1927 = vshrl.u32 %v1926, 7
        %v1928 = vsub.s32 %v1925, %v1927
        %v1929 = vrot.slane %v1915, %v1928
        %v1930 = vcombine.low %v1865, %v1881
        %v1931 = vcombine.high %v1865, %v1881
        %v1933 = vunpack.c.l.s4 1934713408
        %v1934 = vunpack.c.0.s8 %v1933
        %v1935 = vlaneseq
        %v1936 = vshrl.u32 %v1935, 7
        %v1937 = vsub.s32 %v1934, %v1936
        %v1938 = vrot.slane %v1930, %v1937
        %v1940 = vunpack.c.l.s4 1934713408
        %v1941 = vunpack.c.0.s8 %v1940
        %v1942 = vlaneseq
        %v1943 = vshrl.u32 %v1942, 7
        %v1944 = vsub.s32 %v1941, %v1943
        %v1945 = vrot.slane %v1931, %v1944
        %v1946 = vcombine.low %v1890, %v1922
        %v1947 = vcombine.high %v1890, %v1922
        %v1948 = vcombine.low %v1897, %v1929
        %v1949 = vcombine.high %v1897, %v1929
        %v1950 = vcombine.low %v1906, %v1938
        %v1951 = vcombine.high %v1906, %v1938
        %v1952 = vcombine.low %v1913, %v1945
        %v1953 = vcombine.high %v1913, %v1945
        %v1955 = vsel %vm538, %v670, 0
        %v1958 = vsel %vm538, %v671, 0
        %1960 = vmatprep.subr.mxu0 0.0
        %1961 = vmatpush1.msra.mxu0 0.0
        %1962 = vmatprep.subr.mxu0 0.0
        %1963 = vmatpush1.msra.mxu0 0.0
        %1964 = vmatprep.subr.mxu0 0.0
        %1965 = vmatpush1.msra.mxu0 0.0
        %1966 = vmatprep.subr.mxu0 0.0
        %1967 = vmatpush1.msra.mxu0 0.0
        %1968 = vmatprep.subr.mxu0 0.0
        %1969 = vmatpush1.msra.mxu0 0.0
        %1970 = vmatprep.subr.mxu0 0.0
        %1971 = vmatpush1.msra.mxu0 0.0
        %1972 = vmatprep.subr.mxu0 0.0
        %1973 = vmatpush1.msra.mxu0 0.0
        %1974 = vmatprep.subr.mxu0 0.0
        %1975 = vmatpush1.msra.mxu0 0.0
        %1976 = vmatprep.subr.mxu0 0.0
        %1977 = vmatpush1.msra.mxu0 0.0
        %1978 = vmatprep.subr.mxu0 0.0
        %1979 = vmatpush1.msra.mxu0 0.0
        %1980 = vmatprep.subr.mxu0 0.0
        %1981 = vmatpush1.msra.mxu0 0.0
        %1982 = vmatprep.subr.mxu0 0.0
        %1983 = vmatpush1.msra.mxu0 0.0
        %1984 = vmatprep.subr.mxu0 0.0
        %1985 = vmatpush1.msra.mxu0 0.0
        %1986 = vmatprep.subr.mxu0 0.0
        %1987 = vmatpush1.msra.mxu0 0.0
        %1988 = vmatprep.subr.mxu0 0.0
        %1989 = vmatpush1.msra.mxu0 0.0
        %1990 = vmatprep.subr.mxu0 %v1811
        %1991 = vmatpush1.msra.mxu0 %v1810
        %1992 = vmatprep.subr.mxu0 0.0
        %1993 = vmatpush2.msra.mxu0 0.0
        %1994 = vmatprep.subr.mxu0 0.0
        %1995 = vmatpush2.msra.mxu0 0.0
        %1996 = vmatprep.subr.mxu0 0.0
        %1997 = vmatpush2.msra.mxu0 0.0
        %1998 = vmatprep.subr.mxu0 0.0
        %1999 = vmatpush2.msra.mxu0 0.0
        %2000 = vmatprep.subr.mxu0 0.0
        %2001 = vmatpush2.msra.mxu0 0.0
        %2002 = vmatprep.subr.mxu0 0.0
        %2003 = vmatpush2.msra.mxu0 0.0
        %2004 = vmatprep.subr.mxu0 0.0
        %2005 = vmatpush2.msra.mxu0 0.0
        %2006 = vmatprep.subr.mxu0 0.0
        %2007 = vmatpush2.msra.mxu0 0.0
        %2008 = vmatprep.subr.mxu0 0.0
        %2009 = vmatpush2.msra.mxu0 0.0
        %2010 = vmatprep.subr.mxu0 0.0
        %2011 = vmatpush2.msra.mxu0 0.0
        %2012 = vmatprep.subr.mxu0 0.0
        %2013 = vmatpush2.msra.mxu0 0.0
        %2014 = vmatprep.subr.mxu0 0.0
        %2015 = vmatpush2.msra.mxu0 0.0
        %2016 = vmatprep.subr.mxu0 0.0
        %2017 = vmatpush2.msra.mxu0 0.0
        %2018 = vmatprep.subr.mxu0 0.0
        %2019 = vmatpush2.msra.mxu0 0.0
        %2020 = vmatprep.subr.mxu0 0.0
        %2021 = vmatpush2.msra.mxu0 0.0
        %2022 = vmatprep.subr.mxu0 0.0
        %2023 = vmatpush2.msra.mxu0 0.0
        %2024 = vmatprep.mubr.f32.mxu0 0.0
        %2025 = vmatmul.mubr.f32.gmra.mxu0 %v1955
        %v2026 = vpop.f32.mrf.mxu0
        %v2027 = vadd.f32 0.0, %v2026
        %v2028 = vpop.f32.mrf.mxu0
        %v2029 = vadd.f32 0.0, %v2028
        %2030 = vmatprep.mubr.f32.mxu0 0.0
        %2031 = vmatmul.mubr.f32.gmra.mxu0 %v1958
        %v2032 = vpop.f32.mrf.mxu0
        %v2033 = vadd.f32 0.0, %v2032
        %v2034 = vpop.f32.mrf.mxu0
        %v2035 = vadd.f32 0.0, %v2034
        %2036 = vdwg.mxu0
        %2037 = vmatprep.subr.mxu0 0.0
        %2038 = vmatpush1.msra.mxu0 0.0
        %2039 = vmatprep.subr.mxu0 0.0
        %2040 = vmatpush1.msra.mxu0 0.0
        %2041 = vmatprep.subr.mxu0 0.0
        %2042 = vmatpush1.msra.mxu0 0.0
        %2043 = vmatprep.subr.mxu0 0.0
        %2044 = vmatpush1.msra.mxu0 0.0
        %2045 = vmatprep.subr.mxu0 0.0
        %2046 = vmatpush1.msra.mxu0 0.0
        %2047 = vmatprep.subr.mxu0 0.0
        %2048 = vmatpush1.msra.mxu0 0.0
        %2049 = vmatprep.subr.mxu0 0.0
        %2050 = vmatpush1.msra.mxu0 0.0
        %2051 = vmatprep.subr.mxu0 0.0
        %2052 = vmatpush1.msra.mxu0 0.0
        %2053 = vmatprep.subr.mxu0 0.0
        %2054 = vmatpush1.msra.mxu0 0.0
        %2055 = vmatprep.subr.mxu0 0.0
        %2056 = vmatpush1.msra.mxu0 0.0
        %2057 = vmatprep.subr.mxu0 0.0
        %2058 = vmatpush1.msra.mxu0 0.0
        %2059 = vmatprep.subr.mxu0 0.0
        %2060 = vmatpush1.msra.mxu0 0.0
        %2061 = vmatprep.subr.mxu0 0.0
        %2062 = vmatpush1.msra.mxu0 0.0
        %2063 = vmatprep.subr.mxu0 0.0
        %2064 = vmatpush1.msra.mxu0 0.0
        %2065 = vmatprep.subr.mxu0 0.0
        %2066 = vmatpush1.msra.mxu0 0.0
        %2067 = vmatprep.subr.mxu0 %v1813
        %2068 = vmatpush1.msra.mxu0 %v1812
        %2069 = vmatprep.subr.mxu0 0.0
        %2070 = vmatpush2.msra.mxu0 0.0
        %2071 = vmatprep.subr.mxu0 0.0
        %2072 = vmatpush2.msra.mxu0 0.0
        %2073 = vmatprep.subr.mxu0 0.0
        %2074 = vmatpush2.msra.mxu0 0.0
        %2075 = vmatprep.subr.mxu0 0.0
        %2076 = vmatpush2.msra.mxu0 0.0
        %2077 = vmatprep.subr.mxu0 0.0
        %2078 = vmatpush2.msra.mxu0 0.0
        %2079 = vmatprep.subr.mxu0 0.0
        %2080 = vmatpush2.msra.mxu0 0.0
        %2081 = vmatprep.subr.mxu0 0.0
        %2082 = vmatpush2.msra.mxu0 0.0
        %2083 = vmatprep.subr.mxu0 0.0
        %2084 = vmatpush2.msra.mxu0 0.0
        %2085 = vmatprep.subr.mxu0 0.0
        %2086 = vmatpush2.msra.mxu0 0.0
        %2087 = vmatprep.subr.mxu0 0.0
        %2088 = vmatpush2.msra.mxu0 0.0
        %2089 = vmatprep.subr.mxu0 0.0
        %2090 = vmatpush2.msra.mxu0 0.0
        %2091 = vmatprep.subr.mxu0 0.0
        %2092 = vmatpush2.msra.mxu0 0.0
        %2093 = vmatprep.subr.mxu0 0.0
        %2094 = vmatpush2.msra.mxu0 0.0
        %2095 = vmatprep.subr.mxu0 0.0
        %2096 = vmatpush2.msra.mxu0 0.0
        %2097 = vmatprep.subr.mxu0 0.0
        %2098 = vmatpush2.msra.mxu0 0.0
        %2099 = vmatprep.subr.mxu0 0.0
        %2100 = vmatpush2.msra.mxu0 0.0
        %2101 = vmatprep.mubr.f32.mxu0 0.0
        %2102 = vmatmul.mubr.f32.gmra.mxu0 %v1955
        %v2103 = vpop.f32.mrf.mxu0
        %v2104 = vadd.f32 0.0, %v2103
        %v2105 = vpop.f32.mrf.mxu0
        %v2106 = vadd.f32 0.0, %v2105
        %2107 = vmatprep.mubr.f32.mxu0 0.0
        %2108 = vmatmul.mubr.f32.gmra.mxu0 %v1958
        %v2109 = vpop.f32.mrf.mxu0
        %v2110 = vadd.f32 0.0, %v2109
        %v2111 = vpop.f32.mrf.mxu0
        %v2112 = vadd.f32 0.0, %v2111
        %2113 = vdwg.mxu0
        %2114 = vmatprep.subr.mxu0 0.0
        %2115 = vmatpush1.msra.mxu0 0.0
        %2116 = vmatprep.subr.mxu0 0.0
        %2117 = vmatpush1.msra.mxu0 0.0
        %2118 = vmatprep.subr.mxu0 0.0
        %2119 = vmatpush1.msra.mxu0 0.0
        %2120 = vmatprep.subr.mxu0 0.0
        %2121 = vmatpush1.msra.mxu0 0.0
        %2122 = vmatprep.subr.mxu0 0.0
        %2123 = vmatpush1.msra.mxu0 0.0
        %2124 = vmatprep.subr.mxu0 0.0
        %2125 = vmatpush1.msra.mxu0 0.0
        %2126 = vmatprep.subr.mxu0 0.0
        %2127 = vmatpush1.msra.mxu0 0.0
        %2128 = vmatprep.subr.mxu0 0.0
        %2129 = vmatpush1.msra.mxu0 0.0
        %2130 = vmatprep.subr.mxu0 0.0
        %2131 = vmatpush1.msra.mxu0 0.0
        %2132 = vmatprep.subr.mxu0 0.0
        %2133 = vmatpush1.msra.mxu0 0.0
        %2134 = vmatprep.subr.mxu0 0.0
        %2135 = vmatpush1.msra.mxu0 0.0
        %2136 = vmatprep.subr.mxu0 0.0
        %2137 = vmatpush1.msra.mxu0 0.0
        %2138 = vmatprep.subr.mxu0 0.0
        %2139 = vmatpush1.msra.mxu0 0.0
        %2140 = vmatprep.subr.mxu0 0.0
        %2141 = vmatpush1.msra.mxu0 0.0
        %2142 = vmatprep.subr.mxu0 0.0
        %2143 = vmatpush1.msra.mxu0 0.0
        %2144 = vmatprep.subr.mxu0 %v1815
        %2145 = vmatpush1.msra.mxu0 %v1814
        %2146 = vmatprep.subr.mxu0 0.0
        %2147 = vmatpush2.msra.mxu0 0.0
        %2148 = vmatprep.subr.mxu0 0.0
        %2149 = vmatpush2.msra.mxu0 0.0
        %2150 = vmatprep.subr.mxu0 0.0
        %2151 = vmatpush2.msra.mxu0 0.0
        %2152 = vmatprep.subr.mxu0 0.0
        %2153 = vmatpush2.msra.mxu0 0.0
        %2154 = vmatprep.subr.mxu0 0.0
        %2155 = vmatpush2.msra.mxu0 0.0
        %2156 = vmatprep.subr.mxu0 0.0
        %2157 = vmatpush2.msra.mxu0 0.0
        %2158 = vmatprep.subr.mxu0 0.0
        %2159 = vmatpush2.msra.mxu0 0.0
        %2160 = vmatprep.subr.mxu0 0.0
        %2161 = vmatpush2.msra.mxu0 0.0
        %2162 = vmatprep.subr.mxu0 0.0
        %2163 = vmatpush2.msra.mxu0 0.0
        %2164 = vmatprep.subr.mxu0 0.0
        %2165 = vmatpush2.msra.mxu0 0.0
        %2166 = vmatprep.subr.mxu0 0.0
        %2167 = vmatpush2.msra.mxu0 0.0
        %2168 = vmatprep.subr.mxu0 0.0
        %2169 = vmatpush2.msra.mxu0 0.0
        %2170 = vmatprep.subr.mxu0 0.0
        %2171 = vmatpush2.msra.mxu0 0.0
        %2172 = vmatprep.subr.mxu0 0.0
        %2173 = vmatpush2.msra.mxu0 0.0
        %2174 = vmatprep.subr.mxu0 0.0
        %2175 = vmatpush2.msra.mxu0 0.0
        %2176 = vmatprep.subr.mxu0 0.0
        %2177 = vmatpush2.msra.mxu0 0.0
        %2178 = vmatprep.mubr.f32.mxu0 0.0
        %2179 = vmatmul.mubr.f32.gmra.mxu0 %v1955
        %v2180 = vpop.f32.mrf.mxu0
        %v2181 = vadd.f32 0.0, %v2180
        %v2182 = vpop.f32.mrf.mxu0
        %v2183 = vadd.f32 0.0, %v2182
        %2184 = vmatprep.mubr.f32.mxu0 0.0
        %2185 = vmatmul.mubr.f32.gmra.mxu0 %v1958
        %v2186 = vpop.f32.mrf.mxu0
        %v2187 = vadd.f32 0.0, %v2186
        %v2188 = vpop.f32.mrf.mxu0
        %v2189 = vadd.f32 0.0, %v2188
        %2190 = vdwg.mxu0
        %2191 = vmatprep.subr.mxu0 0.0
        %2192 = vmatpush1.msra.mxu0 0.0
        %2193 = vmatprep.subr.mxu0 0.0
        %2194 = vmatpush1.msra.mxu0 0.0
        %2195 = vmatprep.subr.mxu0 0.0
        %2196 = vmatpush1.msra.mxu0 0.0
        %2197 = vmatprep.subr.mxu0 0.0
        %2198 = vmatpush1.msra.mxu0 0.0
        %2199 = vmatprep.subr.mxu0 0.0
        %2200 = vmatpush1.msra.mxu0 0.0
        %2201 = vmatprep.subr.mxu0 0.0
        %2202 = vmatpush1.msra.mxu0 0.0
        %2203 = vmatprep.subr.mxu0 0.0
        %2204 = vmatpush1.msra.mxu0 0.0
        %2205 = vmatprep.subr.mxu0 0.0
        %2206 = vmatpush1.msra.mxu0 0.0
        %2207 = vmatprep.subr.mxu0 0.0
        %2208 = vmatpush1.msra.mxu0 0.0
        %2209 = vmatprep.subr.mxu0 0.0
        %2210 = vmatpush1.msra.mxu0 0.0
        %2211 = vmatprep.subr.mxu0 0.0
        %2212 = vmatpush1.msra.mxu0 0.0
        %2213 = vmatprep.subr.mxu0 0.0
        %2214 = vmatpush1.msra.mxu0 0.0
        %2215 = vmatprep.subr.mxu0 0.0
        %2216 = vmatpush1.msra.mxu0 0.0
        %2217 = vmatprep.subr.mxu0 0.0
        %2218 = vmatpush1.msra.mxu0 0.0
        %2219 = vmatprep.subr.mxu0 0.0
        %2220 = vmatpush1.msra.mxu0 0.0
        %2221 = vmatprep.subr.mxu0 %v1817
        %2222 = vmatpush1.msra.mxu0 %v1816
        %2223 = vmatprep.subr.mxu0 0.0
        %2224 = vmatpush2.msra.mxu0 0.0
        %2225 = vmatprep.subr.mxu0 0.0
        %2226 = vmatpush2.msra.mxu0 0.0
        %2227 = vmatprep.subr.mxu0 0.0
        %2228 = vmatpush2.msra.mxu0 0.0
        %2229 = vmatprep.subr.mxu0 0.0
        %2230 = vmatpush2.msra.mxu0 0.0
        %2231 = vmatprep.subr.mxu0 0.0
        %2232 = vmatpush2.msra.mxu0 0.0
        %2233 = vmatprep.subr.mxu0 0.0
        %2234 = vmatpush2.msra.mxu0 0.0
        %2235 = vmatprep.subr.mxu0 0.0
        %2236 = vmatpush2.msra.mxu0 0.0
        %2237 = vmatprep.subr.mxu0 0.0
        %2238 = vmatpush2.msra.mxu0 0.0
        %2239 = vmatprep.subr.mxu0 0.0
        %2240 = vmatpush2.msra.mxu0 0.0
        %2241 = vmatprep.subr.mxu0 0.0
        %2242 = vmatpush2.msra.mxu0 0.0
        %2243 = vmatprep.subr.mxu0 0.0
        %2244 = vmatpush2.msra.mxu0 0.0
        %2245 = vmatprep.subr.mxu0 0.0
        %2246 = vmatpush2.msra.mxu0 0.0
        %2247 = vmatprep.subr.mxu0 0.0
        %2248 = vmatpush2.msra.mxu0 0.0
        %2249 = vmatprep.subr.mxu0 0.0
        %2250 = vmatpush2.msra.mxu0 0.0
        %2251 = vmatprep.subr.mxu0 0.0
        %2252 = vmatpush2.msra.mxu0 0.0
        %2253 = vmatprep.subr.mxu0 0.0
        %2254 = vmatpush2.msra.mxu0 0.0
        %2255 = vmatprep.mubr.f32.mxu0 0.0
        %2256 = vmatmul.mubr.f32.gmra.mxu0 %v1955
        %v2257 = vpop.f32.mrf.mxu0
        %v2258 = vadd.f32 0.0, %v2257
        %v2259 = vpop.f32.mrf.mxu0
        %v2260 = vadd.f32 0.0, %v2259
        %2261 = vmatprep.mubr.f32.mxu0 0.0
        %2262 = vmatmul.mubr.f32.gmra.mxu0 %v1958
        %v2263 = vpop.f32.mrf.mxu0
        %v2264 = vadd.f32 0.0, %v2263
        %v2265 = vpop.f32.mrf.mxu0
        %v2266 = vadd.f32 0.0, %v2265
        %2267 = vdwg.mxu0
        %2268 = vmatprep.subr.mxu0 0.0
        %2269 = vmatpush1.msra.mxu0 0.0
        %2270 = vmatprep.subr.mxu0 0.0
        %2271 = vmatpush1.msra.mxu0 0.0
        %2272 = vmatprep.subr.mxu0 0.0
        %2273 = vmatpush1.msra.mxu0 0.0
        %2274 = vmatprep.subr.mxu0 0.0
        %2275 = vmatpush1.msra.mxu0 0.0
        %2276 = vmatprep.subr.mxu0 0.0
        %2277 = vmatpush1.msra.mxu0 0.0
        %2278 = vmatprep.subr.mxu0 0.0
        %2279 = vmatpush1.msra.mxu0 0.0
        %2280 = vmatprep.subr.mxu0 0.0
        %2281 = vmatpush1.msra.mxu0 0.0
        %2282 = vmatprep.subr.mxu0 0.0
        %2283 = vmatpush1.msra.mxu0 0.0
        %2284 = vmatprep.subr.mxu0 0.0
        %2285 = vmatpush1.msra.mxu0 0.0
        %2286 = vmatprep.subr.mxu0 0.0
        %2287 = vmatpush1.msra.mxu0 0.0
        %2288 = vmatprep.subr.mxu0 0.0
        %2289 = vmatpush1.msra.mxu0 0.0
        %2290 = vmatprep.subr.mxu0 0.0
        %2291 = vmatpush1.msra.mxu0 0.0
        %2292 = vmatprep.subr.mxu0 0.0
        %2293 = vmatpush1.msra.mxu0 0.0
        %2294 = vmatprep.subr.mxu0 0.0
        %2295 = vmatpush1.msra.mxu0 0.0
        %2296 = vmatprep.subr.mxu0 0.0
        %2297 = vmatpush1.msra.mxu0 0.0
        %2298 = vmatprep.subr.mxu0 %v1947
        %2299 = vmatpush1.msra.mxu0 %v1946
        %2300 = vmatprep.subr.mxu0 0.0
        %2301 = vmatpush2.msra.mxu0 0.0
        %2302 = vmatprep.subr.mxu0 0.0
        %2303 = vmatpush2.msra.mxu0 0.0
        %2304 = vmatprep.subr.mxu0 0.0
        %2305 = vmatpush2.msra.mxu0 0.0
        %2306 = vmatprep.subr.mxu0 0.0
        %2307 = vmatpush2.msra.mxu0 0.0
        %2308 = vmatprep.subr.mxu0 0.0
        %2309 = vmatpush2.msra.mxu0 0.0
        %2310 = vmatprep.subr.mxu0 0.0
        %2311 = vmatpush2.msra.mxu0 0.0
        %2312 = vmatprep.subr.mxu0 0.0
        %2313 = vmatpush2.msra.mxu0 0.0
        %2314 = vmatprep.subr.mxu0 0.0
        %2315 = vmatpush2.msra.mxu0 0.0
        %2316 = vmatprep.subr.mxu0 0.0
        %2317 = vmatpush2.msra.mxu0 0.0
        %2318 = vmatprep.subr.mxu0 0.0
        %2319 = vmatpush2.msra.mxu0 0.0
        %2320 = vmatprep.subr.mxu0 0.0
        %2321 = vmatpush2.msra.mxu0 0.0
        %2322 = vmatprep.subr.mxu0 0.0
        %2323 = vmatpush2.msra.mxu0 0.0
        %2324 = vmatprep.subr.mxu0 0.0
        %2325 = vmatpush2.msra.mxu0 0.0
        %2326 = vmatprep.subr.mxu0 0.0
        %2327 = vmatpush2.msra.mxu0 0.0
        %2328 = vmatprep.subr.mxu0 0.0
        %2329 = vmatpush2.msra.mxu0 0.0
        %2330 = vmatprep.subr.mxu0 0.0
        %2331 = vmatpush2.msra.mxu0 0.0
        %2332 = vmatprep.mubr.f32.mxu0 0.0
        %2333 = vmatmul.mubr.f32.gmra.mxu0 %v1955
        %v2334 = vpop.f32.mrf.mxu0
        %v2335 = vadd.f32 0.0, %v2334
        %v2336 = vpop.f32.mrf.mxu0
        %v2337 = vadd.f32 0.0, %v2336
        %2338 = vmatprep.mubr.f32.mxu0 0.0
        %2339 = vmatmul.mubr.f32.gmra.mxu0 %v1958
        %v2340 = vpop.f32.mrf.mxu0
        %v2341 = vadd.f32 0.0, %v2340
        %v2342 = vpop.f32.mrf.mxu0
        %v2343 = vadd.f32 0.0, %v2342
        %2344 = vdwg.mxu0
        %2345 = vmatprep.subr.mxu0 0.0
        %2346 = vmatpush1.msra.mxu0 0.0
        %2347 = vmatprep.subr.mxu0 0.0
        %2348 = vmatpush1.msra.mxu0 0.0
        %2349 = vmatprep.subr.mxu0 0.0
        %2350 = vmatpush1.msra.mxu0 0.0
        %2351 = vmatprep.subr.mxu0 0.0
        %2352 = vmatpush1.msra.mxu0 0.0
        %2353 = vmatprep.subr.mxu0 0.0
        %2354 = vmatpush1.msra.mxu0 0.0
        %2355 = vmatprep.subr.mxu0 0.0
        %2356 = vmatpush1.msra.mxu0 0.0
        %2357 = vmatprep.subr.mxu0 0.0
        %2358 = vmatpush1.msra.mxu0 0.0
        %2359 = vmatprep.subr.mxu0 0.0
        %2360 = vmatpush1.msra.mxu0 0.0
        %2361 = vmatprep.subr.mxu0 0.0
        %2362 = vmatpush1.msra.mxu0 0.0
        %2363 = vmatprep.subr.mxu0 0.0
        %2364 = vmatpush1.msra.mxu0 0.0
        %2365 = vmatprep.subr.mxu0 0.0
        %2366 = vmatpush1.msra.mxu0 0.0
        %2367 = vmatprep.subr.mxu0 0.0
        %2368 = vmatpush1.msra.mxu0 0.0
        %2369 = vmatprep.subr.mxu0 0.0
        %2370 = vmatpush1.msra.mxu0 0.0
        %2371 = vmatprep.subr.mxu0 0.0
        %2372 = vmatpush1.msra.mxu0 0.0
        %2373 = vmatprep.subr.mxu0 0.0
        %2374 = vmatpush1.msra.mxu0 0.0
        %2375 = vmatprep.subr.mxu0 %v1949
        %2376 = vmatpush1.msra.mxu0 %v1948
        %2377 = vmatprep.subr.mxu0 0.0
        %2378 = vmatpush2.msra.mxu0 0.0
        %2379 = vmatprep.subr.mxu0 0.0
        %2380 = vmatpush2.msra.mxu0 0.0
        %2381 = vmatprep.subr.mxu0 0.0
        %2382 = vmatpush2.msra.mxu0 0.0
        %2383 = vmatprep.subr.mxu0 0.0
        %2384 = vmatpush2.msra.mxu0 0.0
        %2385 = vmatprep.subr.mxu0 0.0
        %2386 = vmatpush2.msra.mxu0 0.0
        %2387 = vmatprep.subr.mxu0 0.0
        %2388 = vmatpush2.msra.mxu0 0.0
        %2389 = vmatprep.subr.mxu0 0.0
        %2390 = vmatpush2.msra.mxu0 0.0
        %2391 = vmatprep.subr.mxu0 0.0
        %2392 = vmatpush2.msra.mxu0 0.0
        %2393 = vmatprep.subr.mxu0 0.0
        %2394 = vmatpush2.msra.mxu0 0.0
        %2395 = vmatprep.subr.mxu0 0.0
        %2396 = vmatpush2.msra.mxu0 0.0
        %2397 = vmatprep.subr.mxu0 0.0
        %2398 = vmatpush2.msra.mxu0 0.0
        %2399 = vmatprep.subr.mxu0 0.0
        %2400 = vmatpush2.msra.mxu0 0.0
        %2401 = vmatprep.subr.mxu0 0.0
        %2402 = vmatpush2.msra.mxu0 0.0
        %2403 = vmatprep.subr.mxu0 0.0
        %2404 = vmatpush2.msra.mxu0 0.0
        %2405 = vmatprep.subr.mxu0 0.0
        %2406 = vmatpush2.msra.mxu0 0.0
        %2407 = vmatprep.subr.mxu0 0.0
        %2408 = vmatpush2.msra.mxu0 0.0
        %2409 = vmatprep.mubr.f32.mxu0 0.0
        %2410 = vmatmul.mubr.f32.gmra.mxu0 %v1955
        %v2411 = vpop.f32.mrf.mxu0
        %v2412 = vadd.f32 0.0, %v2411
        %v2413 = vpop.f32.mrf.mxu0
        %v2414 = vadd.f32 0.0, %v2413
        %2415 = vmatprep.mubr.f32.mxu0 0.0
        %2416 = vmatmul.mubr.f32.gmra.mxu0 %v1958
        %v2417 = vpop.f32.mrf.mxu0
        %v2418 = vadd.f32 0.0, %v2417
        %v2419 = vpop.f32.mrf.mxu0
        %v2420 = vadd.f32 0.0, %v2419
        %2421 = vdwg.mxu0
        %2422 = vmatprep.subr.mxu0 0.0
        %2423 = vmatpush1.msra.mxu0 0.0
        %2424 = vmatprep.subr.mxu0 0.0
        %2425 = vmatpush1.msra.mxu0 0.0
        %2426 = vmatprep.subr.mxu0 0.0
        %2427 = vmatpush1.msra.mxu0 0.0
        %2428 = vmatprep.subr.mxu0 0.0
        %2429 = vmatpush1.msra.mxu0 0.0
        %2430 = vmatprep.subr.mxu0 0.0
        %2431 = vmatpush1.msra.mxu0 0.0
        %2432 = vmatprep.subr.mxu0 0.0
        %2433 = vmatpush1.msra.mxu0 0.0
        %2434 = vmatprep.subr.mxu0 0.0
        %2435 = vmatpush1.msra.mxu0 0.0
        %2436 = vmatprep.subr.mxu0 0.0
        %2437 = vmatpush1.msra.mxu0 0.0
        %2438 = vmatprep.subr.mxu0 0.0
        %2439 = vmatpush1.msra.mxu0 0.0
        %2440 = vmatprep.subr.mxu0 0.0
        %2441 = vmatpush1.msra.mxu0 0.0
        %2442 = vmatprep.subr.mxu0 0.0
        %2443 = vmatpush1.msra.mxu0 0.0
        %2444 = vmatprep.subr.mxu0 0.0
        %2445 = vmatpush1.msra.mxu0 0.0
        %2446 = vmatprep.subr.mxu0 0.0
        %2447 = vmatpush1.msra.mxu0 0.0
        %2448 = vmatprep.subr.mxu0 0.0
        %2449 = vmatpush1.msra.mxu0 0.0
        %2450 = vmatprep.subr.mxu0 0.0
        %2451 = vmatpush1.msra.mxu0 0.0
        %2452 = vmatprep.subr.mxu0 %v1951
        %2453 = vmatpush1.msra.mxu0 %v1950
        %2454 = vmatprep.subr.mxu0 0.0
        %2455 = vmatpush2.msra.mxu0 0.0
        %2456 = vmatprep.subr.mxu0 0.0
        %2457 = vmatpush2.msra.mxu0 0.0
        %2458 = vmatprep.subr.mxu0 0.0
        %2459 = vmatpush2.msra.mxu0 0.0
        %2460 = vmatprep.subr.mxu0 0.0
        %2461 = vmatpush2.msra.mxu0 0.0
        %2462 = vmatprep.subr.mxu0 0.0
        %2463 = vmatpush2.msra.mxu0 0.0
        %2464 = vmatprep.subr.mxu0 0.0
        %2465 = vmatpush2.msra.mxu0 0.0
        %2466 = vmatprep.subr.mxu0 0.0
        %2467 = vmatpush2.msra.mxu0 0.0
        %2468 = vmatprep.subr.mxu0 0.0
        %2469 = vmatpush2.msra.mxu0 0.0
        %2470 = vmatprep.subr.mxu0 0.0
        %2471 = vmatpush2.msra.mxu0 0.0
        %2472 = vmatprep.subr.mxu0 0.0
        %2473 = vmatpush2.msra.mxu0 0.0
        %2474 = vmatprep.subr.mxu0 0.0
        %2475 = vmatpush2.msra.mxu0 0.0
        %2476 = vmatprep.subr.mxu0 0.0
        %2477 = vmatpush2.msra.mxu0 0.0
        %2478 = vmatprep.subr.mxu0 0.0
        %2479 = vmatpush2.msra.mxu0 0.0
        %2480 = vmatprep.subr.mxu0 0.0
        %2481 = vmatpush2.msra.mxu0 0.0
        %2482 = vmatprep.subr.mxu0 0.0
        %2483 = vmatpush2.msra.mxu0 0.0
        %2484 = vmatprep.subr.mxu0 0.0
        %2485 = vmatpush2.msra.mxu0 0.0
        %2486 = vmatprep.mubr.f32.mxu0 0.0
        %2487 = vmatmul.mubr.f32.gmra.mxu0 %v1955
        %v2488 = vpop.f32.mrf.mxu0
        %v2489 = vadd.f32 0.0, %v2488
        %v2490 = vpop.f32.mrf.mxu0
        %v2491 = vadd.f32 0.0, %v2490
        %2492 = vmatprep.mubr.f32.mxu0 0.0
        %2493 = vmatmul.mubr.f32.gmra.mxu0 %v1958
        %v2494 = vpop.f32.mrf.mxu0
        %v2495 = vadd.f32 0.0, %v2494
        %v2496 = vpop.f32.mrf.mxu0
        %v2497 = vadd.f32 0.0, %v2496
        %2498 = vdwg.mxu0
        %2499 = vmatprep.subr.mxu0 0.0
        %2500 = vmatpush1.msra.mxu0 0.0
        %2501 = vmatprep.subr.mxu0 0.0
        %2502 = vmatpush1.msra.mxu0 0.0
        %2503 = vmatprep.subr.mxu0 0.0
        %2504 = vmatpush1.msra.mxu0 0.0
        %2505 = vmatprep.subr.mxu0 0.0
        %2506 = vmatpush1.msra.mxu0 0.0
        %2507 = vmatprep.subr.mxu0 0.0
        %2508 = vmatpush1.msra.mxu0 0.0
        %2509 = vmatprep.subr.mxu0 0.0
        %2510 = vmatpush1.msra.mxu0 0.0
        %2511 = vmatprep.subr.mxu0 0.0
        %2512 = vmatpush1.msra.mxu0 0.0
        %2513 = vmatprep.subr.mxu0 0.0
        %2514 = vmatpush1.msra.mxu0 0.0
        %2515 = vmatprep.subr.mxu0 0.0
        %2516 = vmatpush1.msra.mxu0 0.0
        %2517 = vmatprep.subr.mxu0 0.0
        %2518 = vmatpush1.msra.mxu0 0.0
        %2519 = vmatprep.subr.mxu0 0.0
        %2520 = vmatpush1.msra.mxu0 0.0
        %2521 = vmatprep.subr.mxu0 0.0
        %2522 = vmatpush1.msra.mxu0 0.0
        %2523 = vmatprep.subr.mxu0 0.0
        %2524 = vmatpush1.msra.mxu0 0.0
        %2525 = vmatprep.subr.mxu0 0.0
        %2526 = vmatpush1.msra.mxu0 0.0
        %2527 = vmatprep.subr.mxu0 0.0
        %2528 = vmatpush1.msra.mxu0 0.0
        %2529 = vmatprep.subr.mxu0 %v1953
        %2530 = vmatpush1.msra.mxu0 %v1952
        %2531 = vmatprep.subr.mxu0 0.0
        %2532 = vmatpush2.msra.mxu0 0.0
        %2533 = vmatprep.subr.mxu0 0.0
        %2534 = vmatpush2.msra.mxu0 0.0
        %2535 = vmatprep.subr.mxu0 0.0
        %2536 = vmatpush2.msra.mxu0 0.0
        %2537 = vmatprep.subr.mxu0 0.0
        %2538 = vmatpush2.msra.mxu0 0.0
        %2539 = vmatprep.subr.mxu0 0.0
        %2540 = vmatpush2.msra.mxu0 0.0
        %2541 = vmatprep.subr.mxu0 0.0
        %2542 = vmatpush2.msra.mxu0 0.0
        %2543 = vmatprep.subr.mxu0 0.0
        %2544 = vmatpush2.msra.mxu0 0.0
        %2545 = vmatprep.subr.mxu0 0.0
        %2546 = vmatpush2.msra.mxu0 0.0
        %2547 = vmatprep.subr.mxu0 0.0
        %2548 = vmatpush2.msra.mxu0 0.0
        %2549 = vmatprep.subr.mxu0 0.0
        %2550 = vmatpush2.msra.mxu0 0.0
        %2551 = vmatprep.subr.mxu0 0.0
        %2552 = vmatpush2.msra.mxu0 0.0
        %2553 = vmatprep.subr.mxu0 0.0
        %2554 = vmatpush2.msra.mxu0 0.0
        %2555 = vmatprep.subr.mxu0 0.0
        %2556 = vmatpush2.msra.mxu0 0.0
        %2557 = vmatprep.subr.mxu0 0.0
        %2558 = vmatpush2.msra.mxu0 0.0
        %2559 = vmatprep.subr.mxu0 0.0
        %2560 = vmatpush2.msra.mxu0 0.0
        %2561 = vmatprep.subr.mxu0 0.0
        %2562 = vmatpush2.msra.mxu0 0.0
        %2563 = vmatprep.mubr.f32.mxu0 0.0
        %2564 = vmatmul.mubr.f32.gmra.mxu0 %v1955
        %v2565 = vpop.f32.mrf.mxu0
        %v2566 = vadd.f32 0.0, %v2565
        %v2567 = vpop.f32.mrf.mxu0
        %v2568 = vadd.f32 0.0, %v2567
        %2569 = vmatprep.mubr.f32.mxu0 0.0
        %2570 = vmatmul.mubr.f32.gmra.mxu0 %v1958
        %v2571 = vpop.f32.mrf.mxu0
        %v2572 = vadd.f32 0.0, %v2571
        %v2573 = vpop.f32.mrf.mxu0
        %v2574 = vadd.f32 0.0, %v2573
        %2575 = vdwg.mxu0
        %v2608 = vcombine.low %v2027, %v2029
        %v2609 = vcombine.high %v2027, %v2029
        %v2610 = vcombine.low %v2104, %v2106
        %v2611 = vcombine.high %v2104, %v2106
        %v2612 = vcombine.low %v2181, %v2183
        %v2613 = vcombine.high %v2181, %v2183
        %v2614 = vcombine.low %v2258, %v2260
        %v2615 = vcombine.high %v2258, %v2260
        %v2617 = vunpack.c.l.s4 1966171168
        %v2618 = vunpack.c.0.s8 %v2617
        %v2619 = vlaneseq
        %v2620 = vshrl.u32 %v2619, 7
        %v2621 = vsub.s32 %v2618, %v2620
        %v2622 = vrot.slane %v2608, %v2621
        %v2624 = vunpack.c.l.s4 1966171168
        %v2625 = vunpack.c.0.s8 %v2624
        %v2626 = vlaneseq
        %v2627 = vshrl.u32 %v2626, 7
        %v2628 = vsub.s32 %v2625, %v2627
        %v2629 = vrot.slane %v2609, %v2628
        %v2631 = vunpack.c.l.s4 1966171168
        %v2632 = vunpack.c.0.s8 %v2631
        %v2633 = vlaneseq
        %v2634 = vshrl.u32 %v2633, 7
        %v2635 = vsub.s32 %v2632, %v2634
        %v2636 = vrot.slane %v2610, %v2635
        %v2638 = vunpack.c.l.s4 1966171168
        %v2639 = vunpack.c.0.s8 %v2638
        %v2640 = vlaneseq
        %v2641 = vshrl.u32 %v2640, 7
        %v2642 = vsub.s32 %v2639, %v2641
        %v2643 = vrot.slane %v2611, %v2642
        %v2645 = vunpack.c.l.s4 1966171168
        %v2646 = vunpack.c.0.s8 %v2645
        %v2647 = vlaneseq
        %v2648 = vshrl.u32 %v2647, 7
        %v2649 = vsub.s32 %v2646, %v2648
        %v2650 = vrot.slane %v2612, %v2649
        %v2652 = vunpack.c.l.s4 1966171168
        %v2653 = vunpack.c.0.s8 %v2652
        %v2654 = vlaneseq
        %v2655 = vshrl.u32 %v2654, 7
        %v2656 = vsub.s32 %v2653, %v2655
        %v2657 = vrot.slane %v2613, %v2656
        %v2659 = vunpack.c.l.s4 1966171168
        %v2660 = vunpack.c.0.s8 %v2659
        %v2661 = vlaneseq
        %v2662 = vshrl.u32 %v2661, 7
        %v2663 = vsub.s32 %v2660, %v2662
        %v2664 = vrot.slane %v2614, %v2663
        %v2666 = vunpack.c.l.s4 1966171168
        %v2667 = vunpack.c.0.s8 %v2666
        %v2668 = vlaneseq
        %v2669 = vshrl.u32 %v2668, 7
        %v2670 = vsub.s32 %v2667, %v2669
        %v2671 = vrot.slane %v2615, %v2670
        %v2672 = vcombine.low %v2622, %v2636
        %v2673 = vcombine.high %v2622, %v2636
        %v2674 = vcombine.low %v2629, %v2643
        %v2675 = vcombine.high %v2629, %v2643
        %v2676 = vcombine.low %v2650, %v2664
        %v2677 = vcombine.high %v2650, %v2664
        %v2678 = vcombine.low %v2657, %v2671
        %v2679 = vcombine.high %v2657, %v2671
        %v2681 = vunpack.c.l.s4 1966171168
        %v2682 = vunpack.c.0.s8 %v2681
        %v2683 = vlaneseq
        %v2684 = vshrl.u32 %v2683, 7
        %v2685 = vsub.s32 %v2682, %v2684
        %v2686 = vrot.slane %v2672, %v2685
        %v2688 = vunpack.c.l.s4 1966171168
        %v2689 = vunpack.c.0.s8 %v2688
        %v2690 = vlaneseq
        %v2691 = vshrl.u32 %v2690, 7
        %v2692 = vsub.s32 %v2689, %v2691
        %v2693 = vrot.slane %v2674, %v2692
        %v2695 = vunpack.c.l.s4 1966171168
        %v2696 = vunpack.c.0.s8 %v2695
        %v2697 = vlaneseq
        %v2698 = vshrl.u32 %v2697, 7
        %v2699 = vsub.s32 %v2696, %v2698
        %v2700 = vrot.slane %v2673, %v2699
        %v2702 = vunpack.c.l.s4 1966171168
        %v2703 = vunpack.c.0.s8 %v2702
        %v2704 = vlaneseq
        %v2705 = vshrl.u32 %v2704, 7
        %v2706 = vsub.s32 %v2703, %v2705
        %v2707 = vrot.slane %v2675, %v2706
        %v2709 = vunpack.c.l.s4 1966171168
        %v2710 = vunpack.c.0.s8 %v2709
        %v2711 = vlaneseq
        %v2712 = vshrl.u32 %v2711, 7
        %v2713 = vsub.s32 %v2710, %v2712
        %v2714 = vrot.slane %v2676, %v2713
        %v2716 = vunpack.c.l.s4 1966171168
        %v2717 = vunpack.c.0.s8 %v2716
        %v2718 = vlaneseq
        %v2719 = vshrl.u32 %v2718, 7
        %v2720 = vsub.s32 %v2717, %v2719
        %v2721 = vrot.slane %v2678, %v2720
        %v2723 = vunpack.c.l.s4 1966171168
        %v2724 = vunpack.c.0.s8 %v2723
        %v2725 = vlaneseq
        %v2726 = vshrl.u32 %v2725, 7
        %v2727 = vsub.s32 %v2724, %v2726
        %v2728 = vrot.slane %v2677, %v2727
        %v2730 = vunpack.c.l.s4 1966171168
        %v2731 = vunpack.c.0.s8 %v2730
        %v2732 = vlaneseq
        %v2733 = vshrl.u32 %v2732, 7
        %v2734 = vsub.s32 %v2731, %v2733
        %v2735 = vrot.slane %v2679, %v2734
        %v2736 = vcombine.low %v2686, %v2714
        %v2737 = vcombine.high %v2686, %v2714
        %v2738 = vcombine.low %v2693, %v2721
        %v2739 = vcombine.high %v2693, %v2721
        %v2740 = vcombine.low %v2700, %v2728
        %v2741 = vcombine.high %v2700, %v2728
        %v2742 = vcombine.low %v2707, %v2735
        %v2743 = vcombine.high %v2707, %v2735
        %v2744 = vcombine.low %v2335, %v2337
        %v2745 = vcombine.high %v2335, %v2337
        %v2746 = vcombine.low %v2412, %v2414
        %v2747 = vcombine.high %v2412, %v2414
        %v2748 = vcombine.low %v2489, %v2491
        %v2749 = vcombine.high %v2489, %v2491
        %v2750 = vcombine.low %v2566, %v2568
        %v2751 = vcombine.high %v2566, %v2568
        %v2753 = vunpack.c.l.s4 1966171168
        %v2754 = vunpack.c.0.s8 %v2753
        %v2755 = vlaneseq
        %v2756 = vshrl.u32 %v2755, 7
        %v2757 = vsub.s32 %v2754, %v2756
        %v2758 = vrot.slane %v2744, %v2757
        %v2760 = vunpack.c.l.s4 1966171168
        %v2761 = vunpack.c.0.s8 %v2760
        %v2762 = vlaneseq
        %v2763 = vshrl.u32 %v2762, 7
        %v2764 = vsub.s32 %v2761, %v2763
        %v2765 = vrot.slane %v2745, %v2764
        %v2767 = vunpack.c.l.s4 1966171168
        %v2768 = vunpack.c.0.s8 %v2767
        %v2769 = vlaneseq
        %v2770 = vshrl.u32 %v2769, 7
        %v2771 = vsub.s32 %v2768, %v2770
        %v2772 = vrot.slane %v2746, %v2771
        %v2774 = vunpack.c.l.s4 1966171168
        %v2775 = vunpack.c.0.s8 %v2774
        %v2776 = vlaneseq
        %v2777 = vshrl.u32 %v2776, 7
        %v2778 = vsub.s32 %v2775, %v2777
        %v2779 = vrot.slane %v2747, %v2778
        %v2781 = vunpack.c.l.s4 1966171168
        %v2782 = vunpack.c.0.s8 %v2781
        %v2783 = vlaneseq
        %v2784 = vshrl.u32 %v2783, 7
        %v2785 = vsub.s32 %v2782, %v2784
        %v2786 = vrot.slane %v2748, %v2785
        %v2788 = vunpack.c.l.s4 1966171168
        %v2789 = vunpack.c.0.s8 %v2788
        %v2790 = vlaneseq
        %v2791 = vshrl.u32 %v2790, 7
        %v2792 = vsub.s32 %v2789, %v2791
        %v2793 = vrot.slane %v2749, %v2792
        %v2795 = vunpack.c.l.s4 1966171168
        %v2796 = vunpack.c.0.s8 %v2795
        %v2797 = vlaneseq
        %v2798 = vshrl.u32 %v2797, 7
        %v2799 = vsub.s32 %v2796, %v2798
        %v2800 = vrot.slane %v2750, %v2799
        %v2802 = vunpack.c.l.s4 1966171168
        %v2803 = vunpack.c.0.s8 %v2802
        %v2804 = vlaneseq
        %v2805 = vshrl.u32 %v2804, 7
        %v2806 = vsub.s32 %v2803, %v2805
        %v2807 = vrot.slane %v2751, %v2806
        %v2808 = vcombine.low %v2758, %v2772
        %v2809 = vcombine.high %v2758, %v2772
        %v2810 = vcombine.low %v2765, %v2779
        %v2811 = vcombine.high %v2765, %v2779
        %v2812 = vcombine.low %v2786, %v2800
        %v2813 = vcombine.high %v2786, %v2800
        %v2814 = vcombine.low %v2793, %v2807
        %v2815 = vcombine.high %v2793, %v2807
        %v2817 = vunpack.c.l.s4 1966171168
        %v2818 = vunpack.c.0.s8 %v2817
        %v2819 = vlaneseq
        %v2820 = vshrl.u32 %v2819, 7
        %v2821 = vsub.s32 %v2818, %v2820
        %v2822 = vrot.slane %v2808, %v2821
        %v2824 = vunpack.c.l.s4 1966171168
        %v2825 = vunpack.c.0.s8 %v2824
        %v2826 = vlaneseq
        %v2827 = vshrl.u32 %v2826, 7
        %v2828 = vsub.s32 %v2825, %v2827
        %v2829 = vrot.slane %v2810, %v2828
        %v2831 = vunpack.c.l.s4 1966171168
        %v2832 = vunpack.c.0.s8 %v2831
        %v2833 = vlaneseq
        %v2834 = vshrl.u32 %v2833, 7
        %v2835 = vsub.s32 %v2832, %v2834
        %v2836 = vrot.slane %v2809, %v2835
        %v2838 = vunpack.c.l.s4 1966171168
        %v2839 = vunpack.c.0.s8 %v2838
        %v2840 = vlaneseq
        %v2841 = vshrl.u32 %v2840, 7
        %v2842 = vsub.s32 %v2839, %v2841
        %v2843 = vrot.slane %v2811, %v2842
        %v2845 = vunpack.c.l.s4 1966171168
        %v2846 = vunpack.c.0.s8 %v2845
        %v2847 = vlaneseq
        %v2848 = vshrl.u32 %v2847, 7
        %v2849 = vsub.s32 %v2846, %v2848
        %v2850 = vrot.slane %v2812, %v2849
        %v2852 = vunpack.c.l.s4 1966171168
        %v2853 = vunpack.c.0.s8 %v2852
        %v2854 = vlaneseq
        %v2855 = vshrl.u32 %v2854, 7
        %v2856 = vsub.s32 %v2853, %v2855
        %v2857 = vrot.slane %v2814, %v2856
        %v2859 = vunpack.c.l.s4 1966171168
        %v2860 = vunpack.c.0.s8 %v2859
        %v2861 = vlaneseq
        %v2862 = vshrl.u32 %v2861, 7
        %v2863 = vsub.s32 %v2860, %v2862
        %v2864 = vrot.slane %v2813, %v2863
        %v2866 = vunpack.c.l.s4 1966171168
        %v2867 = vunpack.c.0.s8 %v2866
        %v2868 = vlaneseq
        %v2869 = vshrl.u32 %v2868, 7
        %v2870 = vsub.s32 %v2867, %v2869
        %v2871 = vrot.slane %v2815, %v2870
        %v2872 = vcombine.low %v2822, %v2850
        %v2873 = vcombine.high %v2822, %v2850
        %v2874 = vcombine.low %v2829, %v2857
        %v2875 = vcombine.high %v2829, %v2857
        %v2876 = vcombine.low %v2836, %v2864
        %v2877 = vcombine.high %v2836, %v2864
        %v2878 = vcombine.low %v2843, %v2871
        %v2879 = vcombine.high %v2843, %v2871
        %v2880 = vcombine.low %v2033, %v2035
        %v2881 = vcombine.high %v2033, %v2035
        %v2882 = vcombine.low %v2110, %v2112
        %v2883 = vcombine.high %v2110, %v2112
        %v2884 = vcombine.low %v2187, %v2189
        %v2885 = vcombine.high %v2187, %v2189
        %v2886 = vcombine.low %v2264, %v2266
        %v2887 = vcombine.high %v2264, %v2266
        %v2889 = vunpack.c.l.s4 1966171168
        %v2890 = vunpack.c.0.s8 %v2889
        %v2891 = vlaneseq
        %v2892 = vshrl.u32 %v2891, 7
        %v2893 = vsub.s32 %v2890, %v2892
        %v2894 = vrot.slane %v2880, %v2893
        %v2896 = vunpack.c.l.s4 1966171168
        %v2897 = vunpack.c.0.s8 %v2896
        %v2898 = vlaneseq
        %v2899 = vshrl.u32 %v2898, 7
        %v2900 = vsub.s32 %v2897, %v2899
        %v2901 = vrot.slane %v2881, %v2900
        %v2903 = vunpack.c.l.s4 1966171168
        %v2904 = vunpack.c.0.s8 %v2903
        %v2905 = vlaneseq
        %v2906 = vshrl.u32 %v2905, 7
        %v2907 = vsub.s32 %v2904, %v2906
        %v2908 = vrot.slane %v2882, %v2907
        %v2910 = vunpack.c.l.s4 1966171168
        %v2911 = vunpack.c.0.s8 %v2910
        %v2912 = vlaneseq
        %v2913 = vshrl.u32 %v2912, 7
        %v2914 = vsub.s32 %v2911, %v2913
        %v2915 = vrot.slane %v2883, %v2914
        %v2917 = vunpack.c.l.s4 1966171168
        %v2918 = vunpack.c.0.s8 %v2917
        %v2919 = vlaneseq
        %v2920 = vshrl.u32 %v2919, 7
        %v2921 = vsub.s32 %v2918, %v2920
        %v2922 = vrot.slane %v2884, %v2921
        %v2924 = vunpack.c.l.s4 1966171168
        %v2925 = vunpack.c.0.s8 %v2924
        %v2926 = vlaneseq
        %v2927 = vshrl.u32 %v2926, 7
        %v2928 = vsub.s32 %v2925, %v2927
        %v2929 = vrot.slane %v2885, %v2928
        %v2931 = vunpack.c.l.s4 1966171168
        %v2932 = vunpack.c.0.s8 %v2931
        %v2933 = vlaneseq
        %v2934 = vshrl.u32 %v2933, 7
        %v2935 = vsub.s32 %v2932, %v2934
        %v2936 = vrot.slane %v2886, %v2935
        %v2938 = vunpack.c.l.s4 1966171168
        %v2939 = vunpack.c.0.s8 %v2938
        %v2940 = vlaneseq
        %v2941 = vshrl.u32 %v2940, 7
        %v2942 = vsub.s32 %v2939, %v2941
        %v2943 = vrot.slane %v2887, %v2942
        %v2944 = vcombine.low %v2894, %v2908
        %v2945 = vcombine.high %v2894, %v2908
        %v2946 = vcombine.low %v2901, %v2915
        %v2947 = vcombine.high %v2901, %v2915
        %v2948 = vcombine.low %v2922, %v2936
        %v2949 = vcombine.high %v2922, %v2936
        %v2950 = vcombine.low %v2929, %v2943
        %v2951 = vcombine.high %v2929, %v2943
        %v2953 = vunpack.c.l.s4 1966171168
        %v2954 = vunpack.c.0.s8 %v2953
        %v2955 = vlaneseq
        %v2956 = vshrl.u32 %v2955, 7
        %v2957 = vsub.s32 %v2954, %v2956
        %v2958 = vrot.slane %v2944, %v2957
        %v2960 = vunpack.c.l.s4 1966171168
        %v2961 = vunpack.c.0.s8 %v2960
        %v2962 = vlaneseq
        %v2963 = vshrl.u32 %v2962, 7
        %v2964 = vsub.s32 %v2961, %v2963
        %v2965 = vrot.slane %v2946, %v2964
        %v2967 = vunpack.c.l.s4 1966171168
        %v2968 = vunpack.c.0.s8 %v2967
        %v2969 = vlaneseq
        %v2970 = vshrl.u32 %v2969, 7
        %v2971 = vsub.s32 %v2968, %v2970
        %v2972 = vrot.slane %v2945, %v2971
        %v2974 = vunpack.c.l.s4 1966171168
        %v2975 = vunpack.c.0.s8 %v2974
        %v2976 = vlaneseq
        %v2977 = vshrl.u32 %v2976, 7
        %v2978 = vsub.s32 %v2975, %v2977
        %v2979 = vrot.slane %v2947, %v2978
        %v2981 = vunpack.c.l.s4 1966171168
        %v2982 = vunpack.c.0.s8 %v2981
        %v2983 = vlaneseq
        %v2984 = vshrl.u32 %v2983, 7
        %v2985 = vsub.s32 %v2982, %v2984
        %v2986 = vrot.slane %v2948, %v2985
        %v2988 = vunpack.c.l.s4 1966171168
        %v2989 = vunpack.c.0.s8 %v2988
        %v2990 = vlaneseq
        %v2991 = vshrl.u32 %v2990, 7
        %v2992 = vsub.s32 %v2989, %v2991
        %v2993 = vrot.slane %v2950, %v2992
        %v2995 = vunpack.c.l.s4 1966171168
        %v2996 = vunpack.c.0.s8 %v2995
        %v2997 = vlaneseq
        %v2998 = vshrl.u32 %v2997, 7
        %v2999 = vsub.s32 %v2996, %v2998
        %v3000 = vrot.slane %v2949, %v2999
        %v3002 = vunpack.c.l.s4 1966171168
        %v3003 = vunpack.c.0.s8 %v3002
        %v3004 = vlaneseq
        %v3005 = vshrl.u32 %v3004, 7
        %v3006 = vsub.s32 %v3003, %v3005
        %v3007 = vrot.slane %v2951, %v3006
        %v3008 = vcombine.low %v2958, %v2986
        %v3009 = vcombine.high %v2958, %v2986
        %v3010 = vcombine.low %v2965, %v2993
        %v3011 = vcombine.high %v2965, %v2993
        %v3012 = vcombine.low %v2972, %v3000
        %v3013 = vcombine.high %v2972, %v3000
        %v3014 = vcombine.low %v2979, %v3007
        %v3015 = vcombine.high %v2979, %v3007
        %v3016 = vcombine.low %v2341, %v2343
        %v3017 = vcombine.high %v2341, %v2343
        %v3018 = vcombine.low %v2418, %v2420
        %v3019 = vcombine.high %v2418, %v2420
        %v3020 = vcombine.low %v2495, %v2497
        %v3021 = vcombine.high %v2495, %v2497
        %v3022 = vcombine.low %v2572, %v2574
        %v3023 = vcombine.high %v2572, %v2574
        %v3025 = vunpack.c.l.s4 1966171168
        %v3026 = vunpack.c.0.s8 %v3025
        %v3027 = vlaneseq
        %v3028 = vshrl.u32 %v3027, 7
        %v3029 = vsub.s32 %v3026, %v3028
        %v3030 = vrot.slane %v3016, %v3029
        %v3032 = vunpack.c.l.s4 1966171168
        %v3033 = vunpack.c.0.s8 %v3032
        %v3034 = vlaneseq
        %v3035 = vshrl.u32 %v3034, 7
        %v3036 = vsub.s32 %v3033, %v3035
        %v3037 = vrot.slane %v3017, %v3036
        %v3039 = vunpack.c.l.s4 1966171168
        %v3040 = vunpack.c.0.s8 %v3039
        %v3041 = vlaneseq
        %v3042 = vshrl.u32 %v3041, 7
        %v3043 = vsub.s32 %v3040, %v3042
        %v3044 = vrot.slane %v3018, %v3043
        %v3046 = vunpack.c.l.s4 1966171168
        %v3047 = vunpack.c.0.s8 %v3046
        %v3048 = vlaneseq
        %v3049 = vshrl.u32 %v3048, 7
        %v3050 = vsub.s32 %v3047, %v3049
        %v3051 = vrot.slane %v3019, %v3050
        %v3053 = vunpack.c.l.s4 1966171168
        %v3054 = vunpack.c.0.s8 %v3053
        %v3055 = vlaneseq
        %v3056 = vshrl.u32 %v3055, 7
        %v3057 = vsub.s32 %v3054, %v3056
        %v3058 = vrot.slane %v3020, %v3057
        %v3060 = vunpack.c.l.s4 1966171168
        %v3061 = vunpack.c.0.s8 %v3060
        %v3062 = vlaneseq
        %v3063 = vshrl.u32 %v3062, 7
        %v3064 = vsub.s32 %v3061, %v3063
        %v3065 = vrot.slane %v3021, %v3064
        %v3067 = vunpack.c.l.s4 1966171168
        %v3068 = vunpack.c.0.s8 %v3067
        %v3069 = vlaneseq
        %v3070 = vshrl.u32 %v3069, 7
        %v3071 = vsub.s32 %v3068, %v3070
        %v3072 = vrot.slane %v3022, %v3071
        %v3074 = vunpack.c.l.s4 1966171168
        %v3075 = vunpack.c.0.s8 %v3074
        %v3076 = vlaneseq
        %v3077 = vshrl.u32 %v3076, 7
        %v3078 = vsub.s32 %v3075, %v3077
        %v3079 = vrot.slane %v3023, %v3078
        %v3080 = vcombine.low %v3030, %v3044
        %v3081 = vcombine.high %v3030, %v3044
        %v3082 = vcombine.low %v3037, %v3051
        %v3083 = vcombine.high %v3037, %v3051
        %v3084 = vcombine.low %v3058, %v3072
        %v3085 = vcombine.high %v3058, %v3072
        %v3086 = vcombine.low %v3065, %v3079
        %v3087 = vcombine.high %v3065, %v3079
        %v3089 = vunpack.c.l.s4 1966171168
        %v3090 = vunpack.c.0.s8 %v3089
        %v3091 = vlaneseq
        %v3092 = vshrl.u32 %v3091, 7
        %v3093 = vsub.s32 %v3090, %v3092
        %v3094 = vrot.slane %v3080, %v3093
        %v3096 = vunpack.c.l.s4 1966171168
        %v3097 = vunpack.c.0.s8 %v3096
        %v3098 = vlaneseq
        %v3099 = vshrl.u32 %v3098, 7
        %v3100 = vsub.s32 %v3097, %v3099
        %v3101 = vrot.slane %v3082, %v3100
        %v3103 = vunpack.c.l.s4 1966171168
        %v3104 = vunpack.c.0.s8 %v3103
        %v3105 = vlaneseq
        %v3106 = vshrl.u32 %v3105, 7
        %v3107 = vsub.s32 %v3104, %v3106
        %v3108 = vrot.slane %v3081, %v3107
        %v3110 = vunpack.c.l.s4 1966171168
        %v3111 = vunpack.c.0.s8 %v3110
        %v3112 = vlaneseq
        %v3113 = vshrl.u32 %v3112, 7
        %v3114 = vsub.s32 %v3111, %v3113
        %v3115 = vrot.slane %v3083, %v3114
        %v3117 = vunpack.c.l.s4 1966171168
        %v3118 = vunpack.c.0.s8 %v3117
        %v3119 = vlaneseq
        %v3120 = vshrl.u32 %v3119, 7
        %v3121 = vsub.s32 %v3118, %v3120
        %v3122 = vrot.slane %v3084, %v3121
        %v3124 = vunpack.c.l.s4 1966171168
        %v3125 = vunpack.c.0.s8 %v3124
        %v3126 = vlaneseq
        %v3127 = vshrl.u32 %v3126, 7
        %v3128 = vsub.s32 %v3125, %v3127
        %v3129 = vrot.slane %v3086, %v3128
        %v3131 = vunpack.c.l.s4 1966171168
        %v3132 = vunpack.c.0.s8 %v3131
        %v3133 = vlaneseq
        %v3134 = vshrl.u32 %v3133, 7
        %v3135 = vsub.s32 %v3132, %v3134
        %v3136 = vrot.slane %v3085, %v3135
        %v3138 = vunpack.c.l.s4 1966171168
        %v3139 = vunpack.c.0.s8 %v3138
        %v3140 = vlaneseq
        %v3141 = vshrl.u32 %v3140, 7
        %v3142 = vsub.s32 %v3139, %v3141
        %v3143 = vrot.slane %v3087, %v3142
        %v3144 = vcombine.low %v3094, %v3122
        %v3145 = vcombine.high %v3094, %v3122
        %v3146 = vcombine.low %v3101, %v3129
        %v3147 = vcombine.high %v3101, %v3129
        %v3148 = vcombine.low %v3108, %v3136
        %v3149 = vcombine.high %v3108, %v3136
        %v3150 = vcombine.low %v3115, %v3143
        %v3151 = vcombine.high %v3115, %v3143
        %vm3184 = vcmask 31744
        %v3186 = vsel %vm3184, %v496, 0
        %v3189 = vsel %vm3184, %v497, 0
        %v3192 = vsel %vm3184, %v498, 0
        %v3195 = vsel %vm3184, %v499, 0
        %v3198 = vsel %vm3184, %v500, 0
        %v3201 = vsel %vm3184, %v501, 0
        %v3204 = vsel %vm3184, %v502, 0
        %v3207 = vsel %vm3184, %v503, 0
        %v3210 = vsel %vm3184, %v504, 0
        %v3213 = vsel %vm3184, %v505, 0
        %v3216 = vsel %vm3184, %v506, 0
        %v3219 = vsel %vm3184, %v507, 0
        %v3222 = vsel %vm3184, %v508, 0
        %v3225 = vsel %vm3184, %v509, 0
        %v3228 = vsel %vm3184, %v510, 0
        %v3231 = vsel %vm3184, %v511, 0
        %v3234 = vsel %vm3184, %v512, 0
        %v3237 = vsel %vm3184, %v513, 0
        %v3240 = vsel %vm3184, %v514, 0
        %v3243 = vsel %vm3184, %v515, 0
        %v3246 = vsel %vm3184, %v516, 0
        %v3249 = vsel %vm3184, %v517, 0
        %v3252 = vsel %vm3184, %v518, 0
        %v3255 = vsel %vm3184, %v519, 0
        %v3258 = vsel %vm3184, %v520, 0
        %v3261 = vsel %vm3184, %v521, 0
        %v3264 = vsel %vm3184, %v522, 0
        %v3267 = vsel %vm3184, %v523, 0
        %v3270 = vsel %vm3184, %v524, 0
        %v3273 = vsel %vm3184, %v525, 0
        %v3276 = vsel %vm3184, %v526, 0
        %v3279 = vsel %vm3184, %v527, 0
        %vm3281 = vcmask 1043456
        %v3283 = vsel %vm3281, %v528, 0
        %3285 = vmatprep.subr.mxu0 0.0
        %3286 = vmatpush1.msra.mxu0 0.0
        %3287 = vmatprep.subr.mxu0 0.0
        %3288 = vmatpush1.msra.mxu0 0.0
        %3289 = vmatprep.subr.mxu0 0.0
        %3290 = vmatpush1.msra.mxu0 0.0
        %3291 = vmatprep.subr.mxu0 0.0
        %3292 = vmatpush1.msra.mxu0 0.0
        %3293 = vmatprep.subr.mxu0 0.0
        %3294 = vmatpush1.msra.mxu0 0.0
        %3295 = vmatprep.subr.mxu0 0.0
        %3296 = vmatpush1.msra.mxu0 0.0
        %3297 = vmatprep.subr.mxu0 0.0
        %3298 = vmatpush1.msra.mxu0 0.0
        %3299 = vmatprep.subr.mxu0 0.0
        %3300 = vmatpush1.msra.mxu0 0.0
        %3301 = vmatprep.subr.mxu0 0.0
        %3302 = vmatpush1.msra.mxu0 0.0
        %3303 = vmatprep.subr.mxu0 0.0
        %3304 = vmatpush1.msra.mxu0 0.0
        %3305 = vmatprep.subr.mxu0 0.0
        %3306 = vmatpush1.msra.mxu0 0.0
        %3307 = vmatprep.subr.mxu0 0.0
        %3308 = vmatpush1.msra.mxu0 0.0
        %3309 = vmatprep.subr.mxu0 0.0
        %3310 = vmatpush1.msra.mxu0 0.0
        %3311 = vmatprep.subr.mxu0 0.0
        %3312 = vmatpush1.msra.mxu0 0.0
        %3313 = vmatprep.subr.mxu0 0.0
        %3314 = vmatpush1.msra.mxu0 0.0
        %3315 = vmatprep.subr.mxu0 0.0
        %3316 = vmatpush1.msra.mxu0 %v3283
        %3317 = vmatprep.subr.mxu0 0.0
        %3318 = vmatpush2.msra.mxu0 0.0
        %3319 = vmatprep.subr.mxu0 0.0
        %3320 = vmatpush2.msra.mxu0 0.0
        %3321 = vmatprep.subr.mxu0 0.0
        %3322 = vmatpush2.msra.mxu0 0.0
        %3323 = vmatprep.subr.mxu0 0.0
        %3324 = vmatpush2.msra.mxu0 0.0
        %3325 = vmatprep.subr.mxu0 0.0
        %3326 = vmatpush2.msra.mxu0 0.0
        %3327 = vmatprep.subr.mxu0 0.0
        %3328 = vmatpush2.msra.mxu0 0.0
        %3329 = vmatprep.subr.mxu0 0.0
        %3330 = vmatpush2.msra.mxu0 0.0
        %3331 = vmatprep.subr.mxu0 0.0
        %3332 = vmatpush2.msra.mxu0 0.0
        %3333 = vmatprep.subr.mxu0 0.0
        %3334 = vmatpush2.msra.mxu0 0.0
        %3335 = vmatprep.subr.mxu0 0.0
        %3336 = vmatpush2.msra.mxu0 0.0
        %3337 = vmatprep.subr.mxu0 0.0
        %3338 = vmatpush2.msra.mxu0 0.0
        %3339 = vmatprep.subr.mxu0 0.0
        %3340 = vmatpush2.msra.mxu0 0.0
        %3341 = vmatprep.subr.mxu0 0.0
        %3342 = vmatpush2.msra.mxu0 0.0
        %3343 = vmatprep.subr.mxu0 0.0
        %3344 = vmatpush2.msra.mxu0 0.0
        %3345 = vmatprep.subr.mxu0 0.0
        %3346 = vmatpush2.msra.mxu0 0.0
        %3347 = vmatprep.subr.mxu0 0.0
        %3348 = vmatpush2.msra.mxu0 0.0
        %3349 = vmatprep.mubr.f32.mxu0 0.0
        %3350 = vmatmul.mubr.f32.gmra.mxu0 %v3186
        %v3351 = vpop.f32.mrf.mxu0
        %v3352 = vadd.f32 %v2736, %v3351
        %v3353 = vpop.f32.mrf.mxu0
        %3354 = vmatprep.mubr.f32.mxu0 0.0
        %3355 = vmatmul.mubr.f32.gmra.mxu0 %v3189
        %v3356 = vpop.f32.mrf.mxu0
        %v3357 = vadd.f32 %v2872, %v3356
        %v3358 = vpop.f32.mrf.mxu0
        %3359 = vmatprep.mubr.f32.mxu0 0.0
        %3360 = vmatmul.mubr.f32.gmra.mxu0 %v3192
        %v3361 = vpop.f32.mrf.mxu0
        %v3362 = vadd.f32 %v2740, %v3361
        %v3363 = vpop.f32.mrf.mxu0
        %3364 = vmatprep.mubr.f32.mxu0 0.0
        %3365 = vmatmul.mubr.f32.gmra.mxu0 %v3195
        %v3366 = vpop.f32.mrf.mxu0
        %v3367 = vadd.f32 %v2876, %v3366
        %v3368 = vpop.f32.mrf.mxu0
        %3369 = vmatprep.mubr.f32.mxu0 0.0
        %3370 = vmatmul.mubr.f32.gmra.mxu0 %v3198
        %v3371 = vpop.f32.mrf.mxu0
        %v3372 = vadd.f32 %v2737, %v3371
        %v3373 = vpop.f32.mrf.mxu0
        %3374 = vmatprep.mubr.f32.mxu0 0.0
        %3375 = vmatmul.mubr.f32.gmra.mxu0 %v3201
        %v3376 = vpop.f32.mrf.mxu0
        %v3377 = vadd.f32 %v2873, %v3376
        %v3378 = vpop.f32.mrf.mxu0
        %3379 = vmatprep.mubr.f32.mxu0 0.0
        %3380 = vmatmul.mubr.f32.gmra.mxu0 %v3204
        %v3381 = vpop.f32.mrf.mxu0
        %v3382 = vadd.f32 %v2741, %v3381
        %v3383 = vpop.f32.mrf.mxu0
        %3384 = vmatprep.mubr.f32.mxu0 0.0
        %3385 = vmatmul.mubr.f32.gmra.mxu0 %v3207
        %v3386 = vpop.f32.mrf.mxu0
        %v3387 = vadd.f32 %v2877, %v3386
        %v3388 = vpop.f32.mrf.mxu0
        %3389 = vmatprep.mubr.f32.mxu0 0.0
        %3390 = vmatmul.mubr.f32.gmra.mxu0 %v3210
        %v3391 = vpop.f32.mrf.mxu0
        %v3392 = vadd.f32 %v2738, %v3391
        %v3393 = vpop.f32.mrf.mxu0
        %3394 = vmatprep.mubr.f32.mxu0 0.0
        %3395 = vmatmul.mubr.f32.gmra.mxu0 %v3213
        %v3396 = vpop.f32.mrf.mxu0
        %v3397 = vadd.f32 %v2874, %v3396
        %v3398 = vpop.f32.mrf.mxu0
        %3399 = vmatprep.mubr.f32.mxu0 0.0
        %3400 = vmatmul.mubr.f32.gmra.mxu0 %v3216
        %v3401 = vpop.f32.mrf.mxu0
        %v3402 = vadd.f32 %v2742, %v3401
        %v3403 = vpop.f32.mrf.mxu0
        %3404 = vmatprep.mubr.f32.mxu0 0.0
        %3405 = vmatmul.mubr.f32.gmra.mxu0 %v3219
        %v3406 = vpop.f32.mrf.mxu0
        %v3407 = vadd.f32 %v2878, %v3406
        %v3408 = vpop.f32.mrf.mxu0
        %3409 = vmatprep.mubr.f32.mxu0 0.0
        %3410 = vmatmul.mubr.f32.gmra.mxu0 %v3222
        %v3411 = vpop.f32.mrf.mxu0
        %v3412 = vadd.f32 %v2739, %v3411
        %v3413 = vpop.f32.mrf.mxu0
        %3414 = vmatprep.mubr.f32.mxu0 0.0
        %3415 = vmatmul.mubr.f32.gmra.mxu0 %v3225
        %v3416 = vpop.f32.mrf.mxu0
        %v3417 = vadd.f32 %v2875, %v3416
        %v3418 = vpop.f32.mrf.mxu0
        %3419 = vmatprep.mubr.f32.mxu0 0.0
        %3420 = vmatmul.mubr.f32.gmra.mxu0 %v3228
        %v3421 = vpop.f32.mrf.mxu0
        %v3422 = vadd.f32 %v2743, %v3421
        %v3423 = vpop.f32.mrf.mxu0
        %3424 = vmatprep.mubr.f32.mxu0 0.0
        %3425 = vmatmul.mubr.f32.gmra.mxu0 %v3231
        %v3426 = vpop.f32.mrf.mxu0
        %v3427 = vadd.f32 %v2879, %v3426
        %v3428 = vpop.f32.mrf.mxu0
        %3429 = vmatprep.mubr.f32.mxu0 0.0
        %3430 = vmatmul.mubr.f32.gmra.mxu0 %v3234
        %v3431 = vpop.f32.mrf.mxu0
        %v3432 = vadd.f32 %v3008, %v3431
        %v3433 = vpop.f32.mrf.mxu0
        %3434 = vmatprep.mubr.f32.mxu0 0.0
        %3435 = vmatmul.mubr.f32.gmra.mxu0 %v3237
        %v3436 = vpop.f32.mrf.mxu0
        %v3437 = vadd.f32 %v3144, %v3436
        %v3438 = vpop.f32.mrf.mxu0
        %3439 = vmatprep.mubr.f32.mxu0 0.0
        %3440 = vmatmul.mubr.f32.gmra.mxu0 %v3240
        %v3441 = vpop.f32.mrf.mxu0
        %v3442 = vadd.f32 %v3012, %v3441
        %v3443 = vpop.f32.mrf.mxu0
        %3444 = vmatprep.mubr.f32.mxu0 0.0
        %3445 = vmatmul.mubr.f32.gmra.mxu0 %v3243
        %v3446 = vpop.f32.mrf.mxu0
        %v3447 = vadd.f32 %v3148, %v3446
        %v3448 = vpop.f32.mrf.mxu0
        %3449 = vmatprep.mubr.f32.mxu0 0.0
        %3450 = vmatmul.mubr.f32.gmra.mxu0 %v3246
        %v3451 = vpop.f32.mrf.mxu0
        %v3452 = vadd.f32 %v3009, %v3451
        %v3453 = vpop.f32.mrf.mxu0
        %3454 = vmatprep.mubr.f32.mxu0 0.0
        %3455 = vmatmul.mubr.f32.gmra.mxu0 %v3249
        %v3456 = vpop.f32.mrf.mxu0
        %v3457 = vadd.f32 %v3145, %v3456
        %v3458 = vpop.f32.mrf.mxu0
        %3459 = vmatprep.mubr.f32.mxu0 0.0
        %3460 = vmatmul.mubr.f32.gmra.mxu0 %v3252
        %v3461 = vpop.f32.mrf.mxu0
        %v3462 = vadd.f32 %v3013, %v3461
        %v3463 = vpop.f32.mrf.mxu0
        %3464 = vmatprep.mubr.f32.mxu0 0.0
        %3465 = vmatmul.mubr.f32.gmra.mxu0 %v3255
        %v3466 = vpop.f32.mrf.mxu0
        %v3467 = vadd.f32 %v3149, %v3466
        %v3468 = vpop.f32.mrf.mxu0
        %3469 = vmatprep.mubr.f32.mxu0 0.0
        %3470 = vmatmul.mubr.f32.gmra.mxu0 %v3258
        %v3471 = vpop.f32.mrf.mxu0
        %v3472 = vadd.f32 %v3010, %v3471
        %v3473 = vpop.f32.mrf.mxu0
        %3474 = vmatprep.mubr.f32.mxu0 0.0
        %3475 = vmatmul.mubr.f32.gmra.mxu0 %v3261
        %v3476 = vpop.f32.mrf.mxu0
        %v3477 = vadd.f32 %v3146, %v3476
        %v3478 = vpop.f32.mrf.mxu0
        %3479 = vmatprep.mubr.f32.mxu0 0.0
        %3480 = vmatmul.mubr.f32.gmra.mxu0 %v3264
        %v3481 = vpop.f32.mrf.mxu0
        %v3482 = vadd.f32 %v3014, %v3481
        %v3483 = vpop.f32.mrf.mxu0
        %3484 = vmatprep.mubr.f32.mxu0 0.0
        %3485 = vmatmul.mubr.f32.gmra.mxu0 %v3267
        %v3486 = vpop.f32.mrf.mxu0
        %v3487 = vadd.f32 %v3150, %v3486
        %v3488 = vpop.f32.mrf.mxu0
        %3489 = vmatprep.mubr.f32.mxu0 0.0
        %3490 = vmatmul.mubr.f32.gmra.mxu0 %v3270
        %v3491 = vpop.f32.mrf.mxu0
        %v3492 = vadd.f32 %v3011, %v3491
        %v3493 = vpop.f32.mrf.mxu0
        %3494 = vmatprep.mubr.f32.mxu0 0.0
        %3495 = vmatmul.mubr.f32.gmra.mxu0 %v3273
        %v3496 = vpop.f32.mrf.mxu0
        %v3497 = vadd.f32 %v3147, %v3496
        %v3498 = vpop.f32.mrf.mxu0
        %3499 = vmatprep.mubr.f32.mxu0 0.0
        %3500 = vmatmul.mubr.f32.gmra.mxu0 %v3276
        %v3501 = vpop.f32.mrf.mxu0
        %v3502 = vadd.f32 %v3015, %v3501
        %v3503 = vpop.f32.mrf.mxu0
        %3504 = vmatprep.mubr.f32.mxu0 0.0
        %3505 = vmatmul.mubr.f32.gmra.mxu0 %v3279
        %v3506 = vpop.f32.mrf.mxu0
        %v3507 = vadd.f32 %v3151, %v3506
        %v3508 = vpop.f32.mrf.mxu0
        %3509 = vdwg.mxu0
        %v3510 = vld [vmem:[%s494] sm:$0xff]
        %v3511 = vld [vmem:[%s494 + $0x8] sm:$0xff]
        %v3512 = vld [vmem:[%s5] sm:$0xff]
        %v3513 = vld [vmem:[%s5 + $0x8] sm:$0xff]
        %vm3514 = vcmask 130048
        %v3516 = vsel %vm3514, %v3510, 0
        %v3519 = vsel %vm3514, %v3511, 0
        %3521 = vmatprep.subr.mxu0 0.0
        %3522 = vmatpush1.msra.mxu0 0.0
        %3523 = vmatprep.subr.mxu0 0.0
        %3524 = vmatpush1.msra.mxu0 0.0
        %3525 = vmatprep.subr.mxu0 0.0
        %3526 = vmatpush1.msra.mxu0 0.0
        %3527 = vmatprep.subr.mxu0 0.0
        %3528 = vmatpush1.msra.mxu0 0.0
        %3529 = vmatprep.subr.mxu0 0.0
        %3530 = vmatpush1.msra.mxu0 0.0
        %3531 = vmatprep.subr.mxu0 0.0
        %3532 = vmatpush1.msra.mxu0 0.0
        %3533 = vmatprep.subr.mxu0 0.0
        %3534 = vmatpush1.msra.mxu0 0.0
        %3535 = vmatprep.subr.mxu0 0.0
        %3536 = vmatpush1.msra.mxu0 0.0
        %3537 = vmatprep.subr.mxu0 0.0
        %3538 = vmatpush1.msra.mxu0 0.0
        %3539 = vmatprep.subr.mxu0 0.0
        %3540 = vmatpush1.msra.mxu0 0.0
        %3541 = vmatprep.subr.mxu0 0.0
        %3542 = vmatpush1.msra.mxu0 0.0
        %3543 = vmatprep.subr.mxu0 0.0
        %3544 = vmatpush1.msra.mxu0 0.0
        %3545 = vmatprep.subr.mxu0 0.0
        %3546 = vmatpush1.msra.mxu0 0.0
        %3547 = vmatprep.subr.mxu0 0.0
        %3548 = vmatpush1.msra.mxu0 0.0
        %3549 = vmatprep.subr.mxu0 0.0
        %3550 = vmatpush1.msra.mxu0 %v3513
        %3551 = vmatprep.subr.mxu0 0.0
        %3552 = vmatpush1.msra.mxu0 %v3512
        %3553 = vmatprep.subr.mxu0 0.0
        %3554 = vmatpush2.msra.mxu0 0.0
        %3555 = vmatprep.subr.mxu0 0.0
        %3556 = vmatpush2.msra.mxu0 0.0
        %3557 = vmatprep.subr.mxu0 0.0
        %3558 = vmatpush2.msra.mxu0 0.0
        %3559 = vmatprep.subr.mxu0 0.0
        %3560 = vmatpush2.msra.mxu0 0.0
        %3561 = vmatprep.subr.mxu0 0.0
        %3562 = vmatpush2.msra.mxu0 0.0
        %3563 = vmatprep.subr.mxu0 0.0
        %3564 = vmatpush2.msra.mxu0 0.0
        %3565 = vmatprep.subr.mxu0 0.0
        %3566 = vmatpush2.msra.mxu0 0.0
        %3567 = vmatprep.subr.mxu0 0.0
        %3568 = vmatpush2.msra.mxu0 0.0
        %3569 = vmatprep.subr.mxu0 0.0
        %3570 = vmatpush2.msra.mxu0 0.0
        %3571 = vmatprep.subr.mxu0 0.0
        %3572 = vmatpush2.msra.mxu0 0.0
        %3573 = vmatprep.subr.mxu0 0.0
        %3574 = vmatpush2.msra.mxu0 0.0
        %3575 = vmatprep.subr.mxu0 0.0
        %3576 = vmatpush2.msra.mxu0 0.0
        %3577 = vmatprep.subr.mxu0 0.0
        %3578 = vmatpush2.msra.mxu0 0.0
        %3579 = vmatprep.subr.mxu0 0.0
        %3580 = vmatpush2.msra.mxu0 0.0
        %3581 = vmatprep.subr.mxu0 0.0
        %3582 = vmatpush2.msra.mxu0 0.0
        %3583 = vmatprep.subr.mxu0 0.0
        %3584 = vmatpush2.msra.mxu0 0.0
        %3585 = vmatprep.mubr.f32.mxu0 0.0
        %3586 = vmatmul.mubr.f32.gmra.mxu0 %v3516
        %v3587 = vpop.f32.mrf.mxu0
        %v3588 = vadd.f32 0.0, %v3587
        %v3589 = vpop.f32.mrf.mxu0
        %3590 = vmatprep.mubr.f32.mxu0 0.0
        %3591 = vmatmul.mubr.f32.gmra.mxu0 %v3519
        %v3592 = vpop.f32.mrf.mxu0
        %v3593 = vadd.f32 0.0, %v3592
        %v3594 = vpop.f32.mrf.mxu0
        %3595 = vdwg.mxu0
        %v3596 = vld [vmem:[%s8] sm:$0xff]
        %v3597 = vld [vmem:[%s8 + $0x8] sm:$0xff]
        %v3598 = vld [vmem:[%s9] sm:$0xff]
        %v3599 = vld [vmem:[%s9 + $0x8] sm:$0xff]
        %v3601 = vunpack.c.l.s4 1935823168
        %v3602 = vunpack.c.0.s8 %v3601
        %v3603 = vlaneseq
        %v3604 = vshrl.u32 %v3603, 7
        %v3605 = vsub.s32 %v3602, %v3604
        %v3606 = vrot.slane %v3588, %v3605
        %v3608 = vunpack.c.l.s4 1935823168
        %v3609 = vunpack.c.0.s8 %v3608
        %v3610 = vlaneseq
        %v3611 = vshrl.u32 %v3610, 7
        %v3612 = vsub.s32 %v3609, %v3611
        %v3613 = vrot.slane %v3593, %v3612
        %v3616 = vcombine.low %v3606, %v3613
        %v3617 = vcombine.high %v3606, %v3613
        %v3619 = vunpack.c.l.s4 1983009808
        %v3620 = vunpack.c.0.s8 %v3619
        %v3621 = vlaneseq
        %v3622 = vshrl.u32 %v3621, 7
        %v3623 = vsub.s32 %v3620, %v3622
        %v3624 = vrot.slane %v3616, %v3623
        %v3626 = vunpack.c.l.s4 1983009808
        %v3627 = vunpack.c.0.s8 %v3626
        %v3628 = vlaneseq
        %v3629 = vshrl.u32 %v3628, 7
        %v3630 = vsub.s32 %v3627, %v3629
        %v3631 = vrot.slane %v3617, %v3630
        %v3632 = vcombine.high %v3624, %v3624
        %v3633 = vcombine.high %v3631, %v3631
        %v3635 = vsel %vm3184, %v3596, 0
        %v3638 = vsel %vm3184, %v3597, 0
        %v3640 = vsel %vm3281, %v3624, 0
        %v3642 = vsel %vm3281, %v3632, 0
        %v3644 = vsel %vm3281, %v3631, 0
        %v3646 = vsel %vm3281, %v3633, 0
        %3648 = vmatprep.subr.mxu0 0.0
        %3649 = vmatpush1.msra.mxu0 0.0
        %3650 = vmatprep.subr.mxu0 0.0
        %3651 = vmatpush1.msra.mxu0 0.0
        %3652 = vmatprep.subr.mxu0 0.0
        %3653 = vmatpush1.msra.mxu0 0.0
        %3654 = vmatprep.subr.mxu0 0.0
        %3655 = vmatpush1.msra.mxu0 0.0
        %3656 = vmatprep.subr.mxu0 0.0
        %3657 = vmatpush1.msra.mxu0 0.0
        %3658 = vmatprep.subr.mxu0 0.0
        %3659 = vmatpush1.msra.mxu0 0.0
        %3660 = vmatprep.subr.mxu0 0.0
        %3661 = vmatpush1.msra.mxu0 0.0
        %3662 = vmatprep.subr.mxu0 0.0
        %3663 = vmatpush1.msra.mxu0 0.0
        %3664 = vmatprep.subr.mxu0 0.0
        %3665 = vmatpush1.msra.mxu0 0.0
        %3666 = vmatprep.subr.mxu0 0.0
        %3667 = vmatpush1.msra.mxu0 0.0
        %3668 = vmatprep.subr.mxu0 0.0
        %3669 = vmatpush1.msra.mxu0 0.0
        %3670 = vmatprep.subr.mxu0 0.0
        %3671 = vmatpush1.msra.mxu0 0.0
        %3672 = vmatprep.subr.mxu0 0.0
        %3673 = vmatpush1.msra.mxu0 0.0
        %3674 = vmatprep.subr.mxu0 0.0
        %3675 = vmatpush1.msra.mxu0 0.0
        %3676 = vmatprep.subr.mxu0 0.0
        %3677 = vmatpush1.msra.mxu0 0.0
        %3678 = vmatprep.subr.mxu0 %v3642
        %3679 = vmatpush1.msra.mxu0 %v3640
        %3680 = vmatprep.subr.mxu0 0.0
        %3681 = vmatpush2.msra.mxu0 0.0
        %3682 = vmatprep.subr.mxu0 0.0
        %3683 = vmatpush2.msra.mxu0 0.0
        %3684 = vmatprep.subr.mxu0 0.0
        %3685 = vmatpush2.msra.mxu0 0.0
        %3686 = vmatprep.subr.mxu0 0.0
        %3687 = vmatpush2.msra.mxu0 0.0
        %3688 = vmatprep.subr.mxu0 0.0
        %3689 = vmatpush2.msra.mxu0 0.0
        %3690 = vmatprep.subr.mxu0 0.0
        %3691 = vmatpush2.msra.mxu0 0.0
        %3692 = vmatprep.subr.mxu0 0.0
        %3693 = vmatpush2.msra.mxu0 0.0
        %3694 = vmatprep.subr.mxu0 0.0
        %3695 = vmatpush2.msra.mxu0 0.0
        %3696 = vmatprep.subr.mxu0 0.0
        %3697 = vmatpush2.msra.mxu0 0.0
        %3698 = vmatprep.subr.mxu0 0.0
        %3699 = vmatpush2.msra.mxu0 0.0
        %3700 = vmatprep.subr.mxu0 0.0
        %3701 = vmatpush2.msra.mxu0 0.0
        %3702 = vmatprep.subr.mxu0 0.0
        %3703 = vmatpush2.msra.mxu0 0.0
        %3704 = vmatprep.subr.mxu0 0.0
        %3705 = vmatpush2.msra.mxu0 0.0
        %3706 = vmatprep.subr.mxu0 0.0
        %3707 = vmatpush2.msra.mxu0 0.0
        %3708 = vmatprep.subr.mxu0 0.0
        %3709 = vmatpush2.msra.mxu0 0.0
        %3710 = vmatprep.subr.mxu0 0.0
        %3711 = vmatpush2.msra.mxu0 0.0
        %3712 = vmatprep.mubr.f32.mxu0 0.0
        %3713 = vmatmul.mubr.f32.gmra.mxu0 %v3635
        %v3714 = vpop.f32.mrf.mxu0
        %v3715 = vadd.f32 0.0, %v3714
        %v3716 = vpop.f32.mrf.mxu0
        %v3717 = vadd.f32 0.0, %v3716
        %3718 = vmatprep.mubr.f32.mxu0 0.0
        %3719 = vmatmul.mubr.f32.gmra.mxu0 %v3638
        %v3720 = vpop.f32.mrf.mxu0
        %v3721 = vadd.f32 0.0, %v3720
        %v3722 = vpop.f32.mrf.mxu0
        %v3723 = vadd.f32 0.0, %v3722
        %3724 = vdwg.mxu0
        %3725 = vmatprep.subr.mxu0 0.0
        %3726 = vmatpush1.msra.mxu0 0.0
        %3727 = vmatprep.subr.mxu0 0.0
        %3728 = vmatpush1.msra.mxu0 0.0
        %3729 = vmatprep.subr.mxu0 0.0
        %3730 = vmatpush1.msra.mxu0 0.0
        %3731 = vmatprep.subr.mxu0 0.0
        %3732 = vmatpush1.msra.mxu0 0.0
        %3733 = vmatprep.subr.mxu0 0.0
        %3734 = vmatpush1.msra.mxu0 0.0
        %3735 = vmatprep.subr.mxu0 0.0
        %3736 = vmatpush1.msra.mxu0 0.0
        %3737 = vmatprep.subr.mxu0 0.0
        %3738 = vmatpush1.msra.mxu0 0.0
        %3739 = vmatprep.subr.mxu0 0.0
        %3740 = vmatpush1.msra.mxu0 0.0
        %3741 = vmatprep.subr.mxu0 0.0
        %3742 = vmatpush1.msra.mxu0 0.0
        %3743 = vmatprep.subr.mxu0 0.0
        %3744 = vmatpush1.msra.mxu0 0.0
        %3745 = vmatprep.subr.mxu0 0.0
        %3746 = vmatpush1.msra.mxu0 0.0
        %3747 = vmatprep.subr.mxu0 0.0
        %3748 = vmatpush1.msra.mxu0 0.0
        %3749 = vmatprep.subr.mxu0 0.0
        %3750 = vmatpush1.msra.mxu0 0.0
        %3751 = vmatprep.subr.mxu0 0.0
        %3752 = vmatpush1.msra.mxu0 0.0
        %3753 = vmatprep.subr.mxu0 0.0
        %3754 = vmatpush1.msra.mxu0 0.0
        %3755 = vmatprep.subr.mxu0 %v3646
        %3756 = vmatpush1.msra.mxu0 %v3644
        %3757 = vmatprep.subr.mxu0 0.0
        %3758 = vmatpush2.msra.mxu0 0.0
        %3759 = vmatprep.subr.mxu0 0.0
        %3760 = vmatpush2.msra.mxu0 0.0
        %3761 = vmatprep.subr.mxu0 0.0
        %3762 = vmatpush2.msra.mxu0 0.0
        %3763 = vmatprep.subr.mxu0 0.0
        %3764 = vmatpush2.msra.mxu0 0.0
        %3765 = vmatprep.subr.mxu0 0.0
        %3766 = vmatpush2.msra.mxu0 0.0
        %3767 = vmatprep.subr.mxu0 0.0
        %3768 = vmatpush2.msra.mxu0 0.0
        %3769 = vmatprep.subr.mxu0 0.0
        %3770 = vmatpush2.msra.mxu0 0.0
        %3771 = vmatprep.subr.mxu0 0.0
        %3772 = vmatpush2.msra.mxu0 0.0
        %3773 = vmatprep.subr.mxu0 0.0
        %3774 = vmatpush2.msra.mxu0 0.0
        %3775 = vmatprep.subr.mxu0 0.0
        %3776 = vmatpush2.msra.mxu0 0.0
        %3777 = vmatprep.subr.mxu0 0.0
        %3778 = vmatpush2.msra.mxu0 0.0
        %3779 = vmatprep.subr.mxu0 0.0
        %3780 = vmatpush2.msra.mxu0 0.0
        %3781 = vmatprep.subr.mxu0 0.0
        %3782 = vmatpush2.msra.mxu0 0.0
        %3783 = vmatprep.subr.mxu0 0.0
        %3784 = vmatpush2.msra.mxu0 0.0
        %3785 = vmatprep.subr.mxu0 0.0
        %3786 = vmatpush2.msra.mxu0 0.0
        %3787 = vmatprep.subr.mxu0 0.0
        %3788 = vmatpush2.msra.mxu0 0.0
        %3789 = vmatprep.mubr.f32.mxu0 0.0
        %3790 = vmatmul.mubr.f32.gmra.mxu0 %v3635
        %v3791 = vpop.f32.mrf.mxu0
        %v3792 = vadd.f32 0.0, %v3791
        %v3793 = vpop.f32.mrf.mxu0
        %v3794 = vadd.f32 0.0, %v3793
        %3795 = vmatprep.mubr.f32.mxu0 0.0
        %3796 = vmatmul.mubr.f32.gmra.mxu0 %v3638
        %v3797 = vpop.f32.mrf.mxu0
        %v3798 = vadd.f32 0.0, %v3797
        %v3799 = vpop.f32.mrf.mxu0
        %v3800 = vadd.f32 0.0, %v3799
        %3801 = vdwg.mxu0
        %v3802 = vcombine.low %v3715, %v3792
        %v3803 = vcombine.high %v3715, %v3792
        %v3805 = vunpack.c.l.s4 1983009808
        %v3806 = vunpack.c.0.s8 %v3805
        %v3807 = vlaneseq
        %v3808 = vshrl.u32 %v3807, 7
        %v3809 = vsub.s32 %v3806, %v3808
        %v3810 = vrot.slane %v3802, %v3809
        %v3812 = vunpack.c.l.s4 1983009808
        %v3813 = vunpack.c.0.s8 %v3812
        %v3814 = vlaneseq
        %v3815 = vshrl.u32 %v3814, 7
        %v3816 = vsub.s32 %v3813, %v3815
        %v3817 = vrot.slane %v3803, %v3816
        %v3818 = vcombine.low %v3717, %v3794
        %v3819 = vcombine.high %v3717, %v3794
        %v3821 = vunpack.c.l.s4 1983009808
        %v3822 = vunpack.c.0.s8 %v3821
        %v3823 = vlaneseq
        %v3824 = vshrl.u32 %v3823, 7
        %v3825 = vsub.s32 %v3822, %v3824
        %v3826 = vrot.slane %v3818, %v3825
        %v3828 = vunpack.c.l.s4 1983009808
        %v3829 = vunpack.c.0.s8 %v3828
        %v3830 = vlaneseq
        %v3831 = vshrl.u32 %v3830, 7
        %v3832 = vsub.s32 %v3829, %v3831
        %v3833 = vrot.slane %v3819, %v3832
        %v3834 = vcombine.low %v3810, %v3826
        %v3835 = vcombine.high %v3810, %v3826
        %v3837 = vunpack.c.l.s4 1934713408
        %v3838 = vunpack.c.0.s8 %v3837
        %v3839 = vlaneseq
        %v3840 = vshrl.u32 %v3839, 7
        %v3841 = vsub.s32 %v3838, %v3840
        %v3842 = vrot.slane %v3834, %v3841
        %v3844 = vunpack.c.l.s4 1934713408
        %v3845 = vunpack.c.0.s8 %v3844
        %v3846 = vlaneseq
        %v3847 = vshrl.u32 %v3846, 7
        %v3848 = vsub.s32 %v3845, %v3847
        %v3849 = vrot.slane %v3835, %v3848
        %v3850 = vcombine.low %v3817, %v3833
        %v3851 = vcombine.high %v3817, %v3833
        %v3853 = vunpack.c.l.s4 1934713408
        %v3854 = vunpack.c.0.s8 %v3853
        %v3855 = vlaneseq
        %v3856 = vshrl.u32 %v3855, 7
        %v3857 = vsub.s32 %v3854, %v3856
        %v3858 = vrot.slane %v3850, %v3857
        %v3860 = vunpack.c.l.s4 1934713408
        %v3861 = vunpack.c.0.s8 %v3860
        %v3862 = vlaneseq
        %v3863 = vshrl.u32 %v3862, 7
        %v3864 = vsub.s32 %v3861, %v3863
        %v3865 = vrot.slane %v3851, %v3864
        %v3866 = vcombine.high %v3842, 0.0
        %v3867 = vcombine.high %v3849, 0.0
        %v3868 = vcombine.high %v3858, 0.0
        %v3869 = vcombine.high %v3865, 0.0
        %v3870 = vcombine.low %v3721, %v3798
        %v3871 = vcombine.high %v3721, %v3798
        %v3873 = vunpack.c.l.s4 1983009808
        %v3874 = vunpack.c.0.s8 %v3873
        %v3875 = vlaneseq
        %v3876 = vshrl.u32 %v3875, 7
        %v3877 = vsub.s32 %v3874, %v3876
        %v3878 = vrot.slane %v3870, %v3877
        %v3880 = vunpack.c.l.s4 1983009808
        %v3881 = vunpack.c.0.s8 %v3880
        %v3882 = vlaneseq
        %v3883 = vshrl.u32 %v3882, 7
        %v3884 = vsub.s32 %v3881, %v3883
        %v3885 = vrot.slane %v3871, %v3884
        %v3886 = vcombine.low %v3723, %v3800
        %v3887 = vcombine.high %v3723, %v3800
        %v3889 = vunpack.c.l.s4 1983009808
        %v3890 = vunpack.c.0.s8 %v3889
        %v3891 = vlaneseq
        %v3892 = vshrl.u32 %v3891, 7
        %v3893 = vsub.s32 %v3890, %v3892
        %v3894 = vrot.slane %v3886, %v3893
        %v3896 = vunpack.c.l.s4 1983009808
        %v3897 = vunpack.c.0.s8 %v3896
        %v3898 = vlaneseq
        %v3899 = vshrl.u32 %v3898, 7
        %v3900 = vsub.s32 %v3897, %v3899
        %v3901 = vrot.slane %v3887, %v3900
        %v3902 = vcombine.low %v3878, %v3894
        %v3903 = vcombine.high %v3878, %v3894
        %v3905 = vunpack.c.l.s4 1934713408
        %v3906 = vunpack.c.0.s8 %v3905
        %v3907 = vlaneseq
        %v3908 = vshrl.u32 %v3907, 7
        %v3909 = vsub.s32 %v3906, %v3908
        %v3910 = vrot.slane %v3902, %v3909
        %v3912 = vunpack.c.l.s4 1934713408
        %v3913 = vunpack.c.0.s8 %v3912
        %v3914 = vlaneseq
        %v3915 = vshrl.u32 %v3914, 7
        %v3916 = vsub.s32 %v3913, %v3915
        %v3917 = vrot.slane %v3903, %v3916
        %v3918 = vcombine.low %v3885, %v3901
        %v3919 = vcombine.high %v3885, %v3901
        %v3921 = vunpack.c.l.s4 1934713408
        %v3922 = vunpack.c.0.s8 %v3921
        %v3923 = vlaneseq
        %v3924 = vshrl.u32 %v3923, 7
        %v3925 = vsub.s32 %v3922, %v3924
        %v3926 = vrot.slane %v3918, %v3925
        %v3928 = vunpack.c.l.s4 1934713408
        %v3929 = vunpack.c.0.s8 %v3928
        %v3930 = vlaneseq
        %v3931 = vshrl.u32 %v3930, 7
        %v3932 = vsub.s32 %v3929, %v3931
        %v3933 = vrot.slane %v3919, %v3932
        %v3934 = vcombine.high %v3910, 0.0
        %v3935 = vcombine.high %v3917, 0.0
        %v3936 = vcombine.high %v3926, 0.0
        %v3937 = vcombine.high %v3933, 0.0
        %v3938 = vcombine.low %v3842, %v3849
        %v3940 = vunpack.c.l.s4 1983009808
        %v3941 = vunpack.c.0.s8 %v3940
        %v3942 = vlaneseq
        %v3943 = vshrl.u32 %v3942, 7
        %v3944 = vsub.s32 %v3941, %v3943
        %v3945 = vrot.slane %v3938, %v3944
        %v3946 = vcombine.low %v3866, %v3867
        %v3948 = vunpack.c.l.s4 1983009808
        %v3949 = vunpack.c.0.s8 %v3948
        %v3950 = vlaneseq
        %v3951 = vshrl.u32 %v3950, 7
        %v3952 = vsub.s32 %v3949, %v3951
        %v3953 = vrot.slane %v3946, %v3952
        %v3954 = vcombine.low %v3858, %v3865
        %v3956 = vunpack.c.l.s4 1983009808
        %v3957 = vunpack.c.0.s8 %v3956
        %v3958 = vlaneseq
        %v3959 = vshrl.u32 %v3958, 7
        %v3960 = vsub.s32 %v3957, %v3959
        %v3961 = vrot.slane %v3954, %v3960
        %v3962 = vcombine.low %v3868, %v3869
        %v3964 = vunpack.c.l.s4 1983009808
        %v3965 = vunpack.c.0.s8 %v3964
        %v3966 = vlaneseq
        %v3967 = vshrl.u32 %v3966, 7
        %v3968 = vsub.s32 %v3965, %v3967
        %v3969 = vrot.slane %v3962, %v3968
        %v3970 = vcombine.low %v3945, %v3953
        %v3971 = vcombine.high %v3945, %v3953
        %v3973 = vunpack.c.l.s4 1934713408
        %v3974 = vunpack.c.0.s8 %v3973
        %v3975 = vlaneseq
        %v3976 = vshrl.u32 %v3975, 7
        %v3977 = vsub.s32 %v3974, %v3976
        %v3978 = vrot.slane %v3970, %v3977
        %v3980 = vunpack.c.l.s4 1934713408
        %v3981 = vunpack.c.0.s8 %v3980
        %v3982 = vlaneseq
        %v3983 = vshrl.u32 %v3982, 7
        %v3984 = vsub.s32 %v3981, %v3983
        %v3985 = vrot.slane %v3971, %v3984
        %v3986 = vcombine.low %v3961, %v3969
        %v3987 = vcombine.high %v3961, %v3969
        %v3989 = vunpack.c.l.s4 1934713408
        %v3990 = vunpack.c.0.s8 %v3989
        %v3991 = vlaneseq
        %v3992 = vshrl.u32 %v3991, 7
        %v3993 = vsub.s32 %v3990, %v3992
        %v3994 = vrot.slane %v3986, %v3993
        %v3996 = vunpack.c.l.s4 1934713408
        %v3997 = vunpack.c.0.s8 %v3996
        %v3998 = vlaneseq
        %v3999 = vshrl.u32 %v3998, 7
        %v4000 = vsub.s32 %v3997, %v3999
        %v4001 = vrot.slane %v3987, %v4000
        %v4002 = vcombine.low %v3978, %v3994
        %v4003 = vcombine.high %v3978, %v3994
        %v4004 = vcombine.low %v3985, %v4001
        %v4005 = vcombine.high %v3985, %v4001
        %v4006 = vcombine.low %v3910, %v3917
        %v4008 = vunpack.c.l.s4 1983009808
        %v4009 = vunpack.c.0.s8 %v4008
        %v4010 = vlaneseq
        %v4011 = vshrl.u32 %v4010, 7
        %v4012 = vsub.s32 %v4009, %v4011
        %v4013 = vrot.slane %v4006, %v4012
        %v4014 = vcombine.low %v3934, %v3935
        %v4016 = vunpack.c.l.s4 1983009808
        %v4017 = vunpack.c.0.s8 %v4016
        %v4018 = vlaneseq
        %v4019 = vshrl.u32 %v4018, 7
        %v4020 = vsub.s32 %v4017, %v4019
        %v4021 = vrot.slane %v4014, %v4020
        %v4022 = vcombine.low %v3926, %v3933
        %v4024 = vunpack.c.l.s4 1983009808
        %v4025 = vunpack.c.0.s8 %v4024
        %v4026 = vlaneseq
        %v4027 = vshrl.u32 %v4026, 7
        %v4028 = vsub.s32 %v4025, %v4027
        %v4029 = vrot.slane %v4022, %v4028
        %v4030 = vcombine.low %v3936, %v3937
        %v4032 = vunpack.c.l.s4 1983009808
        %v4033 = vunpack.c.0.s8 %v4032
        %v4034 = vlaneseq
        %v4035 = vshrl.u32 %v4034, 7
        %v4036 = vsub.s32 %v4033, %v4035
        %v4037 = vrot.slane %v4030, %v4036
        %v4038 = vcombine.low %v4013, %v4021
        %v4039 = vcombine.high %v4013, %v4021
        %v4041 = vunpack.c.l.s4 1934713408
        %v4042 = vunpack.c.0.s8 %v4041
        %v4043 = vlaneseq
        %v4044 = vshrl.u32 %v4043, 7
        %v4045 = vsub.s32 %v4042, %v4044
        %v4046 = vrot.slane %v4038, %v4045
        %v4048 = vunpack.c.l.s4 1934713408
        %v4049 = vunpack.c.0.s8 %v4048
        %v4050 = vlaneseq
        %v4051 = vshrl.u32 %v4050, 7
        %v4052 = vsub.s32 %v4049, %v4051
        %v4053 = vrot.slane %v4039, %v4052
        %v4054 = vcombine.low %v4029, %v4037
        %v4055 = vcombine.high %v4029, %v4037
        %v4057 = vunpack.c.l.s4 1934713408
        %v4058 = vunpack.c.0.s8 %v4057
        %v4059 = vlaneseq
        %v4060 = vshrl.u32 %v4059, 7
        %v4061 = vsub.s32 %v4058, %v4060
        %v4062 = vrot.slane %v4054, %v4061
        %v4064 = vunpack.c.l.s4 1934713408
        %v4065 = vunpack.c.0.s8 %v4064
        %v4066 = vlaneseq
        %v4067 = vshrl.u32 %v4066, 7
        %v4068 = vsub.s32 %v4065, %v4067
        %v4069 = vrot.slane %v4055, %v4068
        %v4070 = vcombine.low %v4046, %v4062
        %v4071 = vcombine.high %v4046, %v4062
        %v4072 = vcombine.low %v4053, %v4069
        %v4073 = vcombine.high %v4053, %v4069
        %v4074 = vcombine.low %v4002, %v4004
        %v4075 = vcombine.high %v4002, %v4004
        %v4077 = vunpack.c.l.s4 1983009808
        %v4078 = vunpack.c.0.s8 %v4077
        %v4079 = vlaneseq
        %v4080 = vshrl.u32 %v4079, 7
        %v4081 = vsub.s32 %v4078, %v4080
        %v4082 = vrot.slane %v4074, %v4081
        %v4084 = vunpack.c.l.s4 1983009808
        %v4085 = vunpack.c.0.s8 %v4084
        %v4086 = vlaneseq
        %v4087 = vshrl.u32 %v4086, 7
        %v4088 = vsub.s32 %v4085, %v4087
        %v4089 = vrot.slane %v4075, %v4088
        %v4090 = vcombine.low %v4003, %v4005
        %v4091 = vcombine.high %v4003, %v4005
        %v4093 = vunpack.c.l.s4 1983009808
        %v4094 = vunpack.c.0.s8 %v4093
        %v4095 = vlaneseq
        %v4096 = vshrl.u32 %v4095, 7
        %v4097 = vsub.s32 %v4094, %v4096
        %v4098 = vrot.slane %v4090, %v4097
        %v4100 = vunpack.c.l.s4 1983009808
        %v4101 = vunpack.c.0.s8 %v4100
        %v4102 = vlaneseq
        %v4103 = vshrl.u32 %v4102, 7
        %v4104 = vsub.s32 %v4101, %v4103
        %v4105 = vrot.slane %v4091, %v4104
        %v4106 = vcombine.low %v4082, %v4098
        %v4107 = vcombine.high %v4082, %v4098
        %v4109 = vunpack.c.l.s4 1934713408
        %v4110 = vunpack.c.0.s8 %v4109
        %v4111 = vlaneseq
        %v4112 = vshrl.u32 %v4111, 7
        %v4113 = vsub.s32 %v4110, %v4112
        %v4114 = vrot.slane %v4106, %v4113
        %v4116 = vunpack.c.l.s4 1934713408
        %v4117 = vunpack.c.0.s8 %v4116
        %v4118 = vlaneseq
        %v4119 = vshrl.u32 %v4118, 7
        %v4120 = vsub.s32 %v4117, %v4119
        %v4121 = vrot.slane %v4107, %v4120
        %v4122 = vcombine.low %v4089, %v4105
        %v4123 = vcombine.high %v4089, %v4105
        %v4125 = vunpack.c.l.s4 1934713408
        %v4126 = vunpack.c.0.s8 %v4125
        %v4127 = vlaneseq
        %v4128 = vshrl.u32 %v4127, 7
        %v4129 = vsub.s32 %v4126, %v4128
        %v4130 = vrot.slane %v4122, %v4129
        %v4132 = vunpack.c.l.s4 1934713408
        %v4133 = vunpack.c.0.s8 %v4132
        %v4134 = vlaneseq
        %v4135 = vshrl.u32 %v4134, 7
        %v4136 = vsub.s32 %v4133, %v4135
        %v4137 = vrot.slane %v4123, %v4136
        %v4138 = vcombine.high %v4114, 0.0
        %v4139 = vcombine.high %v4121, 0.0
        %v4140 = vcombine.high %v4130, 0.0
        %v4141 = vcombine.high %v4137, 0.0
        %v4142 = vcombine.low %v4070, %v4072
        %v4143 = vcombine.high %v4070, %v4072
        %v4145 = vunpack.c.l.s4 1983009808
        %v4146 = vunpack.c.0.s8 %v4145
        %v4147 = vlaneseq
        %v4148 = vshrl.u32 %v4147, 7
        %v4149 = vsub.s32 %v4146, %v4148
        %v4150 = vrot.slane %v4142, %v4149
        %v4152 = vunpack.c.l.s4 1983009808
        %v4153 = vunpack.c.0.s8 %v4152
        %v4154 = vlaneseq
        %v4155 = vshrl.u32 %v4154, 7
        %v4156 = vsub.s32 %v4153, %v4155
        %v4157 = vrot.slane %v4143, %v4156
        %v4158 = vcombine.low %v4071, %v4073
        %v4159 = vcombine.high %v4071, %v4073
        %v4161 = vunpack.c.l.s4 1983009808
        %v4162 = vunpack.c.0.s8 %v4161
        %v4163 = vlaneseq
        %v4164 = vshrl.u32 %v4163, 7
        %v4165 = vsub.s32 %v4162, %v4164
        %v4166 = vrot.slane %v4158, %v4165
        %v4168 = vunpack.c.l.s4 1983009808
        %v4169 = vunpack.c.0.s8 %v4168
        %v4170 = vlaneseq
        %v4171 = vshrl.u32 %v4170, 7
        %v4172 = vsub.s32 %v4169, %v4171
        %v4173 = vrot.slane %v4159, %v4172
        %v4174 = vcombine.low %v4150, %v4166
        %v4175 = vcombine.high %v4150, %v4166
        %v4177 = vunpack.c.l.s4 1934713408
        %v4178 = vunpack.c.0.s8 %v4177
        %v4179 = vlaneseq
        %v4180 = vshrl.u32 %v4179, 7
        %v4181 = vsub.s32 %v4178, %v4180
        %v4182 = vrot.slane %v4174, %v4181
        %v4184 = vunpack.c.l.s4 1934713408
        %v4185 = vunpack.c.0.s8 %v4184
        %v4186 = vlaneseq
        %v4187 = vshrl.u32 %v4186, 7
        %v4188 = vsub.s32 %v4185, %v4187
        %v4189 = vrot.slane %v4175, %v4188
        %v4190 = vcombine.low %v4157, %v4173
        %v4191 = vcombine.high %v4157, %v4173
        %v4193 = vunpack.c.l.s4 1934713408
        %v4194 = vunpack.c.0.s8 %v4193
        %v4195 = vlaneseq
        %v4196 = vshrl.u32 %v4195, 7
        %v4197 = vsub.s32 %v4194, %v4196
        %v4198 = vrot.slane %v4190, %v4197
        %v4200 = vunpack.c.l.s4 1934713408
        %v4201 = vunpack.c.0.s8 %v4200
        %v4202 = vlaneseq
        %v4203 = vshrl.u32 %v4202, 7
        %v4204 = vsub.s32 %v4201, %v4203
        %v4205 = vrot.slane %v4191, %v4204
        %v4206 = vcombine.high %v4182, 0.0
        %v4207 = vcombine.high %v4189, 0.0
        %v4208 = vcombine.high %v4198, 0.0
        %v4209 = vcombine.high %v4205, 0.0
        %v4211 = vsel %vm3184, %v3598, 0
        %v4214 = vsel %vm3184, %v3599, 0
        %v4217 = vsel %vm3281, %v4114, 0
        %v4220 = vsel %vm3281, %v4138, 0
        %v4223 = vsel %vm3281, %v4121, 0
        %v4226 = vsel %vm3281, %v4139, 0
        %v4229 = vsel %vm3281, %v4130, 0
        %v4232 = vsel %vm3281, %v4140, 0
        %v4235 = vsel %vm3281, %v4137, 0
        %v4238 = vsel %vm3281, %v4141, 0
        %v4241 = vsel %vm3281, %v4182, 0
        %v4244 = vsel %vm3281, %v4206, 0
        %v4247 = vsel %vm3281, %v4189, 0
        %v4250 = vsel %vm3281, %v4207, 0
        %v4253 = vsel %vm3281, %v4198, 0
        %v4256 = vsel %vm3281, %v4208, 0
        %v4259 = vsel %vm3281, %v4205, 0
        %v4262 = vsel %vm3281, %v4209, 0
        %4264 = vmatprep.subr.mxu0 0.0
        %4265 = vmatpush1.msra.mxu0 0.0
        %4266 = vmatprep.subr.mxu0 0.0
        %4267 = vmatpush1.msra.mxu0 0.0
        %4268 = vmatprep.subr.mxu0 0.0
        %4269 = vmatpush1.msra.mxu0 0.0
        %4270 = vmatprep.subr.mxu0 0.0
        %4271 = vmatpush1.msra.mxu0 0.0
        %4272 = vmatprep.subr.mxu0 0.0
        %4273 = vmatpush1.msra.mxu0 0.0
        %4274 = vmatprep.subr.mxu0 0.0
        %4275 = vmatpush1.msra.mxu0 0.0
        %4276 = vmatprep.subr.mxu0 0.0
        %4277 = vmatpush1.msra.mxu0 0.0
        %4278 = vmatprep.subr.mxu0 0.0
        %4279 = vmatpush1.msra.mxu0 0.0
        %4280 = vmatprep.subr.mxu0 0.0
        %4281 = vmatpush1.msra.mxu0 0.0
        %4282 = vmatprep.subr.mxu0 0.0
        %4283 = vmatpush1.msra.mxu0 0.0
        %4284 = vmatprep.subr.mxu0 0.0
        %4285 = vmatpush1.msra.mxu0 0.0
        %4286 = vmatprep.subr.mxu0 0.0
        %4287 = vmatpush1.msra.mxu0 0.0
        %4288 = vmatprep.subr.mxu0 0.0
        %4289 = vmatpush1.msra.mxu0 0.0
        %4290 = vmatprep.subr.mxu0 0.0
        %4291 = vmatpush1.msra.mxu0 0.0
        %4292 = vmatprep.subr.mxu0 0.0
        %4293 = vmatpush1.msra.mxu0 0.0
        %4294 = vmatprep.subr.mxu0 %v4220
        %4295 = vmatpush1.msra.mxu0 %v4217
        %4296 = vmatprep.subr.mxu0 0.0
        %4297 = vmatpush2.msra.mxu0 0.0
        %4298 = vmatprep.subr.mxu0 0.0
        %4299 = vmatpush2.msra.mxu0 0.0
        %4300 = vmatprep.subr.mxu0 0.0
        %4301 = vmatpush2.msra.mxu0 0.0
        %4302 = vmatprep.subr.mxu0 0.0
        %4303 = vmatpush2.msra.mxu0 0.0
        %4304 = vmatprep.subr.mxu0 0.0
        %4305 = vmatpush2.msra.mxu0 0.0
        %4306 = vmatprep.subr.mxu0 0.0
        %4307 = vmatpush2.msra.mxu0 0.0
        %4308 = vmatprep.subr.mxu0 0.0
        %4309 = vmatpush2.msra.mxu0 0.0
        %4310 = vmatprep.subr.mxu0 0.0
        %4311 = vmatpush2.msra.mxu0 0.0
        %4312 = vmatprep.subr.mxu0 0.0
        %4313 = vmatpush2.msra.mxu0 0.0
        %4314 = vmatprep.subr.mxu0 0.0
        %4315 = vmatpush2.msra.mxu0 0.0
        %4316 = vmatprep.subr.mxu0 0.0
        %4317 = vmatpush2.msra.mxu0 0.0
        %4318 = vmatprep.subr.mxu0 0.0
        %4319 = vmatpush2.msra.mxu0 0.0
        %4320 = vmatprep.subr.mxu0 0.0
        %4321 = vmatpush2.msra.mxu0 0.0
        %4322 = vmatprep.subr.mxu0 0.0
        %4323 = vmatpush2.msra.mxu0 0.0
        %4324 = vmatprep.subr.mxu0 0.0
        %4325 = vmatpush2.msra.mxu0 0.0
        %4326 = vmatprep.subr.mxu0 0.0
        %4327 = vmatpush2.msra.mxu0 0.0
        %4328 = vmatprep.mubr.f32.mxu0 0.0
        %4329 = vmatmul.mubr.f32.gmra.mxu0 %v4211
        %v4330 = vpop.f32.mrf.mxu0
        %v4331 = vadd.f32 0.0, %v4330
        %v4332 = vpop.f32.mrf.mxu0
        %v4333 = vadd.f32 0.0, %v4332
        %4334 = vmatprep.mubr.f32.mxu0 0.0
        %4335 = vmatmul.mubr.f32.gmra.mxu0 %v4214
        %v4336 = vpop.f32.mrf.mxu0
        %v4337 = vadd.f32 0.0, %v4336
        %v4338 = vpop.f32.mrf.mxu0
        %v4339 = vadd.f32 0.0, %v4338
        %4340 = vdwg.mxu0
        %4341 = vmatprep.subr.mxu0 0.0
        %4342 = vmatpush1.msra.mxu0 0.0
        %4343 = vmatprep.subr.mxu0 0.0
        %4344 = vmatpush1.msra.mxu0 0.0
        %4345 = vmatprep.subr.mxu0 0.0
        %4346 = vmatpush1.msra.mxu0 0.0
        %4347 = vmatprep.subr.mxu0 0.0
        %4348 = vmatpush1.msra.mxu0 0.0
        %4349 = vmatprep.subr.mxu0 0.0
        %4350 = vmatpush1.msra.mxu0 0.0
        %4351 = vmatprep.subr.mxu0 0.0
        %4352 = vmatpush1.msra.mxu0 0.0
        %4353 = vmatprep.subr.mxu0 0.0
        %4354 = vmatpush1.msra.mxu0 0.0
        %4355 = vmatprep.subr.mxu0 0.0
        %4356 = vmatpush1.msra.mxu0 0.0
        %4357 = vmatprep.subr.mxu0 0.0
        %4358 = vmatpush1.msra.mxu0 0.0
        %4359 = vmatprep.subr.mxu0 0.0
        %4360 = vmatpush1.msra.mxu0 0.0
        %4361 = vmatprep.subr.mxu0 0.0
        %4362 = vmatpush1.msra.mxu0 0.0
        %4363 = vmatprep.subr.mxu0 0.0
        %4364 = vmatpush1.msra.mxu0 0.0
        %4365 = vmatprep.subr.mxu0 0.0
        %4366 = vmatpush1.msra.mxu0 0.0
        %4367 = vmatprep.subr.mxu0 0.0
        %4368 = vmatpush1.msra.mxu0 0.0
        %4369 = vmatprep.subr.mxu0 0.0
        %4370 = vmatpush1.msra.mxu0 0.0
        %4371 = vmatprep.subr.mxu0 %v4226
        %4372 = vmatpush1.msra.mxu0 %v4223
        %4373 = vmatprep.subr.mxu0 0.0
        %4374 = vmatpush2.msra.mxu0 0.0
        %4375 = vmatprep.subr.mxu0 0.0
        %4376 = vmatpush2.msra.mxu0 0.0
        %4377 = vmatprep.subr.mxu0 0.0
        %4378 = vmatpush2.msra.mxu0 0.0
        %4379 = vmatprep.subr.mxu0 0.0
        %4380 = vmatpush2.msra.mxu0 0.0
        %4381 = vmatprep.subr.mxu0 0.0
        %4382 = vmatpush2.msra.mxu0 0.0
        %4383 = vmatprep.subr.mxu0 0.0
        %4384 = vmatpush2.msra.mxu0 0.0
        %4385 = vmatprep.subr.mxu0 0.0
        %4386 = vmatpush2.msra.mxu0 0.0
        %4387 = vmatprep.subr.mxu0 0.0
        %4388 = vmatpush2.msra.mxu0 0.0
        %4389 = vmatprep.subr.mxu0 0.0
        %4390 = vmatpush2.msra.mxu0 0.0
        %4391 = vmatprep.subr.mxu0 0.0
        %4392 = vmatpush2.msra.mxu0 0.0
        %4393 = vmatprep.subr.mxu0 0.0
        %4394 = vmatpush2.msra.mxu0 0.0
        %4395 = vmatprep.subr.mxu0 0.0
        %4396 = vmatpush2.msra.mxu0 0.0
        %4397 = vmatprep.subr.mxu0 0.0
        %4398 = vmatpush2.msra.mxu0 0.0
        %4399 = vmatprep.subr.mxu0 0.0
        %4400 = vmatpush2.msra.mxu0 0.0
        %4401 = vmatprep.subr.mxu0 0.0
        %4402 = vmatpush2.msra.mxu0 0.0
        %4403 = vmatprep.subr.mxu0 0.0
        %4404 = vmatpush2.msra.mxu0 0.0
        %4405 = vmatprep.mubr.f32.mxu0 0.0
        %4406 = vmatmul.mubr.f32.gmra.mxu0 %v4211
        %v4407 = vpop.f32.mrf.mxu0
        %v4408 = vadd.f32 0.0, %v4407
        %v4409 = vpop.f32.mrf.mxu0
        %v4410 = vadd.f32 0.0, %v4409
        %4411 = vmatprep.mubr.f32.mxu0 0.0
        %4412 = vmatmul.mubr.f32.gmra.mxu0 %v4214
        %v4413 = vpop.f32.mrf.mxu0
        %v4414 = vadd.f32 0.0, %v4413
        %v4415 = vpop.f32.mrf.mxu0
        %v4416 = vadd.f32 0.0, %v4415
        %4417 = vdwg.mxu0
        %4418 = vmatprep.subr.mxu0 0.0
        %4419 = vmatpush1.msra.mxu0 0.0
        %4420 = vmatprep.subr.mxu0 0.0
        %4421 = vmatpush1.msra.mxu0 0.0
        %4422 = vmatprep.subr.mxu0 0.0
        %4423 = vmatpush1.msra.mxu0 0.0
        %4424 = vmatprep.subr.mxu0 0.0
        %4425 = vmatpush1.msra.mxu0 0.0
        %4426 = vmatprep.subr.mxu0 0.0
        %4427 = vmatpush1.msra.mxu0 0.0
        %4428 = vmatprep.subr.mxu0 0.0
        %4429 = vmatpush1.msra.mxu0 0.0
        %4430 = vmatprep.subr.mxu0 0.0
        %4431 = vmatpush1.msra.mxu0 0.0
        %4432 = vmatprep.subr.mxu0 0.0
        %4433 = vmatpush1.msra.mxu0 0.0
        %4434 = vmatprep.subr.mxu0 0.0
        %4435 = vmatpush1.msra.mxu0 0.0
        %4436 = vmatprep.subr.mxu0 0.0
        %4437 = vmatpush1.msra.mxu0 0.0
        %4438 = vmatprep.subr.mxu0 0.0
        %4439 = vmatpush1.msra.mxu0 0.0
        %4440 = vmatprep.subr.mxu0 0.0
        %4441 = vmatpush1.msra.mxu0 0.0
        %4442 = vmatprep.subr.mxu0 0.0
        %4443 = vmatpush1.msra.mxu0 0.0
        %4444 = vmatprep.subr.mxu0 0.0
        %4445 = vmatpush1.msra.mxu0 0.0
        %4446 = vmatprep.subr.mxu0 0.0
        %4447 = vmatpush1.msra.mxu0 0.0
        %4448 = vmatprep.subr.mxu0 %v4232
        %4449 = vmatpush1.msra.mxu0 %v4229
        %4450 = vmatprep.subr.mxu0 0.0
        %4451 = vmatpush2.msra.mxu0 0.0
        %4452 = vmatprep.subr.mxu0 0.0
        %4453 = vmatpush2.msra.mxu0 0.0
        %4454 = vmatprep.subr.mxu0 0.0
        %4455 = vmatpush2.msra.mxu0 0.0
        %4456 = vmatprep.subr.mxu0 0.0
        %4457 = vmatpush2.msra.mxu0 0.0
        %4458 = vmatprep.subr.mxu0 0.0
        %4459 = vmatpush2.msra.mxu0 0.0
        %4460 = vmatprep.subr.mxu0 0.0
        %4461 = vmatpush2.msra.mxu0 0.0
        %4462 = vmatprep.subr.mxu0 0.0
        %4463 = vmatpush2.msra.mxu0 0.0
        %4464 = vmatprep.subr.mxu0 0.0
        %4465 = vmatpush2.msra.mxu0 0.0
        %4466 = vmatprep.subr.mxu0 0.0
        %4467 = vmatpush2.msra.mxu0 0.0
        %4468 = vmatprep.subr.mxu0 0.0
        %4469 = vmatpush2.msra.mxu0 0.0
        %4470 = vmatprep.subr.mxu0 0.0
        %4471 = vmatpush2.msra.mxu0 0.0
        %4472 = vmatprep.subr.mxu0 0.0
        %4473 = vmatpush2.msra.mxu0 0.0
        %4474 = vmatprep.subr.mxu0 0.0
        %4475 = vmatpush2.msra.mxu0 0.0
        %4476 = vmatprep.subr.mxu0 0.0
        %4477 = vmatpush2.msra.mxu0 0.0
        %4478 = vmatprep.subr.mxu0 0.0
        %4479 = vmatpush2.msra.mxu0 0.0
        %4480 = vmatprep.subr.mxu0 0.0
        %4481 = vmatpush2.msra.mxu0 0.0
        %4482 = vmatprep.mubr.f32.mxu0 0.0
        %4483 = vmatmul.mubr.f32.gmra.mxu0 %v4211
        %v4484 = vpop.f32.mrf.mxu0
        %v4485 = vadd.f32 0.0, %v4484
        %v4486 = vpop.f32.mrf.mxu0
        %v4487 = vadd.f32 0.0, %v4486
        %4488 = vmatprep.mubr.f32.mxu0 0.0
        %4489 = vmatmul.mubr.f32.gmra.mxu0 %v4214
        %v4490 = vpop.f32.mrf.mxu0
        %v4491 = vadd.f32 0.0, %v4490
        %v4492 = vpop.f32.mrf.mxu0
        %v4493 = vadd.f32 0.0, %v4492
        %4494 = vdwg.mxu0
        %4495 = vmatprep.subr.mxu0 0.0
        %4496 = vmatpush1.msra.mxu0 0.0
        %4497 = vmatprep.subr.mxu0 0.0
        %4498 = vmatpush1.msra.mxu0 0.0
        %4499 = vmatprep.subr.mxu0 0.0
        %4500 = vmatpush1.msra.mxu0 0.0
        %4501 = vmatprep.subr.mxu0 0.0
        %4502 = vmatpush1.msra.mxu0 0.0
        %4503 = vmatprep.subr.mxu0 0.0
        %4504 = vmatpush1.msra.mxu0 0.0
        %4505 = vmatprep.subr.mxu0 0.0
        %4506 = vmatpush1.msra.mxu0 0.0
        %4507 = vmatprep.subr.mxu0 0.0
        %4508 = vmatpush1.msra.mxu0 0.0
        %4509 = vmatprep.subr.mxu0 0.0
        %4510 = vmatpush1.msra.mxu0 0.0
        %4511 = vmatprep.subr.mxu0 0.0
        %4512 = vmatpush1.msra.mxu0 0.0
        %4513 = vmatprep.subr.mxu0 0.0
        %4514 = vmatpush1.msra.mxu0 0.0
        %4515 = vmatprep.subr.mxu0 0.0
        %4516 = vmatpush1.msra.mxu0 0.0
        %4517 = vmatprep.subr.mxu0 0.0
        %4518 = vmatpush1.msra.mxu0 0.0
        %4519 = vmatprep.subr.mxu0 0.0
        %4520 = vmatpush1.msra.mxu0 0.0
        %4521 = vmatprep.subr.mxu0 0.0
        %4522 = vmatpush1.msra.mxu0 0.0
        %4523 = vmatprep.subr.mxu0 0.0
        %4524 = vmatpush1.msra.mxu0 0.0
        %4525 = vmatprep.subr.mxu0 %v4238
        %4526 = vmatpush1.msra.mxu0 %v4235
        %4527 = vmatprep.subr.mxu0 0.0
        %4528 = vmatpush2.msra.mxu0 0.0
        %4529 = vmatprep.subr.mxu0 0.0
        %4530 = vmatpush2.msra.mxu0 0.0
        %4531 = vmatprep.subr.mxu0 0.0
        %4532 = vmatpush2.msra.mxu0 0.0
        %4533 = vmatprep.subr.mxu0 0.0
        %4534 = vmatpush2.msra.mxu0 0.0
        %4535 = vmatprep.subr.mxu0 0.0
        %4536 = vmatpush2.msra.mxu0 0.0
        %4537 = vmatprep.subr.mxu0 0.0
        %4538 = vmatpush2.msra.mxu0 0.0
        %4539 = vmatprep.subr.mxu0 0.0
        %4540 = vmatpush2.msra.mxu0 0.0
        %4541 = vmatprep.subr.mxu0 0.0
        %4542 = vmatpush2.msra.mxu0 0.0
        %4543 = vmatprep.subr.mxu0 0.0
        %4544 = vmatpush2.msra.mxu0 0.0
        %4545 = vmatprep.subr.mxu0 0.0
        %4546 = vmatpush2.msra.mxu0 0.0
        %4547 = vmatprep.subr.mxu0 0.0
        %4548 = vmatpush2.msra.mxu0 0.0
        %4549 = vmatprep.subr.mxu0 0.0
        %4550 = vmatpush2.msra.mxu0 0.0
        %4551 = vmatprep.subr.mxu0 0.0
        %4552 = vmatpush2.msra.mxu0 0.0
        %4553 = vmatprep.subr.mxu0 0.0
        %4554 = vmatpush2.msra.mxu0 0.0
        %4555 = vmatprep.subr.mxu0 0.0
        %4556 = vmatpush2.msra.mxu0 0.0
        %4557 = vmatprep.subr.mxu0 0.0
        %4558 = vmatpush2.msra.mxu0 0.0
        %4559 = vmatprep.mubr.f32.mxu0 0.0
        %4560 = vmatmul.mubr.f32.gmra.mxu0 %v4211
        %v4561 = vpop.f32.mrf.mxu0
        %v4562 = vadd.f32 0.0, %v4561
        %v4563 = vpop.f32.mrf.mxu0
        %v4564 = vadd.f32 0.0, %v4563
        %4565 = vmatprep.mubr.f32.mxu0 0.0
        %4566 = vmatmul.mubr.f32.gmra.mxu0 %v4214
        %v4567 = vpop.f32.mrf.mxu0
        %v4568 = vadd.f32 0.0, %v4567
        %v4569 = vpop.f32.mrf.mxu0
        %v4570 = vadd.f32 0.0, %v4569
        %4571 = vdwg.mxu0
        %4572 = vmatprep.subr.mxu0 0.0
        %4573 = vmatpush1.msra.mxu0 0.0
        %4574 = vmatprep.subr.mxu0 0.0
        %4575 = vmatpush1.msra.mxu0 0.0
        %4576 = vmatprep.subr.mxu0 0.0
        %4577 = vmatpush1.msra.mxu0 0.0
        %4578 = vmatprep.subr.mxu0 0.0
        %4579 = vmatpush1.msra.mxu0 0.0
        %4580 = vmatprep.subr.mxu0 0.0
        %4581 = vmatpush1.msra.mxu0 0.0
        %4582 = vmatprep.subr.mxu0 0.0
        %4583 = vmatpush1.msra.mxu0 0.0
        %4584 = vmatprep.subr.mxu0 0.0
        %4585 = vmatpush1.msra.mxu0 0.0
        %4586 = vmatprep.subr.mxu0 0.0
        %4587 = vmatpush1.msra.mxu0 0.0
        %4588 = vmatprep.subr.mxu0 0.0
        %4589 = vmatpush1.msra.mxu0 0.0
        %4590 = vmatprep.subr.mxu0 0.0
        %4591 = vmatpush1.msra.mxu0 0.0
        %4592 = vmatprep.subr.mxu0 0.0
        %4593 = vmatpush1.msra.mxu0 0.0
        %4594 = vmatprep.subr.mxu0 0.0
        %4595 = vmatpush1.msra.mxu0 0.0
        %4596 = vmatprep.subr.mxu0 0.0
        %4597 = vmatpush1.msra.mxu0 0.0
        %4598 = vmatprep.subr.mxu0 0.0
        %4599 = vmatpush1.msra.mxu0 0.0
        %4600 = vmatprep.subr.mxu0 0.0
        %4601 = vmatpush1.msra.mxu0 0.0
        %4602 = vmatprep.subr.mxu0 %v4244
        %4603 = vmatpush1.msra.mxu0 %v4241
        %4604 = vmatprep.subr.mxu0 0.0
        %4605 = vmatpush2.msra.mxu0 0.0
        %4606 = vmatprep.subr.mxu0 0.0
        %4607 = vmatpush2.msra.mxu0 0.0
        %4608 = vmatprep.subr.mxu0 0.0
        %4609 = vmatpush2.msra.mxu0 0.0
        %4610 = vmatprep.subr.mxu0 0.0
        %4611 = vmatpush2.msra.mxu0 0.0
        %4612 = vmatprep.subr.mxu0 0.0
        %4613 = vmatpush2.msra.mxu0 0.0
        %4614 = vmatprep.subr.mxu0 0.0
        %4615 = vmatpush2.msra.mxu0 0.0
        %4616 = vmatprep.subr.mxu0 0.0
        %4617 = vmatpush2.msra.mxu0 0.0
        %4618 = vmatprep.subr.mxu0 0.0
        %4619 = vmatpush2.msra.mxu0 0.0
        %4620 = vmatprep.subr.mxu0 0.0
        %4621 = vmatpush2.msra.mxu0 0.0
        %4622 = vmatprep.subr.mxu0 0.0
        %4623 = vmatpush2.msra.mxu0 0.0
        %4624 = vmatprep.subr.mxu0 0.0
        %4625 = vmatpush2.msra.mxu0 0.0
        %4626 = vmatprep.subr.mxu0 0.0
        %4627 = vmatpush2.msra.mxu0 0.0
        %4628 = vmatprep.subr.mxu0 0.0
        %4629 = vmatpush2.msra.mxu0 0.0
        %4630 = vmatprep.subr.mxu0 0.0
        %4631 = vmatpush2.msra.mxu0 0.0
        %4632 = vmatprep.subr.mxu0 0.0
        %4633 = vmatpush2.msra.mxu0 0.0
        %4634 = vmatprep.subr.mxu0 0.0
        %4635 = vmatpush2.msra.mxu0 0.0
        %4636 = vmatprep.mubr.f32.mxu0 0.0
        %4637 = vmatmul.mubr.f32.gmra.mxu0 %v4211
        %v4638 = vpop.f32.mrf.mxu0
        %v4639 = vadd.f32 0.0, %v4638
        %v4640 = vpop.f32.mrf.mxu0
        %v4641 = vadd.f32 0.0, %v4640
        %4642 = vmatprep.mubr.f32.mxu0 0.0
        %4643 = vmatmul.mubr.f32.gmra.mxu0 %v4214
        %v4644 = vpop.f32.mrf.mxu0
        %v4645 = vadd.f32 0.0, %v4644
        %v4646 = vpop.f32.mrf.mxu0
        %v4647 = vadd.f32 0.0, %v4646
        %4648 = vdwg.mxu0
        %4649 = vmatprep.subr.mxu0 0.0
        %4650 = vmatpush1.msra.mxu0 0.0
        %4651 = vmatprep.subr.mxu0 0.0
        %4652 = vmatpush1.msra.mxu0 0.0
        %4653 = vmatprep.subr.mxu0 0.0
        %4654 = vmatpush1.msra.mxu0 0.0
        %4655 = vmatprep.subr.mxu0 0.0
        %4656 = vmatpush1.msra.mxu0 0.0
        %4657 = vmatprep.subr.mxu0 0.0
        %4658 = vmatpush1.msra.mxu0 0.0
        %4659 = vmatprep.subr.mxu0 0.0
        %4660 = vmatpush1.msra.mxu0 0.0
        %4661 = vmatprep.subr.mxu0 0.0
        %4662 = vmatpush1.msra.mxu0 0.0
        %4663 = vmatprep.subr.mxu0 0.0
        %4664 = vmatpush1.msra.mxu0 0.0
        %4665 = vmatprep.subr.mxu0 0.0
        %4666 = vmatpush1.msra.mxu0 0.0
        %4667 = vmatprep.subr.mxu0 0.0
        %4668 = vmatpush1.msra.mxu0 0.0
        %4669 = vmatprep.subr.mxu0 0.0
        %4670 = vmatpush1.msra.mxu0 0.0
        %4671 = vmatprep.subr.mxu0 0.0
        %4672 = vmatpush1.msra.mxu0 0.0
        %4673 = vmatprep.subr.mxu0 0.0
        %4674 = vmatpush1.msra.mxu0 0.0
        %4675 = vmatprep.subr.mxu0 0.0
        %4676 = vmatpush1.msra.mxu0 0.0
        %4677 = vmatprep.subr.mxu0 0.0
        %4678 = vmatpush1.msra.mxu0 0.0
        %4679 = vmatprep.subr.mxu0 %v4250
        %4680 = vmatpush1.msra.mxu0 %v4247
        %4681 = vmatprep.subr.mxu0 0.0
        %4682 = vmatpush2.msra.mxu0 0.0
        %4683 = vmatprep.subr.mxu0 0.0
        %4684 = vmatpush2.msra.mxu0 0.0
        %4685 = vmatprep.subr.mxu0 0.0
        %4686 = vmatpush2.msra.mxu0 0.0
        %4687 = vmatprep.subr.mxu0 0.0
        %4688 = vmatpush2.msra.mxu0 0.0
        %4689 = vmatprep.subr.mxu0 0.0
        %4690 = vmatpush2.msra.mxu0 0.0
        %4691 = vmatprep.subr.mxu0 0.0
        %4692 = vmatpush2.msra.mxu0 0.0
        %4693 = vmatprep.subr.mxu0 0.0
        %4694 = vmatpush2.msra.mxu0 0.0
        %4695 = vmatprep.subr.mxu0 0.0
        %4696 = vmatpush2.msra.mxu0 0.0
        %4697 = vmatprep.subr.mxu0 0.0
        %4698 = vmatpush2.msra.mxu0 0.0
        %4699 = vmatprep.subr.mxu0 0.0
        %4700 = vmatpush2.msra.mxu0 0.0
        %4701 = vmatprep.subr.mxu0 0.0
        %4702 = vmatpush2.msra.mxu0 0.0
        %4703 = vmatprep.subr.mxu0 0.0
        %4704 = vmatpush2.msra.mxu0 0.0
        %4705 = vmatprep.subr.mxu0 0.0
        %4706 = vmatpush2.msra.mxu0 0.0
        %4707 = vmatprep.subr.mxu0 0.0
        %4708 = vmatpush2.msra.mxu0 0.0
        %4709 = vmatprep.subr.mxu0 0.0
        %4710 = vmatpush2.msra.mxu0 0.0
        %4711 = vmatprep.subr.mxu0 0.0
        %4712 = vmatpush2.msra.mxu0 0.0
        %4713 = vmatprep.mubr.f32.mxu0 0.0
        %4714 = vmatmul.mubr.f32.gmra.mxu0 %v4211
        %v4715 = vpop.f32.mrf.mxu0
        %v4716 = vadd.f32 0.0, %v4715
        %v4717 = vpop.f32.mrf.mxu0
        %v4718 = vadd.f32 0.0, %v4717
        %4719 = vmatprep.mubr.f32.mxu0 0.0
        %4720 = vmatmul.mubr.f32.gmra.mxu0 %v4214
        %v4721 = vpop.f32.mrf.mxu0
        %v4722 = vadd.f32 0.0, %v4721
        %v4723 = vpop.f32.mrf.mxu0
        %v4724 = vadd.f32 0.0, %v4723
        %4725 = vdwg.mxu0
        %4726 = vmatprep.subr.mxu0 0.0
        %4727 = vmatpush1.msra.mxu0 0.0
        %4728 = vmatprep.subr.mxu0 0.0
        %4729 = vmatpush1.msra.mxu0 0.0
        %4730 = vmatprep.subr.mxu0 0.0
        %4731 = vmatpush1.msra.mxu0 0.0
        %4732 = vmatprep.subr.mxu0 0.0
        %4733 = vmatpush1.msra.mxu0 0.0
        %4734 = vmatprep.subr.mxu0 0.0
        %4735 = vmatpush1.msra.mxu0 0.0
        %4736 = vmatprep.subr.mxu0 0.0
        %4737 = vmatpush1.msra.mxu0 0.0
        %4738 = vmatprep.subr.mxu0 0.0
        %4739 = vmatpush1.msra.mxu0 0.0
        %4740 = vmatprep.subr.mxu0 0.0
        %4741 = vmatpush1.msra.mxu0 0.0
        %4742 = vmatprep.subr.mxu0 0.0
        %4743 = vmatpush1.msra.mxu0 0.0
        %4744 = vmatprep.subr.mxu0 0.0
        %4745 = vmatpush1.msra.mxu0 0.0
        %4746 = vmatprep.subr.mxu0 0.0
        %4747 = vmatpush1.msra.mxu0 0.0
        %4748 = vmatprep.subr.mxu0 0.0
        %4749 = vmatpush1.msra.mxu0 0.0
        %4750 = vmatprep.subr.mxu0 0.0
        %4751 = vmatpush1.msra.mxu0 0.0
        %4752 = vmatprep.subr.mxu0 0.0
        %4753 = vmatpush1.msra.mxu0 0.0
        %4754 = vmatprep.subr.mxu0 0.0
        %4755 = vmatpush1.msra.mxu0 0.0
        %4756 = vmatprep.subr.mxu0 %v4256
        %4757 = vmatpush1.msra.mxu0 %v4253
        %4758 = vmatprep.subr.mxu0 0.0
        %4759 = vmatpush2.msra.mxu0 0.0
        %4760 = vmatprep.subr.mxu0 0.0
        %4761 = vmatpush2.msra.mxu0 0.0
        %4762 = vmatprep.subr.mxu0 0.0
        %4763 = vmatpush2.msra.mxu0 0.0
        %4764 = vmatprep.subr.mxu0 0.0
        %4765 = vmatpush2.msra.mxu0 0.0
        %4766 = vmatprep.subr.mxu0 0.0
        %4767 = vmatpush2.msra.mxu0 0.0
        %4768 = vmatprep.subr.mxu0 0.0
        %4769 = vmatpush2.msra.mxu0 0.0
        %4770 = vmatprep.subr.mxu0 0.0
        %4771 = vmatpush2.msra.mxu0 0.0
        %4772 = vmatprep.subr.mxu0 0.0
        %4773 = vmatpush2.msra.mxu0 0.0
        %4774 = vmatprep.subr.mxu0 0.0
        %4775 = vmatpush2.msra.mxu0 0.0
        %4776 = vmatprep.subr.mxu0 0.0
        %4777 = vmatpush2.msra.mxu0 0.0
        %4778 = vmatprep.subr.mxu0 0.0
        %4779 = vmatpush2.msra.mxu0 0.0
        %4780 = vmatprep.subr.mxu0 0.0
        %4781 = vmatpush2.msra.mxu0 0.0
        %4782 = vmatprep.subr.mxu0 0.0
        %4783 = vmatpush2.msra.mxu0 0.0
        %4784 = vmatprep.subr.mxu0 0.0
        %4785 = vmatpush2.msra.mxu0 0.0
        %4786 = vmatprep.subr.mxu0 0.0
        %4787 = vmatpush2.msra.mxu0 0.0
        %4788 = vmatprep.subr.mxu0 0.0
        %4789 = vmatpush2.msra.mxu0 0.0
        %4790 = vmatprep.mubr.f32.mxu0 0.0
        %4791 = vmatmul.mubr.f32.gmra.mxu0 %v4211
        %v4792 = vpop.f32.mrf.mxu0
        %v4793 = vadd.f32 0.0, %v4792
        %v4794 = vpop.f32.mrf.mxu0
        %v4795 = vadd.f32 0.0, %v4794
        %4796 = vmatprep.mubr.f32.mxu0 0.0
        %4797 = vmatmul.mubr.f32.gmra.mxu0 %v4214
        %v4798 = vpop.f32.mrf.mxu0
        %v4799 = vadd.f32 0.0, %v4798
        %v4800 = vpop.f32.mrf.mxu0
        %v4801 = vadd.f32 0.0, %v4800
        %4802 = vdwg.mxu0
        %4803 = vmatprep.subr.mxu0 0.0
        %4804 = vmatpush1.msra.mxu0 0.0
        %4805 = vmatprep.subr.mxu0 0.0
        %4806 = vmatpush1.msra.mxu0 0.0
        %4807 = vmatprep.subr.mxu0 0.0
        %4808 = vmatpush1.msra.mxu0 0.0
        %4809 = vmatprep.subr.mxu0 0.0
        %4810 = vmatpush1.msra.mxu0 0.0
        %4811 = vmatprep.subr.mxu0 0.0
        %4812 = vmatpush1.msra.mxu0 0.0
        %4813 = vmatprep.subr.mxu0 0.0
        %4814 = vmatpush1.msra.mxu0 0.0
        %4815 = vmatprep.subr.mxu0 0.0
        %4816 = vmatpush1.msra.mxu0 0.0
        %4817 = vmatprep.subr.mxu0 0.0
        %4818 = vmatpush1.msra.mxu0 0.0
        %4819 = vmatprep.subr.mxu0 0.0
        %4820 = vmatpush1.msra.mxu0 0.0
        %4821 = vmatprep.subr.mxu0 0.0
        %4822 = vmatpush1.msra.mxu0 0.0
        %4823 = vmatprep.subr.mxu0 0.0
        %4824 = vmatpush1.msra.mxu0 0.0
        %4825 = vmatprep.subr.mxu0 0.0
        %4826 = vmatpush1.msra.mxu0 0.0
        %4827 = vmatprep.subr.mxu0 0.0
        %4828 = vmatpush1.msra.mxu0 0.0
        %4829 = vmatprep.subr.mxu0 0.0
        %4830 = vmatpush1.msra.mxu0 0.0
        %4831 = vmatprep.subr.mxu0 0.0
        %4832 = vmatpush1.msra.mxu0 0.0
        %4833 = vmatprep.subr.mxu0 %v4262
        %4834 = vmatpush1.msra.mxu0 %v4259
        %4835 = vmatprep.subr.mxu0 0.0
        %4836 = vmatpush2.msra.mxu0 0.0
        %4837 = vmatprep.subr.mxu0 0.0
        %4838 = vmatpush2.msra.mxu0 0.0
        %4839 = vmatprep.subr.mxu0 0.0
        %4840 = vmatpush2.msra.mxu0 0.0
        %4841 = vmatprep.subr.mxu0 0.0
        %4842 = vmatpush2.msra.mxu0 0.0
        %4843 = vmatprep.subr.mxu0 0.0
        %4844 = vmatpush2.msra.mxu0 0.0
        %4845 = vmatprep.subr.mxu0 0.0
        %4846 = vmatpush2.msra.mxu0 0.0
        %4847 = vmatprep.subr.mxu0 0.0
        %4848 = vmatpush2.msra.mxu0 0.0
        %4849 = vmatprep.subr.mxu0 0.0
        %4850 = vmatpush2.msra.mxu0 0.0
        %4851 = vmatprep.subr.mxu0 0.0
        %4852 = vmatpush2.msra.mxu0 0.0
        %4853 = vmatprep.subr.mxu0 0.0
        %4854 = vmatpush2.msra.mxu0 0.0
        %4855 = vmatprep.subr.mxu0 0.0
        %4856 = vmatpush2.msra.mxu0 0.0
        %4857 = vmatprep.subr.mxu0 0.0
        %4858 = vmatpush2.msra.mxu0 0.0
        %4859 = vmatprep.subr.mxu0 0.0
        %4860 = vmatpush2.msra.mxu0 0.0
        %4861 = vmatprep.subr.mxu0 0.0
        %4862 = vmatpush2.msra.mxu0 0.0
        %4863 = vmatprep.subr.mxu0 0.0
        %4864 = vmatpush2.msra.mxu0 0.0
        %4865 = vmatprep.subr.mxu0 0.0
        %4866 = vmatpush2.msra.mxu0 0.0
        %4867 = vmatprep.mubr.f32.mxu0 0.0
        %4868 = vmatmul.mubr.f32.gmra.mxu0 %v4211
        %v4869 = vpop.f32.mrf.mxu0
        %v4870 = vadd.f32 0.0, %v4869
        %v4871 = vpop.f32.mrf.mxu0
        %v4872 = vadd.f32 0.0, %v4871
        %4873 = vmatprep.mubr.f32.mxu0 0.0
        %4874 = vmatmul.mubr.f32.gmra.mxu0 %v4214
        %v4875 = vpop.f32.mrf.mxu0
        %v4876 = vadd.f32 0.0, %v4875
        %v4877 = vpop.f32.mrf.mxu0
        %v4878 = vadd.f32 0.0, %v4877
        %4879 = vdwg.mxu0
        %v4912 = vcombine.low %v4331, %v4333
        %v4913 = vcombine.high %v4331, %v4333
        %v4914 = vcombine.low %v4408, %v4410
        %v4915 = vcombine.high %v4408, %v4410
        %v4916 = vcombine.low %v4485, %v4487
        %v4917 = vcombine.high %v4485, %v4487
        %v4918 = vcombine.low %v4562, %v4564
        %v4919 = vcombine.high %v4562, %v4564
        %v4921 = vunpack.c.l.s4 1966171168
        %v4922 = vunpack.c.0.s8 %v4921
        %v4923 = vlaneseq
        %v4924 = vshrl.u32 %v4923, 7
        %v4925 = vsub.s32 %v4922, %v4924
        %v4926 = vrot.slane %v4912, %v4925
        %v4928 = vunpack.c.l.s4 1966171168
        %v4929 = vunpack.c.0.s8 %v4928
        %v4930 = vlaneseq
        %v4931 = vshrl.u32 %v4930, 7
        %v4932 = vsub.s32 %v4929, %v4931
        %v4933 = vrot.slane %v4913, %v4932
        %v4935 = vunpack.c.l.s4 1966171168
        %v4936 = vunpack.c.0.s8 %v4935
        %v4937 = vlaneseq
        %v4938 = vshrl.u32 %v4937, 7
        %v4939 = vsub.s32 %v4936, %v4938
        %v4940 = vrot.slane %v4914, %v4939
        %v4942 = vunpack.c.l.s4 1966171168
        %v4943 = vunpack.c.0.s8 %v4942
        %v4944 = vlaneseq
        %v4945 = vshrl.u32 %v4944, 7
        %v4946 = vsub.s32 %v4943, %v4945
        %v4947 = vrot.slane %v4915, %v4946
        %v4949 = vunpack.c.l.s4 1966171168
        %v4950 = vunpack.c.0.s8 %v4949
        %v4951 = vlaneseq
        %v4952 = vshrl.u32 %v4951, 7
        %v4953 = vsub.s32 %v4950, %v4952
        %v4954 = vrot.slane %v4916, %v4953
        %v4956 = vunpack.c.l.s4 1966171168
        %v4957 = vunpack.c.0.s8 %v4956
        %v4958 = vlaneseq
        %v4959 = vshrl.u32 %v4958, 7
        %v4960 = vsub.s32 %v4957, %v4959
        %v4961 = vrot.slane %v4917, %v4960
        %v4963 = vunpack.c.l.s4 1966171168
        %v4964 = vunpack.c.0.s8 %v4963
        %v4965 = vlaneseq
        %v4966 = vshrl.u32 %v4965, 7
        %v4967 = vsub.s32 %v4964, %v4966
        %v4968 = vrot.slane %v4918, %v4967
        %v4970 = vunpack.c.l.s4 1966171168
        %v4971 = vunpack.c.0.s8 %v4970
        %v4972 = vlaneseq
        %v4973 = vshrl.u32 %v4972, 7
        %v4974 = vsub.s32 %v4971, %v4973
        %v4975 = vrot.slane %v4919, %v4974
        %v4976 = vcombine.low %v4926, %v4940
        %v4977 = vcombine.high %v4926, %v4940
        %v4978 = vcombine.low %v4933, %v4947
        %v4979 = vcombine.high %v4933, %v4947
        %v4980 = vcombine.low %v4954, %v4968
        %v4981 = vcombine.high %v4954, %v4968
        %v4982 = vcombine.low %v4961, %v4975
        %v4983 = vcombine.high %v4961, %v4975
        %v4985 = vunpack.c.l.s4 1966171168
        %v4986 = vunpack.c.0.s8 %v4985
        %v4987 = vlaneseq
        %v4988 = vshrl.u32 %v4987, 7
        %v4989 = vsub.s32 %v4986, %v4988
        %v4990 = vrot.slane %v4976, %v4989
        %v4992 = vunpack.c.l.s4 1966171168
        %v4993 = vunpack.c.0.s8 %v4992
        %v4994 = vlaneseq
        %v4995 = vshrl.u32 %v4994, 7
        %v4996 = vsub.s32 %v4993, %v4995
        %v4997 = vrot.slane %v4978, %v4996
        %v4999 = vunpack.c.l.s4 1966171168
        %v5000 = vunpack.c.0.s8 %v4999
        %v5001 = vlaneseq
        %v5002 = vshrl.u32 %v5001, 7
        %v5003 = vsub.s32 %v5000, %v5002
        %v5004 = vrot.slane %v4977, %v5003
        %v5006 = vunpack.c.l.s4 1966171168
        %v5007 = vunpack.c.0.s8 %v5006
        %v5008 = vlaneseq
        %v5009 = vshrl.u32 %v5008, 7
        %v5010 = vsub.s32 %v5007, %v5009
        %v5011 = vrot.slane %v4979, %v5010
        %v5013 = vunpack.c.l.s4 1966171168
        %v5014 = vunpack.c.0.s8 %v5013
        %v5015 = vlaneseq
        %v5016 = vshrl.u32 %v5015, 7
        %v5017 = vsub.s32 %v5014, %v5016
        %v5018 = vrot.slane %v4980, %v5017
        %v5020 = vunpack.c.l.s4 1966171168
        %v5021 = vunpack.c.0.s8 %v5020
        %v5022 = vlaneseq
        %v5023 = vshrl.u32 %v5022, 7
        %v5024 = vsub.s32 %v5021, %v5023
        %v5025 = vrot.slane %v4982, %v5024
        %v5027 = vunpack.c.l.s4 1966171168
        %v5028 = vunpack.c.0.s8 %v5027
        %v5029 = vlaneseq
        %v5030 = vshrl.u32 %v5029, 7
        %v5031 = vsub.s32 %v5028, %v5030
        %v5032 = vrot.slane %v4981, %v5031
        %v5034 = vunpack.c.l.s4 1966171168
        %v5035 = vunpack.c.0.s8 %v5034
        %v5036 = vlaneseq
        %v5037 = vshrl.u32 %v5036, 7
        %v5038 = vsub.s32 %v5035, %v5037
        %v5039 = vrot.slane %v4983, %v5038
        %v5040 = vcombine.low %v4990, %v5018
        %v5041 = vcombine.high %v4990, %v5018
        %v5042 = vcombine.low %v4997, %v5025
        %v5043 = vcombine.high %v4997, %v5025
        %v5044 = vcombine.low %v5004, %v5032
        %v5045 = vcombine.high %v5004, %v5032
        %v5046 = vcombine.low %v5011, %v5039
        %v5047 = vcombine.high %v5011, %v5039
        %v5048 = vcombine.low %v4639, %v4641
        %v5049 = vcombine.high %v4639, %v4641
        %v5050 = vcombine.low %v4716, %v4718
        %v5051 = vcombine.high %v4716, %v4718
        %v5052 = vcombine.low %v4793, %v4795
        %v5053 = vcombine.high %v4793, %v4795
        %v5054 = vcombine.low %v4870, %v4872
        %v5055 = vcombine.high %v4870, %v4872
        %v5057 = vunpack.c.l.s4 1966171168
        %v5058 = vunpack.c.0.s8 %v5057
        %v5059 = vlaneseq
        %v5060 = vshrl.u32 %v5059, 7
        %v5061 = vsub.s32 %v5058, %v5060
        %v5062 = vrot.slane %v5048, %v5061
        %v5064 = vunpack.c.l.s4 1966171168
        %v5065 = vunpack.c.0.s8 %v5064
        %v5066 = vlaneseq
        %v5067 = vshrl.u32 %v5066, 7
        %v5068 = vsub.s32 %v5065, %v5067
        %v5069 = vrot.slane %v5049, %v5068
        %v5071 = vunpack.c.l.s4 1966171168
        %v5072 = vunpack.c.0.s8 %v5071
        %v5073 = vlaneseq
        %v5074 = vshrl.u32 %v5073, 7
        %v5075 = vsub.s32 %v5072, %v5074
        %v5076 = vrot.slane %v5050, %v5075
        %v5078 = vunpack.c.l.s4 1966171168
        %v5079 = vunpack.c.0.s8 %v5078
        %v5080 = vlaneseq
        %v5081 = vshrl.u32 %v5080, 7
        %v5082 = vsub.s32 %v5079, %v5081
        %v5083 = vrot.slane %v5051, %v5082
        %v5085 = vunpack.c.l.s4 1966171168
        %v5086 = vunpack.c.0.s8 %v5085
        %v5087 = vlaneseq
        %v5088 = vshrl.u32 %v5087, 7
        %v5089 = vsub.s32 %v5086, %v5088
        %v5090 = vrot.slane %v5052, %v5089
        %v5092 = vunpack.c.l.s4 1966171168
        %v5093 = vunpack.c.0.s8 %v5092
        %v5094 = vlaneseq
        %v5095 = vshrl.u32 %v5094, 7
        %v5096 = vsub.s32 %v5093, %v5095
        %v5097 = vrot.slane %v5053, %v5096
        %v5099 = vunpack.c.l.s4 1966171168
        %v5100 = vunpack.c.0.s8 %v5099
        %v5101 = vlaneseq
        %v5102 = vshrl.u32 %v5101, 7
        %v5103 = vsub.s32 %v5100, %v5102
        %v5104 = vrot.slane %v5054, %v5103
        %v5106 = vunpack.c.l.s4 1966171168
        %v5107 = vunpack.c.0.s8 %v5106
        %v5108 = vlaneseq
        %v5109 = vshrl.u32 %v5108, 7
        %v5110 = vsub.s32 %v5107, %v5109
        %v5111 = vrot.slane %v5055, %v5110
        %v5112 = vcombine.low %v5062, %v5076
        %v5113 = vcombine.high %v5062, %v5076
        %v5114 = vcombine.low %v5069, %v5083
        %v5115 = vcombine.high %v5069, %v5083
        %v5116 = vcombine.low %v5090, %v5104
        %v5117 = vcombine.high %v5090, %v5104
        %v5118 = vcombine.low %v5097, %v5111
        %v5119 = vcombine.high %v5097, %v5111
        %v5121 = vunpack.c.l.s4 1966171168
        %v5122 = vunpack.c.0.s8 %v5121
        %v5123 = vlaneseq
        %v5124 = vshrl.u32 %v5123, 7
        %v5125 = vsub.s32 %v5122, %v5124
        %v5126 = vrot.slane %v5112, %v5125
        %v5128 = vunpack.c.l.s4 1966171168
        %v5129 = vunpack.c.0.s8 %v5128
        %v5130 = vlaneseq
        %v5131 = vshrl.u32 %v5130, 7
        %v5132 = vsub.s32 %v5129, %v5131
        %v5133 = vrot.slane %v5114, %v5132
        %v5135 = vunpack.c.l.s4 1966171168
        %v5136 = vunpack.c.0.s8 %v5135
        %v5137 = vlaneseq
        %v5138 = vshrl.u32 %v5137, 7
        %v5139 = vsub.s32 %v5136, %v5138
        %v5140 = vrot.slane %v5113, %v5139
        %v5142 = vunpack.c.l.s4 1966171168
        %v5143 = vunpack.c.0.s8 %v5142
        %v5144 = vlaneseq
        %v5145 = vshrl.u32 %v5144, 7
        %v5146 = vsub.s32 %v5143, %v5145
        %v5147 = vrot.slane %v5115, %v5146
        %v5149 = vunpack.c.l.s4 1966171168
        %v5150 = vunpack.c.0.s8 %v5149
        %v5151 = vlaneseq
        %v5152 = vshrl.u32 %v5151, 7
        %v5153 = vsub.s32 %v5150, %v5152
        %v5154 = vrot.slane %v5116, %v5153
        %v5156 = vunpack.c.l.s4 1966171168
        %v5157 = vunpack.c.0.s8 %v5156
        %v5158 = vlaneseq
        %v5159 = vshrl.u32 %v5158, 7
        %v5160 = vsub.s32 %v5157, %v5159
        %v5161 = vrot.slane %v5118, %v5160
        %v5163 = vunpack.c.l.s4 1966171168
        %v5164 = vunpack.c.0.s8 %v5163
        %v5165 = vlaneseq
        %v5166 = vshrl.u32 %v5165, 7
        %v5167 = vsub.s32 %v5164, %v5166
        %v5168 = vrot.slane %v5117, %v5167
        %v5170 = vunpack.c.l.s4 1966171168
        %v5171 = vunpack.c.0.s8 %v5170
        %v5172 = vlaneseq
        %v5173 = vshrl.u32 %v5172, 7
        %v5174 = vsub.s32 %v5171, %v5173
        %v5175 = vrot.slane %v5119, %v5174
        %v5176 = vcombine.low %v5126, %v5154
        %v5177 = vcombine.high %v5126, %v5154
        %v5178 = vcombine.low %v5133, %v5161
        %v5179 = vcombine.high %v5133, %v5161
        %v5180 = vcombine.low %v5140, %v5168
        %v5181 = vcombine.high %v5140, %v5168
        %v5182 = vcombine.low %v5147, %v5175
        %v5183 = vcombine.high %v5147, %v5175
        %v5184 = vcombine.low %v4337, %v4339
        %v5185 = vcombine.high %v4337, %v4339
        %v5186 = vcombine.low %v4414, %v4416
        %v5187 = vcombine.high %v4414, %v4416
        %v5188 = vcombine.low %v4491, %v4493
        %v5189 = vcombine.high %v4491, %v4493
        %v5190 = vcombine.low %v4568, %v4570
        %v5191 = vcombine.high %v4568, %v4570
        %v5193 = vunpack.c.l.s4 1966171168
        %v5194 = vunpack.c.0.s8 %v5193
        %v5195 = vlaneseq
        %v5196 = vshrl.u32 %v5195, 7
        %v5197 = vsub.s32 %v5194, %v5196
        %v5198 = vrot.slane %v5184, %v5197
        %v5200 = vunpack.c.l.s4 1966171168
        %v5201 = vunpack.c.0.s8 %v5200
        %v5202 = vlaneseq
        %v5203 = vshrl.u32 %v5202, 7
        %v5204 = vsub.s32 %v5201, %v5203
        %v5205 = vrot.slane %v5185, %v5204
        %v5207 = vunpack.c.l.s4 1966171168
        %v5208 = vunpack.c.0.s8 %v5207
        %v5209 = vlaneseq
        %v5210 = vshrl.u32 %v5209, 7
        %v5211 = vsub.s32 %v5208, %v5210
        %v5212 = vrot.slane %v5186, %v5211
        %v5214 = vunpack.c.l.s4 1966171168
        %v5215 = vunpack.c.0.s8 %v5214
        %v5216 = vlaneseq
        %v5217 = vshrl.u32 %v5216, 7
        %v5218 = vsub.s32 %v5215, %v5217
        %v5219 = vrot.slane %v5187, %v5218
        %v5221 = vunpack.c.l.s4 1966171168
        %v5222 = vunpack.c.0.s8 %v5221
        %v5223 = vlaneseq
        %v5224 = vshrl.u32 %v5223, 7
        %v5225 = vsub.s32 %v5222, %v5224
        %v5226 = vrot.slane %v5188, %v5225
        %v5228 = vunpack.c.l.s4 1966171168
        %v5229 = vunpack.c.0.s8 %v5228
        %v5230 = vlaneseq
        %v5231 = vshrl.u32 %v5230, 7
        %v5232 = vsub.s32 %v5229, %v5231
        %v5233 = vrot.slane %v5189, %v5232
        %v5235 = vunpack.c.l.s4 1966171168
        %v5236 = vunpack.c.0.s8 %v5235
        %v5237 = vlaneseq
        %v5238 = vshrl.u32 %v5237, 7
        %v5239 = vsub.s32 %v5236, %v5238
        %v5240 = vrot.slane %v5190, %v5239
        %v5242 = vunpack.c.l.s4 1966171168
        %v5243 = vunpack.c.0.s8 %v5242
        %v5244 = vlaneseq
        %v5245 = vshrl.u32 %v5244, 7
        %v5246 = vsub.s32 %v5243, %v5245
        %v5247 = vrot.slane %v5191, %v5246
        %v5248 = vcombine.low %v5198, %v5212
        %v5249 = vcombine.high %v5198, %v5212
        %v5250 = vcombine.low %v5205, %v5219
        %v5251 = vcombine.high %v5205, %v5219
        %v5252 = vcombine.low %v5226, %v5240
        %v5253 = vcombine.high %v5226, %v5240
        %v5254 = vcombine.low %v5233, %v5247
        %v5255 = vcombine.high %v5233, %v5247
        %v5257 = vunpack.c.l.s4 1966171168
        %v5258 = vunpack.c.0.s8 %v5257
        %v5259 = vlaneseq
        %v5260 = vshrl.u32 %v5259, 7
        %v5261 = vsub.s32 %v5258, %v5260
        %v5262 = vrot.slane %v5248, %v5261
        %v5264 = vunpack.c.l.s4 1966171168
        %v5265 = vunpack.c.0.s8 %v5264
        %v5266 = vlaneseq
        %v5267 = vshrl.u32 %v5266, 7
        %v5268 = vsub.s32 %v5265, %v5267
        %v5269 = vrot.slane %v5250, %v5268
        %v5271 = vunpack.c.l.s4 1966171168
        %v5272 = vunpack.c.0.s8 %v5271
        %v5273 = vlaneseq
        %v5274 = vshrl.u32 %v5273, 7
        %v5275 = vsub.s32 %v5272, %v5274
        %v5276 = vrot.slane %v5249, %v5275
        %v5278 = vunpack.c.l.s4 1966171168
        %v5279 = vunpack.c.0.s8 %v5278
        %v5280 = vlaneseq
        %v5281 = vshrl.u32 %v5280, 7
        %v5282 = vsub.s32 %v5279, %v5281
        %v5283 = vrot.slane %v5251, %v5282
        %v5285 = vunpack.c.l.s4 1966171168
        %v5286 = vunpack.c.0.s8 %v5285
        %v5287 = vlaneseq
        %v5288 = vshrl.u32 %v5287, 7
        %v5289 = vsub.s32 %v5286, %v5288
        %v5290 = vrot.slane %v5252, %v5289
        %v5292 = vunpack.c.l.s4 1966171168
        %v5293 = vunpack.c.0.s8 %v5292
        %v5294 = vlaneseq
        %v5295 = vshrl.u32 %v5294, 7
        %v5296 = vsub.s32 %v5293, %v5295
        %v5297 = vrot.slane %v5254, %v5296
        %v5299 = vunpack.c.l.s4 1966171168
        %v5300 = vunpack.c.0.s8 %v5299
        %v5301 = vlaneseq
        %v5302 = vshrl.u32 %v5301, 7
        %v5303 = vsub.s32 %v5300, %v5302
        %v5304 = vrot.slane %v5253, %v5303
        %v5306 = vunpack.c.l.s4 1966171168
        %v5307 = vunpack.c.0.s8 %v5306
        %v5308 = vlaneseq
        %v5309 = vshrl.u32 %v5308, 7
        %v5310 = vsub.s32 %v5307, %v5309
        %v5311 = vrot.slane %v5255, %v5310
        %v5312 = vcombine.low %v5262, %v5290
        %v5313 = vcombine.high %v5262, %v5290
        %v5314 = vcombine.low %v5269, %v5297
        %v5315 = vcombine.high %v5269, %v5297
        %v5316 = vcombine.low %v5276, %v5304
        %v5317 = vcombine.high %v5276, %v5304
        %v5318 = vcombine.low %v5283, %v5311
        %v5319 = vcombine.high %v5283, %v5311
        %v5320 = vcombine.low %v4645, %v4647
        %v5321 = vcombine.high %v4645, %v4647
        %v5322 = vcombine.low %v4722, %v4724
        %v5323 = vcombine.high %v4722, %v4724
        %v5324 = vcombine.low %v4799, %v4801
        %v5325 = vcombine.high %v4799, %v4801
        %v5326 = vcombine.low %v4876, %v4878
        %v5327 = vcombine.high %v4876, %v4878
        %v5329 = vunpack.c.l.s4 1966171168
        %v5330 = vunpack.c.0.s8 %v5329
        %v5331 = vlaneseq
        %v5332 = vshrl.u32 %v5331, 7
        %v5333 = vsub.s32 %v5330, %v5332
        %v5334 = vrot.slane %v5320, %v5333
        %v5336 = vunpack.c.l.s4 1966171168
        %v5337 = vunpack.c.0.s8 %v5336
        %v5338 = vlaneseq
        %v5339 = vshrl.u32 %v5338, 7
        %v5340 = vsub.s32 %v5337, %v5339
        %v5341 = vrot.slane %v5321, %v5340
        %v5343 = vunpack.c.l.s4 1966171168
        %v5344 = vunpack.c.0.s8 %v5343
        %v5345 = vlaneseq
        %v5346 = vshrl.u32 %v5345, 7
        %v5347 = vsub.s32 %v5344, %v5346
        %v5348 = vrot.slane %v5322, %v5347
        %v5350 = vunpack.c.l.s4 1966171168
        %v5351 = vunpack.c.0.s8 %v5350
        %v5352 = vlaneseq
        %v5353 = vshrl.u32 %v5352, 7
        %v5354 = vsub.s32 %v5351, %v5353
        %v5355 = vrot.slane %v5323, %v5354
        %v5357 = vunpack.c.l.s4 1966171168
        %v5358 = vunpack.c.0.s8 %v5357
        %v5359 = vlaneseq
        %v5360 = vshrl.u32 %v5359, 7
        %v5361 = vsub.s32 %v5358, %v5360
        %v5362 = vrot.slane %v5324, %v5361
        %v5364 = vunpack.c.l.s4 1966171168
        %v5365 = vunpack.c.0.s8 %v5364
        %v5366 = vlaneseq
        %v5367 = vshrl.u32 %v5366, 7
        %v5368 = vsub.s32 %v5365, %v5367
        %v5369 = vrot.slane %v5325, %v5368
        %v5371 = vunpack.c.l.s4 1966171168
        %v5372 = vunpack.c.0.s8 %v5371
        %v5373 = vlaneseq
        %v5374 = vshrl.u32 %v5373, 7
        %v5375 = vsub.s32 %v5372, %v5374
        %v5376 = vrot.slane %v5326, %v5375
        %v5378 = vunpack.c.l.s4 1966171168
        %v5379 = vunpack.c.0.s8 %v5378
        %v5380 = vlaneseq
        %v5381 = vshrl.u32 %v5380, 7
        %v5382 = vsub.s32 %v5379, %v5381
        %v5383 = vrot.slane %v5327, %v5382
        %v5384 = vcombine.low %v5334, %v5348
        %v5385 = vcombine.high %v5334, %v5348
        %v5386 = vcombine.low %v5341, %v5355
        %v5387 = vcombine.high %v5341, %v5355
        %v5388 = vcombine.low %v5362, %v5376
        %v5389 = vcombine.high %v5362, %v5376
        %v5390 = vcombine.low %v5369, %v5383
        %v5391 = vcombine.high %v5369, %v5383
        %v5393 = vunpack.c.l.s4 1966171168
        %v5394 = vunpack.c.0.s8 %v5393
        %v5395 = vlaneseq
        %v5396 = vshrl.u32 %v5395, 7
        %v5397 = vsub.s32 %v5394, %v5396
        %v5398 = vrot.slane %v5384, %v5397
        %v5400 = vunpack.c.l.s4 1966171168
        %v5401 = vunpack.c.0.s8 %v5400
        %v5402 = vlaneseq
        %v5403 = vshrl.u32 %v5402, 7
        %v5404 = vsub.s32 %v5401, %v5403
        %v5405 = vrot.slane %v5386, %v5404
        %v5407 = vunpack.c.l.s4 1966171168
        %v5408 = vunpack.c.0.s8 %v5407
        %v5409 = vlaneseq
        %v5410 = vshrl.u32 %v5409, 7
        %v5411 = vsub.s32 %v5408, %v5410
        %v5412 = vrot.slane %v5385, %v5411
        %v5414 = vunpack.c.l.s4 1966171168
        %v5415 = vunpack.c.0.s8 %v5414
        %v5416 = vlaneseq
        %v5417 = vshrl.u32 %v5416, 7
        %v5418 = vsub.s32 %v5415, %v5417
        %v5419 = vrot.slane %v5387, %v5418
        %v5421 = vunpack.c.l.s4 1966171168
        %v5422 = vunpack.c.0.s8 %v5421
        %v5423 = vlaneseq
        %v5424 = vshrl.u32 %v5423, 7
        %v5425 = vsub.s32 %v5422, %v5424
        %v5426 = vrot.slane %v5388, %v5425
        %v5428 = vunpack.c.l.s4 1966171168
        %v5429 = vunpack.c.0.s8 %v5428
        %v5430 = vlaneseq
        %v5431 = vshrl.u32 %v5430, 7
        %v5432 = vsub.s32 %v5429, %v5431
        %v5433 = vrot.slane %v5390, %v5432
        %v5435 = vunpack.c.l.s4 1966171168
        %v5436 = vunpack.c.0.s8 %v5435
        %v5437 = vlaneseq
        %v5438 = vshrl.u32 %v5437, 7
        %v5439 = vsub.s32 %v5436, %v5438
        %v5440 = vrot.slane %v5389, %v5439
        %v5442 = vunpack.c.l.s4 1966171168
        %v5443 = vunpack.c.0.s8 %v5442
        %v5444 = vlaneseq
        %v5445 = vshrl.u32 %v5444, 7
        %v5446 = vsub.s32 %v5443, %v5445
        %v5447 = vrot.slane %v5391, %v5446
        %v5448 = vcombine.low %v5398, %v5426
        %v5449 = vcombine.high %v5398, %v5426
        %v5450 = vcombine.low %v5405, %v5433
        %v5451 = vcombine.high %v5405, %v5433
        %v5452 = vcombine.low %v5412, %v5440
        %v5453 = vcombine.high %v5412, %v5440
        %v5454 = vcombine.low %v5419, %v5447
        %v5455 = vcombine.high %v5419, %v5447
        %v5488 = vadd.f32 %v3352, %v5040
        %v5489 = vadd.f32 %v3357, %v5176
        %v5490 = vadd.f32 %v3362, %v5044
        %v5491 = vadd.f32 %v3367, %v5180
        %v5492 = vadd.f32 %v3372, %v5041
        %v5493 = vadd.f32 %v3377, %v5177
        %v5494 = vadd.f32 %v3382, %v5045
        %v5495 = vadd.f32 %v3387, %v5181
        %v5496 = vadd.f32 %v3392, %v5042
        %v5497 = vadd.f32 %v3397, %v5178
        %v5498 = vadd.f32 %v3402, %v5046
        %v5499 = vadd.f32 %v3407, %v5182
        %v5500 = vadd.f32 %v3412, %v5043
        %v5501 = vadd.f32 %v3417, %v5179
        %v5502 = vadd.f32 %v3422, %v5047
        %v5503 = vadd.f32 %v3427, %v5183
        %v5504 = vadd.f32 %v3432, %v5312
        %v5505 = vadd.f32 %v3437, %v5448
        %v5506 = vadd.f32 %v3442, %v5316
        %v5507 = vadd.f32 %v3447, %v5452
        %v5508 = vadd.f32 %v3452, %v5313
        %v5509 = vadd.f32 %v3457, %v5449
        %v5510 = vadd.f32 %v3462, %v5317
        %v5511 = vadd.f32 %v3467, %v5453
        %v5512 = vadd.f32 %v3472, %v5314
        %v5513 = vadd.f32 %v3477, %v5450
        %v5514 = vadd.f32 %v3482, %v5318
        %v5515 = vadd.f32 %v3487, %v5454
        %v5516 = vadd.f32 %v3492, %v5315
        %v5517 = vadd.f32 %v3497, %v5451
        %v5518 = vadd.f32 %v3502, %v5319
        %v5519 = vadd.f32 %v3507, %v5455
        %v5520 = vld [vmem:[%s10] sm:$0x1]
        %v5522 = vlaneseq
        %v5523 = vshrl.u32 %v5522, 7
        %v5524 = vsub.s32 0, %v5523
        %v5525 = vrot.slane %v5520, %v5524
        %v5527 = vadd.f32 %v5488, %v5525
        %v5528 = vadd.f32 %v5489, %v5525
        %v5529 = vadd.f32 %v5490, %v5525
        %v5530 = vadd.f32 %v5491, %v5525
        %v5531 = vadd.f32 %v5492, %v5525
        %v5532 = vadd.f32 %v5493, %v5525
        %v5533 = vadd.f32 %v5494, %v5525
        %v5534 = vadd.f32 %v5495, %v5525
        %v5535 = vadd.f32 %v5496, %v5525
        %v5536 = vadd.f32 %v5497, %v5525
        %v5537 = vadd.f32 %v5498, %v5525
        %v5538 = vadd.f32 %v5499, %v5525
        %v5539 = vadd.f32 %v5500, %v5525
        %v5540 = vadd.f32 %v5501, %v5525
        %v5541 = vadd.f32 %v5502, %v5525
        %v5542 = vadd.f32 %v5503, %v5525
        %v5543 = vadd.f32 %v5504, %v5525
        %v5544 = vadd.f32 %v5505, %v5525
        %v5545 = vadd.f32 %v5506, %v5525
        %v5546 = vadd.f32 %v5507, %v5525
        %v5547 = vadd.f32 %v5508, %v5525
        %v5548 = vadd.f32 %v5509, %v5525
        %v5549 = vadd.f32 %v5510, %v5525
        %v5550 = vadd.f32 %v5511, %v5525
        %v5551 = vadd.f32 %v5512, %v5525
        %v5552 = vadd.f32 %v5513, %v5525
        %v5553 = vadd.f32 %v5514, %v5525
        %v5554 = vadd.f32 %v5515, %v5525
        %v5555 = vadd.f32 %v5516, %v5525
        %v5556 = vadd.f32 %v5517, %v5525
        %v5557 = vadd.f32 %v5518, %v5525
        %v5558 = vadd.f32 %v5519, %v5525
        %5559 = vst [vmem:[%s467] sm:$0xff] %v5527
        %5560 = vst [vmem:[%s467 + $0x8] sm:$0xff] %v5528
        %5561 = vst [vmem:[%s467 + $0x10] sm:$0xff] %v5529
        %5562 = vst [vmem:[%s467 + $0x18] sm:$0xff] %v5530
        %5563 = vst [vmem:[%s467 + $0x20] sm:$0xff] %v5531
        %5564 = vst [vmem:[%s467 + $0x28] sm:$0xff] %v5532
        %5565 = vst [vmem:[%s467 + $0x30] sm:$0xff] %v5533
        %5566 = vst [vmem:[%s467 + $0x38] sm:$0xff] %v5534
        %5567 = vst [vmem:[%s467 + $0x40] sm:$0xff] %v5535
        %5568 = vst [vmem:[%s467 + $0x48] sm:$0xff] %v5536
        %5569 = vst [vmem:[%s467 + $0x50] sm:$0xff] %v5537
        %5570 = vst [vmem:[%s467 + $0x58] sm:$0xff] %v5538
        %5571 = vst [vmem:[%s467 + $0x60] sm:$0xff] %v5539
        %5572 = vst [vmem:[%s467 + $0x68] sm:$0xff] %v5540
        %5573 = vst [vmem:[%s467 + $0x70] sm:$0xff] %v5541
        %5574 = vst [vmem:[%s467 + $0x78] sm:$0xff] %v5542
        %5575 = vst [vmem:[%s467 + $0x80] sm:$0xff] %v5543
        %5576 = vst [vmem:[%s467 + $0x88] sm:$0xff] %v5544
        %5577 = vst [vmem:[%s467 + $0x90] sm:$0xff] %v5545
        %5578 = vst [vmem:[%s467 + $0x98] sm:$0xff] %v5546
        %5579 = vst [vmem:[%s467 + $0xa0] sm:$0xff] %v5547
        %5580 = vst [vmem:[%s467 + $0xa8] sm:$0xff] %v5548
        %5581 = vst [vmem:[%s467 + $0xb0] sm:$0xff] %v5549
        %5582 = vst [vmem:[%s467 + $0xb8] sm:$0xff] %v5550
        %5583 = vst [vmem:[%s467 + $0xc0] sm:$0xff] %v5551
        %5584 = vst [vmem:[%s467 + $0xc8] sm:$0xff] %v5552
        %5585 = vst [vmem:[%s467 + $0xd0] sm:$0xff] %v5553
        %5586 = vst [vmem:[%s467 + $0xd8] sm:$0xff] %v5554
        %5587 = vst [vmem:[%s467 + $0xe0] sm:$0xff] %v5555
        %5588 = vst [vmem:[%s467 + $0xe8] sm:$0xff] %v5556
        %5589 = vst [vmem:[%s467 + $0xf0] sm:$0xff] %v5557
        %5590 = vst [vmem:[%s467 + $0xf8] sm:$0xff] %v5558
        %v5591 = vadd.f32 %v5527, %v5528
        %v5592 = vadd.f32 %v5591, %v5529
        %v5593 = vadd.f32 %v5592, %v5530
        %v5594 = vadd.f32 %v5593, %v5531
        %v5595 = vadd.f32 %v5594, %v5532
        %v5596 = vadd.f32 %v5595, %v5533
        %v5597 = vadd.f32 %v5596, %v5534
        %v5598 = vadd.f32 %v5597, %v5535
        %v5599 = vadd.f32 %v5598, %v5536
        %v5600 = vadd.f32 %v5599, %v5537
        %v5601 = vadd.f32 %v5600, %v5538
        %v5602 = vadd.f32 %v5601, %v5539
        %v5603 = vadd.f32 %v5602, %v5540
        %v5604 = vadd.f32 %v5603, %v5541
        %v5605 = vadd.f32 %v5604, %v5542
        %v5606 = vadd.f32 %v5605, %v5543
        %v5607 = vadd.f32 %v5606, %v5544
        %v5608 = vadd.f32 %v5607, %v5545
        %v5609 = vadd.f32 %v5608, %v5546
        %v5610 = vadd.f32 %v5609, %v5547
        %v5611 = vadd.f32 %v5610, %v5548
        %v5612 = vadd.f32 %v5611, %v5549
        %v5613 = vadd.f32 %v5612, %v5550
        %v5614 = vadd.f32 %v5613, %v5551
        %v5615 = vadd.f32 %v5614, %v5552
        %v5616 = vadd.f32 %v5615, %v5553
        %v5617 = vadd.f32 %v5616, %v5554
        %v5618 = vadd.f32 %v5617, %v5555
        %v5619 = vadd.f32 %v5618, %v5556
        %v5620 = vadd.f32 %v5619, %v5557
        %v5621 = vadd.f32 %v5620, %v5558
        %v5622 = vrot.slane %v5621, 4
        %v5623 = vadd.f32 %v5621, %v5622
        %v5624 = vrot.slane %v5623, 2
        %v5625 = vadd.f32 %v5623, %v5624
        %v5626 = vrot.slane %v5625, 1
        %v5627 = vadd.f32 %v5625, %v5626
        %v5628 = vmul.f32 %v5627, 0.00390625
        %v5629 = vsub.f32 %v5527, %v5628
        %v5630 = vsub.f32 %v5528, %v5628
        %v5631 = vsub.f32 %v5529, %v5628
        %v5632 = vsub.f32 %v5530, %v5628
        %v5633 = vsub.f32 %v5531, %v5628
        %v5634 = vsub.f32 %v5532, %v5628
        %v5635 = vsub.f32 %v5533, %v5628
        %v5636 = vsub.f32 %v5534, %v5628
        %v5637 = vsub.f32 %v5535, %v5628
        %v5638 = vsub.f32 %v5536, %v5628
        %v5639 = vsub.f32 %v5537, %v5628
        %v5640 = vsub.f32 %v5538, %v5628
        %v5641 = vsub.f32 %v5539, %v5628
        %v5642 = vsub.f32 %v5540, %v5628
        %v5643 = vsub.f32 %v5541, %v5628
        %v5644 = vsub.f32 %v5542, %v5628
        %v5645 = vsub.f32 %v5543, %v5628
        %v5646 = vsub.f32 %v5544, %v5628
        %v5647 = vsub.f32 %v5545, %v5628
        %v5648 = vsub.f32 %v5546, %v5628
        %v5649 = vsub.f32 %v5547, %v5628
        %v5650 = vsub.f32 %v5548, %v5628
        %v5651 = vsub.f32 %v5549, %v5628
        %v5652 = vsub.f32 %v5550, %v5628
        %v5653 = vsub.f32 %v5551, %v5628
        %v5654 = vsub.f32 %v5552, %v5628
        %v5655 = vsub.f32 %v5553, %v5628
        %v5656 = vsub.f32 %v5554, %v5628
        %v5657 = vsub.f32 %v5555, %v5628
        %v5658 = vsub.f32 %v5556, %v5628
        %v5659 = vsub.f32 %v5557, %v5628
        %v5660 = vsub.f32 %v5558, %v5628
        %5661 = vst [vmem:[%s473] sm:$0x1] %v5628
        %v5662 = vmul.f32 %v5629, %v5629
        %v5663 = vmul.f32 %v5630, %v5630
        %v5664 = vmul.f32 %v5631, %v5631
        %v5665 = vmul.f32 %v5632, %v5632
        %v5666 = vmul.f32 %v5633, %v5633
        %v5667 = vmul.f32 %v5634, %v5634
        %v5668 = vmul.f32 %v5635, %v5635
        %v5669 = vmul.f32 %v5636, %v5636
        %v5670 = vmul.f32 %v5637, %v5637
        %v5671 = vmul.f32 %v5638, %v5638
        %v5672 = vmul.f32 %v5639, %v5639
        %v5673 = vmul.f32 %v5640, %v5640
        %v5674 = vmul.f32 %v5641, %v5641
        %v5675 = vmul.f32 %v5642, %v5642
        %v5676 = vmul.f32 %v5643, %v5643
        %v5677 = vmul.f32 %v5644, %v5644
        %v5678 = vmul.f32 %v5645, %v5645
        %v5679 = vmul.f32 %v5646, %v5646
        %v5680 = vmul.f32 %v5647, %v5647
        %v5681 = vmul.f32 %v5648, %v5648
        %v5682 = vmul.f32 %v5649, %v5649
        %v5683 = vmul.f32 %v5650, %v5650
        %v5684 = vmul.f32 %v5651, %v5651
        %v5685 = vmul.f32 %v5652, %v5652
        %v5686 = vmul.f32 %v5653, %v5653
        %v5687 = vmul.f32 %v5654, %v5654
        %v5688 = vmul.f32 %v5655, %v5655
        %v5689 = vmul.f32 %v5656, %v5656
        %v5690 = vmul.f32 %v5657, %v5657
        %v5691 = vmul.f32 %v5658, %v5658
        %v5692 = vmul.f32 %v5659, %v5659
        %v5693 = vmul.f32 %v5660, %v5660
        %v5694 = vadd.f32 %v5662, %v5663
        %v5695 = vadd.f32 %v5694, %v5664
        %v5696 = vadd.f32 %v5695, %v5665
        %v5697 = vadd.f32 %v5696, %v5666
        %v5698 = vadd.f32 %v5697, %v5667
        %v5699 = vadd.f32 %v5698, %v5668
        %v5700 = vadd.f32 %v5699, %v5669
        %v5701 = vadd.f32 %v5700, %v5670
        %v5702 = vadd.f32 %v5701, %v5671
        %v5703 = vadd.f32 %v5702, %v5672
        %v5704 = vadd.f32 %v5703, %v5673
        %v5705 = vadd.f32 %v5704, %v5674
        %v5706 = vadd.f32 %v5705, %v5675
        %v5707 = vadd.f32 %v5706, %v5676
        %v5708 = vadd.f32 %v5707, %v5677
        %v5709 = vadd.f32 %v5708, %v5678
        %v5710 = vadd.f32 %v5709, %v5679
        %v5711 = vadd.f32 %v5710, %v5680
        %v5712 = vadd.f32 %v5711, %v5681
        %v5713 = vadd.f32 %v5712, %v5682
        %v5714 = vadd.f32 %v5713, %v5683
        %v5715 = vadd.f32 %v5714, %v5684
        %v5716 = vadd.f32 %v5715, %v5685
        %v5717 = vadd.f32 %v5716, %v5686
        %v5718 = vadd.f32 %v5717, %v5687
        %v5719 = vadd.f32 %v5718, %v5688
        %v5720 = vadd.f32 %v5719, %v5689
        %v5721 = vadd.f32 %v5720, %v5690
        %v5722 = vadd.f32 %v5721, %v5691
        %v5723 = vadd.f32 %v5722, %v5692
        %v5724 = vadd.f32 %v5723, %v5693
        %v5725 = vrot.slane %v5724, 4
        %v5726 = vadd.f32 %v5724, %v5725
        %v5727 = vrot.slane %v5726, 2
        %v5728 = vadd.f32 %v5726, %v5727
        %v5729 = vrot.slane %v5728, 1
        %v5730 = vadd.f32 %v5728, %v5729
        %5731 = vst [vmem:[%s479] sm:$0x1] %v5730
        %s5732 = sand.u32 %s285, 1
        %s5733 = scalar_lea.sflag [#allocation3], %s5732
        %s5734 = sand.u32 %s285, 1
        %s5735 = smul.addr %s5734, 256
        %s5736 = scalar_lea.vmem [#allocation2], %s5735
        %s5737 = sand.u32 %s31, 1
        %s5738 = scalar_lea.sflag [#allocation5], %s5737
        %s5739 = sand.u32 %s311, 1
        %s5740 = scalar_lea.vmem [#allocation4], %s5739
        %s5741 = sand.u32 %s31, 1
        %s5742 = scalar_lea.sflag [#allocation5], %s5741
        %s5743 = sand.u32 %s337, 1
        %s5744 = scalar_lea.vmem [#allocation6], %s5743
        // Predicated region
        $region65: #{tpu_custom_call.1} parent=63 // pred_check
          %p5745 = pneg %p295
        $region66: #{tpu_custom_call.1} parent=63 // pred_check_branch
          %5747 = sbr.rel (%p5745) target = $region68
        $region67: #{tpu_custom_call.1} parent=63 // pred_region
          %s5748 = smul.u32 32, %s31
          %s5750 = ssub.s32 4096, 4096
          %5751 = vsyncadd %s5733, %s5750
          %s5752 = smul.addr %s5748, 128
          %s5753 = scalar_lea.hbm %s11, %s5752
          %s5754 = sshll.u32 %s5736, 4
          %s5755 = int_to_ptr.vmem [resolvable:$true] %s5754
          %5760 = dma.vmem_to_hbm [thread:$0]  %s5755, 4096, %s5753, %s5733, 128, 128, 8
        $region68: #{tpu_custom_call.1} parent=63 // pred_fallthru
          _
        // Predicated region
        $region69: #{tpu_custom_call.1} parent=63 // pred_check
          %p5761 = pneg %p321
        $region70: #{tpu_custom_call.1} parent=63 // pred_check_branch
          %5763 = sbr.rel (%p5761) target = $region72
        $region71: #{tpu_custom_call.1} parent=63 // pred_region
          %s5765 = ssub.s32 16, 16
          %5766 = vsyncadd %s5738, %s5765
          %s5767 = smul.addr %s31, 16
          %s5768 = scalar_lea.hbm %s12, %s5767
          %s5770 = sshll.u32 %s5740, 4
          %s5771 = int_to_ptr.vmem [resolvable:$true] %s5770
          %5773 = dma.vmem_to_hbm [thread:$0]  %s5771, 16, %s5768, %s5738
        $region72: #{tpu_custom_call.1} parent=63 // pred_fallthru
          _
        // Predicated region
        $region73: #{tpu_custom_call.1} parent=63 // pred_check
          %p5774 = pneg %p347
        $region74: #{tpu_custom_call.1} parent=63 // pred_check_branch
          %5776 = sbr.rel (%p5774) target = $region76
        $region75: #{tpu_custom_call.1} parent=63 // pred_region
          %s5778 = ssub.s32 16, 16
          %5779 = vsyncadd %s5742, %s5778
          %s5780 = smul.addr %s31, 16
          %s5781 = scalar_lea.hbm %s13, %s5780
          %s5783 = sshll.u32 %s5744, 4
          %s5784 = int_to_ptr.vmem [resolvable:$true] %s5783
          %5786 = dma.vmem_to_hbm [thread:$0]  %s5784, 16, %s5781, %s5742
        $region76: #{tpu_custom_call.1} parent=63 // pred_fallthru
          _
      $region64: #{tpu_custom_call.1} parent=5 // pred_fallthru
        _
      %p5787 = scmp.le.s32.totalorder 2, %s26
      // Predicated region
      $region77: #{tpu_custom_call.1} parent=5 // pred_check
        %p5788 = pneg %p5787
      $region78: #{tpu_custom_call.1} parent=5 // pred_check_branch
        %5790 = sbr.rel (%p5788) target = $region80
      $region79: #{tpu_custom_call.1} parent=5 // pred_region
        %s5791 = ssub.s32 %s26, 2
        // Predicated region
        $region81: #{tpu_custom_call.1} parent=79 // pred_check
          %p5792 = pneg %p301
        $region82: #{tpu_custom_call.1} parent=79 // pred_check_branch
          %5794 = sbr.rel (%p5792) target = $region84
        $region83: #{tpu_custom_call.1} parent=79 // pred_region
          %s5795 = sand.u32 %s286, 1
          %s5796 = scalar_lea.sflag [#allocation3], %s5795
          %s5797 = sand.u32 %s286, 1
          %s5798 = smul.addr %s5797, 256
          %s5799 = scalar_lea.vmem [#allocation2], %s5798
          %5800 = dma.done %s5796, 4096
        $region84: #{tpu_custom_call.1} parent=79 // pred_fallthru
          _
        // Predicated region
        $region85: #{tpu_custom_call.1} parent=79 // pred_check
          %p5801 = pneg %p327
        $region86: #{tpu_custom_call.1} parent=79 // pred_check_branch
          %5803 = sbr.rel (%p5801) target = $region88
        $region87: #{tpu_custom_call.1} parent=79 // pred_region
          %s5804 = sand.u32 %s32, 1
          %s5805 = scalar_lea.sflag [#allocation5], %s5804
          %s5806 = sand.u32 %s312, 1
          %s5807 = scalar_lea.vmem [#allocation4], %s5806
          %5808 = dma.done %s5805, 16
        $region88: #{tpu_custom_call.1} parent=79 // pred_fallthru
          _
        // Predicated region
        $region89: #{tpu_custom_call.1} parent=79 // pred_check
          %p5809 = pneg %p353
        $region90: #{tpu_custom_call.1} parent=79 // pred_check_branch
          %5811 = sbr.rel (%p5809) target = $region92
        $region91: #{tpu_custom_call.1} parent=79 // pred_region
          %s5812 = sand.u32 %s32, 1
          %s5813 = scalar_lea.sflag [#allocation5], %s5812
          %s5814 = sand.u32 %s338, 1
          %s5815 = scalar_lea.vmem [#allocation6], %s5814
          %5816 = dma.done %s5813, 16
        $region92: #{tpu_custom_call.1} parent=79 // pred_fallthru
          _
      $region80: #{tpu_custom_call.1} parent=5 // pred_fallthru
        _
    $region6: #{tpu_custom_call.1} parent=1 // loop_footer
      %s30 = sadd.s32 1, %s26
    $region7: #{tpu_custom_call.1} parent=1 // loop_footer_branch
      %25 = sbr.rel target = $region3
    $region8: #{tpu_custom_call.1} parent=1 // loop_exit
      _
    %5817 = vsyncpa [#allocation3], 1
    %s5818 = scalar_lea.sflag [#allocation3], 1
    %5819 = vsyncpa %s5818, 1
    %5820 = vsyncpa [#allocation5], 1
    %s5821 = scalar_lea.sflag [#allocation5], 1
    %5822 = vsyncpa %s5821, 1

</llo_original>
